<compile_context>
chip_gen: v7x
topology: tpu7x:2x2x1
jax: 0.10.0
libtpu: 0.0.40
codegen_flags: <defaults>
</compile_context>

<pallas_src>
import math

import jax
import jax.numpy as jnp
from jax.experimental import pallas as pl
from jax.experimental.pallas import tpu as pltpu

# ---- model config (matches the PyTorch ViT defaults) ----
IMG_SIZE = 28
PATCH = 7
IN_CH = 1
EMB = 49                      # logical embedding dim
HEADS = 7
HEAD_DIM = EMB // HEADS       # 7
EXPANSION = 4
HID = EMB * EXPANSION         # 196
NUM_LAYERS = 6
NUM_CLASSES = 10
NUM_PATCHES = (IMG_SIZE // PATCH) ** 2   # 16
SEQ = NUM_PATCHES + 1                    # 17
LN_EPS = 1e-5
CPP = IN_CH * PATCH * PATCH   # 49 conv-patch features

# ---- padded (TPU-friendly) dims ----
EP = 128      # embedding lanes  49 -> 128
HIDP = 256    # MLP hidden lanes 196 -> 256
HP = 8        # heads            7 -> 8
NCP = 128     # classes          10 -> 128
SP = 24       # sequence rows    17 -> 24  (multiple of 8 sublanes; extra rows are inert)


# ---------------------------------------------------------------------------
# helpers usable inside kernels
# ---------------------------------------------------------------------------
def _erf(x):
    # Abramowitz & Stegun 7.1.26 rational approximation of erf (|err| < 1.5e-7).
    a1, a2, a3, a4, a5 = 0.254829592, -0.284496736, 1.421413741, -1.453152027, 1.061405429
    p = 0.3275911
    ax = jnp.abs(x)
    t = 1.0 / (1.0 + p * ax)
    poly = ((((a5 * t + a4) * t + a3) * t + a2) * t + a1) * t
    y = 1.0 - poly * jnp.exp(-ax * ax)
    return jnp.where(x >= 0.0, y, -y)


def _gelu_exact(x):
    # exact (erf-based) GELU, same definition as torch.nn.GELU() default
    return 0.5 * x * (1.0 + _erf(x * (1.0 / math.sqrt(2.0))))


def _layernorm_padded(x, g, b):
    """LayerNorm over the EMB real lanes of a lane-padded (..., EP) tensor.

    Requires: padded lanes of `x` are zero (so the raw sums only see real lanes)
    and `g`/`b` are zero on padded lanes (so the output keeps zero padding).
    Uses var = E[x^2] - mu^2, which avoids the lane-mask pass of a two-pass LN.
    """
    mu = jnp.sum(x, axis=-1, keepdims=True) * (1.0 / EMB)
    ex2 = jnp.sum(x * x, axis=-1, keepdims=True) * (1.0 / EMB)
    var = ex2 - mu * mu
    return (x - mu) * jax.lax.rsqrt(var + LN_EPS) * g + b


# ---------------------------------------------------------------------------
# fused Pallas kernel
# ---------------------------------------------------------------------------
def _make_vit_kernel(B):
    BS = B * SP
    scale = 1.0 / math.sqrt(HEAD_DIM)

    def kernel(patches_ref, pw_ref, base_ref, hsum_ref, hexp_ref,
               ln1g_ref, ln1b_ref, wqkv_ref, bqkv_ref, wo_ref, bo_ref,
               ln2g_ref, ln2b_ref, w1_ref, b1_ref, w2_ref, b2_ref,
               clsg_ref, clsb_ref, clsw_ref, clsbias_ref,
               o_ref, act_ref):
        l = pl.program_id(0)

        @pl.when(l == 0)
        def _init():
            # patch-embedding conv-as-matmul; class-token / positional-embedding /
            # conv-bias terms are pre-folded into `base` (zero rows in `patches`
            # cover the class-token slot and sequence padding).
            pe = jnp.dot(patches_ref[...], pw_ref[...], preferred_element_type=jnp.float32)
            act_ref[...] = (pe.reshape(B, SP, EP) + base_ref[...][None, :, :]).reshape(BS, EP)

        x = act_ref[...]                                               # (B*SP, EP)

        # ---- multi-head self-attention (mixes across the BATCH axis per position) ----
        xn = _layernorm_padded(x, ln1g_ref[...], ln1b_ref[...])
        qkv = jnp.dot(xn, wqkv_ref[...], preferred_element_type=jnp.float32) + bqkv_ref[...]
        q = qkv[:, 0 * EP:1 * EP].reshape(B, SP, EP)
        k = qkv[:, 1 * EP:2 * EP].reshape(B, SP, EP)
        v = qkv[:, 2 * EP:3 * EP].reshape(B, SP, EP)

        # all (i, j) batch pairs at once; per-head reduction via block-diagonal hsum
        prod = q[:, None, :, :] * k[None, :, :, :]                     # (B, B, SP, EP)
        scores = jnp.dot(prod.reshape(B * B * SP, EP), hsum_ref[...],
                         preferred_element_type=jnp.float32) * scale   # (B*B*SP, HP)
        scores = scores.reshape(B, B, SP, HP)
        m = jnp.max(scores, axis=1, keepdims=True)
        e = jnp.exp(scores - m)
        w = e / jnp.sum(e, axis=1, keepdims=True)                      # softmax over batch j
        wfull = jnp.dot(w.reshape(B * B * SP, HP), hexp_ref[...],
                        preferred_element_type=jnp.float32)            # head weight -> lanes
        wfull = wfull.reshape(B, B, SP, EP)
        ctx = jnp.sum(wfull * v[None, :, :, :], axis=1)                # (B, SP, EP)
        attn = (jnp.dot(ctx.reshape(BS, EP), wo_ref[...],
                        preferred_element_type=jnp.float32) + bo_ref[...])
        y = attn + x                                                   # skip connection

        # ---- MLP block ----
        yn = _layernorm_padded(y, ln2g_ref[...], ln2b_ref[...])
        h = jnp.dot(yn, w1_ref[...], preferred_element_type=jnp.float32) + b1_ref[...]
        h = _gelu_exact(h)
        mlp = jnp.dot(h, w2_ref[...], preferred_element_type=jnp.float32) + b2_ref[...]
        new_act = mlp + y                                              # skip connection
        act_ref[...] = new_act

        @pl.when(l == NUM_LAYERS - 1)
        def _final():
            cls = new_act.reshape(B, SP, EP)[:, 0, :]                  # class token per batch
            cn = _layernorm_padded(cls, clsg_ref[...], clsb_ref[...])
            o_ref[...] = (jnp.dot(cn, clsw_ref[...], preferred_element_type=jnp.float32)
                          + clsbias_ref[...])

    return kernel


def _vit_pallas_call(B):
    BS = B * SP

    def const2(shape):
        return pl.BlockSpec(shape, lambda l: (0, 0))

    def layer2(r, c):
        return pl.BlockSpec((None, r, c), lambda l: (l, 0, 0))

    in_specs = [
        const2((BS, EP)),        # patches (augmented, lane-padded)
        const2((EP, EP)),        # patch projection weight
        const2((SP, EP)),        # base row (cls + pos + conv bias), broadcast in-kernel
        const2((EP, HP)),        # hsum  (lane -> head reduction)
        const2((HP, EP)),        # hexp  (head -> lane broadcast)
        layer2(1, EP),           # ln1_g
        layer2(1, EP),           # ln1_b
        layer2(EP, 3 * EP),      # wqkv (fused)
        layer2(1, 3 * EP),       # bqkv (fused)
        layer2(EP, EP),          # wo
        layer2(1, EP),           # bo
        layer2(1, EP),           # ln2_g
        layer2(1, EP),           # ln2_b
        layer2(EP, HIDP),        # w1
        layer2(1, HIDP),         # b1
        layer2(HIDP, EP),        # w2
        layer2(1, EP),           # b2
        const2((1, EP)),         # classifier ln gamma
        const2((1, EP)),         # classifier ln beta
        const2((EP, NCP)),       # classifier weight
        const2((1, NCP)),        # classifier bias
    ]
    return pl.pallas_call(
        _make_vit_kernel(B),
        grid=(NUM_LAYERS,),
        in_specs=in_specs,
        out_specs=pl.BlockSpec((B, NCP), lambda l: (0, 0)),
        out_shape=jax.ShapeDtypeStruct((B, NCP), jnp.float32),
        scratch_shapes=[pltpu.VMEM((BS, EP), jnp.float32)],     # resident activation
        compiler_params=pltpu.CompilerParams(dimension_semantics=("arbitrary",)),
    )


# ---------------------------------------------------------------------------
# Python wrapper
# ---------------------------------------------------------------------------
def vit_forward(x, pp):
    """ViT forward.  x: NCHW float32 (B, 1, 28, 28) -> logits (B, NUM_CLASSES)."""
    B, C, H, W = x.shape
    nh, nw = H // PATCH, W // PATCH

    # patch extraction (pure layout glue); the conv-as-matmul itself runs in the kernel.
    patches = x.reshape(B, C, nh, PATCH, nw, PATCH)
    patches = patches.transpose(0, 2, 4, 1, 3, 5).reshape(B, nh * nw, CPP)   # (B, 16, 49)
    patches_aug = jnp.zeros((B, SP, EP), jnp.float32)
    patches_aug = patches_aug.at[:, 1:1 + NUM_PATCHES, :CPP].set(patches)    # row 0 = cls slot
    patches_aug = patches_aug.reshape(B * SP, EP)

    logits_p = _vit_pallas_call(B)(
        patches_aug, pp["pw"], pp["base_row"], pp["hsum"], pp["hexp"],
        pp["ln1_g"], pp["ln1_b"], pp["wqkv"], pp["bqkv"], pp["wo"], pp["bo"],
        pp["ln2_g"], pp["ln2_b"], pp["w1"], pp["b1"], pp["w2"], pp["b2"],
        pp["cls_g"], pp["cls_b"], pp["cls_w"], pp["cls_bias"])
    return logits_p[:, :NUM_CLASSES]


# ---------------------------------------------------------------------------
# parameter init (logical shapes) + padding / stacking for the fused kernel
# ---------------------------------------------------------------------------
def init_vit_params(key):
    keys = iter(jax.random.split(key, 128))

    def nrm(shape, scale=0.02):
        return (scale * jax.random.normal(next(keys), shape)).astype(jnp.float32)

    def uni(shape):
        return jax.random.uniform(next(keys), shape, dtype=jnp.float32)

    params = {
        # conv weight (EMB, C, P, P) stored pre-flattened/transposed as (C*P*P, EMB)
        "patch_w": nrm((CPP, EMB)),
        "patch_b": nrm((1, EMB)),
        "cls": uni((1, 1, EMB)),                      # torch.rand-style class embedding
        "pos": uni((1, SEQ, EMB)),                    # torch.rand-style positional embedding
        "cls_ln_g": jnp.ones((1, EMB), jnp.float32),
        "cls_ln_b": jnp.zeros((1, EMB), jnp.float32),
    }
    layers = []
    for _ in range(NUM_LAYERS):
        layers.append(dict(
            ln1_g=jnp.ones((1, EMB), jnp.float32), ln1_b=jnp.zeros((1, EMB), jnp.float32),
            wq=nrm((EMB, EMB)), wk=nrm((EMB, EMB)), wv=nrm((EMB, EMB)),
            bq=nrm((1, EMB)), bk=nrm((1, EMB)), bv=nrm((1, EMB)),
            wo=nrm((EMB, EMB)), bo=nrm((1, EMB)),
            ln2_g=jnp.ones((1, EMB), jnp.float32), ln2_b=jnp.zeros((1, EMB), jnp.float32),
            w1=nrm((EMB, HID)), b1=nrm((1, HID)),
            w2=nrm((HID, EMB)), b2=nrm((1, EMB)),
        ))
    params["layers"] = layers
    params["cls_w"] = nrm((EMB, NUM_CLASSES))
    params["cls_b"] = nrm((1, NUM_CLASSES))
    return params


def _pad2(a, rows, cols):
    return jnp.pad(a, ((0, rows - a.shape[0]), (0, cols - a.shape[1])))


def prepare_params(params):
    """Zero-pad to TPU-friendly lane widths and stack per-layer weights along L."""
    pp = {}
    pp["pw"] = _pad2(params["patch_w"], EP, EP)

    base = jnp.zeros((SP, EP), jnp.float32)
    base = base.at[0, :EMB].set(params["cls"][0, 0] + params["pos"][0, 0])
    base = base.at[1:1 + NUM_PATCHES, :EMB].set(params["pos"][0, 1:] + params["patch_b"][0])
    pp["base_row"] = base

    lane = jnp.arange(EP)
    head = jnp.arange(HP)
    hsum = (((lane[:, None] // HEAD_DIM) == head[None, :])
            & (lane[:, None] < EMB) & (head[None, :] < HEADS))
    pp["hsum"] = hsum.astype(jnp.float32)      # (EP, HP): sums each head's lanes
    pp["hexp"] = pp["hsum"].T                  # (HP, EP): broadcasts head scalars to lanes

    L = params["layers"]

    def stk2(key, rows, cols):
        return jnp.stack([_pad2(lp[key], rows, cols) for lp in L])

    pp["ln1_g"] = stk2("ln1_g", 1, EP)
    pp["ln1_b"] = stk2("ln1_b", 1, EP)
    pp["wqkv"] = jnp.stack([
        jnp.concatenate([_pad2(lp["wq"], EP, EP),
                         _pad2(lp["wk"], EP, EP),
                         _pad2(lp["wv"], EP, EP)], axis=1) for lp in L])
    pp["bqkv"] = jnp.stack([
        jnp.concatenate([_pad2(lp["bq"], 1, EP),
                         _pad2(lp["bk"], 1, EP),
                         _pad2(lp["bv"], 1, EP)], axis=1) for lp in L])
    pp["wo"] = stk2("wo", EP, EP)
    pp["bo"] = stk2("bo", 1, EP)
    pp["ln2_g"] = stk2("ln2_g", 1, EP)
    pp["ln2_b"] = stk2("ln2_b", 1, EP)
    pp["w1"] = stk2("w1", EP, HIDP)
    pp["b1"] = stk2("b1", 1, HIDP)
    pp["w2"] = stk2("w2", HIDP, EP)
    pp["b2"] = stk2("b2", 1, EP)
    pp["cls_g"] = _pad2(params["cls_ln_g"], 1, EP)
    pp["cls_b"] = _pad2(params["cls_ln_b"], 1, EP)
    pp["cls_w"] = _pad2(params["cls_w"], EP, NCP)
    pp["cls_bias"] = _pad2(params["cls_b"], 1, NCP)
    return pp


if __name__ == "__main__":
    key = jax.random.PRNGKey(0)
    pkey, xkey = jax.random.split(key)
    params = init_vit_params(pkey)
    pp = prepare_params(params)

    # small deterministic input: batch=2, NCHW, 1x28x28 (MNIST-like, as the module implies)
    x = jax.random.normal(xkey, (2, IN_CH, IMG_SIZE, IMG_SIZE), dtype=jnp.float32)

    logits = jax.jit(vit_forward)(x, pp)
    logits = jax.block_until_ready(logits)
    assert logits.shape == (2, NUM_CLASSES)
    assert bool(jnp.all(jnp.isfinite(logits)))
    print("KERNEL_OK")
</pallas_src>

<mosaic_0001>
module attributes {stable_mosaic.version = 11 : i64} {
  func.func @kernel(%arg0: i32, %arg1: memref<48x128xf32, #tpu.memory_space<vmem>>, %arg2: memref<128x128xf32, #tpu.memory_space<vmem>>, %arg3: memref<24x128xf32, #tpu.memory_space<vmem>>, %arg4: memref<128x8xf32, #tpu.memory_space<vmem>>, %arg5: memref<8x128xf32, #tpu.memory_space<vmem>>, %arg6: memref<1x1x128xf32, #tpu.memory_space<vmem>>, %arg7: memref<1x1x128xf32, #tpu.memory_space<vmem>>, %arg8: memref<1x128x384xf32, #tpu.memory_space<vmem>>, %arg9: memref<1x1x384xf32, #tpu.memory_space<vmem>>, %arg10: memref<1x128x128xf32, #tpu.memory_space<vmem>>, %arg11: memref<1x1x128xf32, #tpu.memory_space<vmem>>, %arg12: memref<1x1x128xf32, #tpu.memory_space<vmem>>, %arg13: memref<1x1x128xf32, #tpu.memory_space<vmem>>, %arg14: memref<1x128x256xf32, #tpu.memory_space<vmem>>, %arg15: memref<1x1x256xf32, #tpu.memory_space<vmem>>, %arg16: memref<1x256x128xf32, #tpu.memory_space<vmem>>, %arg17: memref<1x1x128xf32, #tpu.memory_space<vmem>>, %arg18: memref<1x128xf32, #tpu.memory_space<vmem>>, %arg19: memref<1x128xf32, #tpu.memory_space<vmem>>, %arg20: memref<128x128xf32, #tpu.memory_space<vmem>>, %arg21: memref<1x128xf32, #tpu.memory_space<vmem>>, %arg22: memref<2x128xf32, #tpu.memory_space<vmem>>, %arg23: memref<48x128xf32, #tpu.memory_space<vmem>>) attributes {dimension_semantics = [#tpu.dimension_semantics<arbitrary>], iteration_bounds = array<i64: 6>, scalar_prefetch = 0 : i64, scratch_operands = 1 : i64, tpu.core_type = #tpu.core_type<tc>, window_params = [{pipeline_mode = #tpu.pipeline_mode<synchronous>, transform_indices = @transform_0, window_bounds = array<i64: 48, 128>}, {pipeline_mode = #tpu.pipeline_mode<synchronous>, transform_indices = @transform_1, window_bounds = array<i64: 128, 128>}, {pipeline_mode = #tpu.pipeline_mode<synchronous>, transform_indices = @transform_2, window_bounds = array<i64: 24, 128>}, {pipeline_mode = #tpu.pipeline_mode<synchronous>, transform_indices = @transform_3, window_bounds = array<i64: 128, 8>}, {pipeline_mode = #tpu.pipeline_mode<synchronous>, transform_indices = @transform_4, window_bounds = array<i64: 8, 128>}, {transform_indices = @transform_5, window_bounds = array<i64: 1, 1, 128>}, {transform_indices = @transform_6, window_bounds = array<i64: 1, 1, 128>}, {transform_indices = @transform_7, window_bounds = array<i64: 1, 128, 384>}, {transform_indices = @transform_8, window_bounds = array<i64: 1, 1, 384>}, {transform_indices = @transform_9, window_bounds = array<i64: 1, 128, 128>}, {transform_indices = @transform_10, window_bounds = array<i64: 1, 1, 128>}, {transform_indices = @transform_11, window_bounds = array<i64: 1, 1, 128>}, {transform_indices = @transform_12, window_bounds = array<i64: 1, 1, 128>}, {transform_indices = @transform_13, window_bounds = array<i64: 1, 128, 256>}, {transform_indices = @transform_14, window_bounds = array<i64: 1, 1, 256>}, {transform_indices = @transform_15, window_bounds = array<i64: 1, 256, 128>}, {transform_indices = @transform_16, window_bounds = array<i64: 1, 1, 128>}, {pipeline_mode = #tpu.pipeline_mode<synchronous>, transform_indices = @transform_17, window_bounds = array<i64: 1, 128>}, {pipeline_mode = #tpu.pipeline_mode<synchronous>, transform_indices = @transform_18, window_bounds = array<i64: 1, 128>}, {pipeline_mode = #tpu.pipeline_mode<synchronous>, transform_indices = @transform_19, window_bounds = array<i64: 128, 128>}, {pipeline_mode = #tpu.pipeline_mode<synchronous>, transform_indices = @transform_20, window_bounds = array<i64: 1, 128>}, {pipeline_mode = #tpu.pipeline_mode<synchronous>, transform_indices = @transform_21, window_bounds = array<i64: 2, 128>}]} {
    %c0_i32 = arith.constant 0 : i32
    %0 = arith.cmpi eq, %arg0, %c0_i32 : i32
    %1 = arith.extui %0 : i1 to i32
    %c0_i32_0 = arith.constant 0 : i32
    %2 = arith.cmpi ne, %1, %c0_i32_0 : i32
    scf.if %2 {
      %c0_79 = arith.constant 0 : index
      %c0_80 = arith.constant 0 : index
      %165 = vector.load %arg1[%c0_79, %c0_80] : memref<48x128xf32, #tpu.memory_space<vmem>>, vector<48x128xf32>
      %c0_81 = arith.constant 0 : index
      %c0_82 = arith.constant 0 : index
      %166 = vector.load %arg2[%c0_81, %c0_82] : memref<128x128xf32, #tpu.memory_space<vmem>>, vector<128x128xf32>
      %cst_83 = arith.constant dense<0.000000e+00> : vector<48x128xf32>
      %167 = tpu.matmul %165, %166, %cst_83 {dimension_numbers = #tpu.dot_dimension_numbers<[1], [0], [0], [1], [0, 0, 1, 1], [], []>} : vector<48x128xf32>, vector<128x128xf32>, vector<48x128xf32> -> vector<48x128xf32>
      %168 = vector.shape_cast %167 : vector<48x128xf32> to vector<2x24x128xf32>
      %c0_84 = arith.constant 0 : index
      %c0_85 = arith.constant 0 : index
      %169 = vector.load %arg3[%c0_84, %c0_85] : memref<24x128xf32, #tpu.memory_space<vmem>>, vector<24x128xf32>
      %170 = vector.shape_cast %169 : vector<24x128xf32> to vector<1x24x128xf32>
      %171 = vector.broadcast %170 : vector<1x24x128xf32> to vector<2x24x128xf32>
      %172 = arith.addf %168, %171 : vector<2x24x128xf32>
      %173 = vector.shape_cast %172 : vector<2x24x128xf32> to vector<48x128xf32>
      %c0_86 = arith.constant 0 : index
      %c0_87 = arith.constant 0 : index
      %174 = vector.load %arg23[%c0_86, %c0_87] : memref<48x128xf32, #tpu.memory_space<vmem>>, vector<48x128xf32>
      tpu.vector_store %arg23[%c0_86, %c0_87], %173 {strides = array<i32>} : memref<48x128xf32, #tpu.memory_space<vmem>>, vector<48x128xf32>,
    } else {
    }
    %c0 = arith.constant 0 : index
    %c0_1 = arith.constant 0 : index
    %3 = vector.load %arg23[%c0, %c0_1] : memref<48x128xf32, #tpu.memory_space<vmem>>, vector<48x128xf32>
    %c0_2 = arith.constant 0 : index
    %c0_3 = arith.constant 0 : index
    %c0_4 = arith.constant 0 : index
    %4 = vector.load %arg6[%c0_2, %c0_3, %c0_4] : memref<1x1x128xf32, #tpu.memory_space<vmem>>, vector<1x1x128xf32>
    %5 = vector.shape_cast %4 : vector<1x1x128xf32> to vector<1x128xf32>
    %c0_5 = arith.constant 0 : index
    %c0_6 = arith.constant 0 : index
    %c0_7 = arith.constant 0 : index
    %6 = vector.load %arg7[%c0_5, %c0_6, %c0_7] : memref<1x1x128xf32, #tpu.memory_space<vmem>>, vector<1x1x128xf32>
    %7 = vector.shape_cast %6 : vector<1x1x128xf32> to vector<1x128xf32>
    %cst = arith.constant dense<0.000000e+00> : vector<48xf32>
    %8 = vector.multi_reduction <add>, %3, %cst [1] : vector<48x128xf32> to vector<48xf32>
    %9 = vector.shape_cast %8 : vector<48xf32> to vector<48x1xf32>
    %cst_8 = arith.constant 0.0204081628 : f32
    %10 = vector.broadcast %cst_8 : f32 to vector<48x1xf32>
    %11 = arith.mulf %9, %10 : vector<48x1xf32>
    %12 = arith.mulf %3, %3 : vector<48x128xf32>
    %cst_9 = arith.constant dense<0.000000e+00> : vector<48xf32>
    %13 = vector.multi_reduction <add>, %12, %cst_9 [1] : vector<48x128xf32> to vector<48xf32>
    %14 = vector.shape_cast %13 : vector<48xf32> to vector<48x1xf32>
    %cst_10 = arith.constant 0.0204081628 : f32
    %15 = vector.broadcast %cst_10 : f32 to vector<48x1xf32>
    %16 = arith.mulf %14, %15 : vector<48x1xf32>
    %17 = arith.mulf %11, %11 : vector<48x1xf32>
    %18 = arith.subf %16, %17 : vector<48x1xf32>
    %19 = vector.broadcast %11 : vector<48x1xf32> to vector<48x128xf32>
    %20 = arith.subf %3, %19 : vector<48x128xf32>
    %cst_11 = arith.constant 9.99999974E-6 : f32
    %21 = vector.broadcast %cst_11 : f32 to vector<48x1xf32>
    %22 = arith.addf %18, %21 : vector<48x1xf32>
    %23 = math.rsqrt %22 : vector<48x1xf32>
    %24 = vector.broadcast %23 : vector<48x1xf32> to vector<48x128xf32>
    %25 = arith.mulf %20, %24 : vector<48x128xf32>
    %26 = vector.broadcast %5 : vector<1x128xf32> to vector<48x128xf32>
    %27 = arith.mulf %25, %26 : vector<48x128xf32>
    %28 = vector.broadcast %7 : vector<1x128xf32> to vector<48x128xf32>
    %29 = arith.addf %27, %28 : vector<48x128xf32>
    %c0_12 = arith.constant 0 : index
    %c0_13 = arith.constant 0 : index
    %c0_14 = arith.constant 0 : index
    %30 = vector.load %arg8[%c0_12, %c0_13, %c0_14] : memref<1x128x384xf32, #tpu.memory_space<vmem>>, vector<1x128x384xf32>
    %31 = vector.shape_cast %30 : vector<1x128x384xf32> to vector<128x384xf32>
    %cst_15 = arith.constant dense<0.000000e+00> : vector<48x384xf32>
    %32 = tpu.matmul %29, %31, %cst_15 {dimension_numbers = #tpu.dot_dimension_numbers<[1], [0], [0], [1], [0, 0, 1, 1], [], []>} : vector<48x128xf32>, vector<128x384xf32>, vector<48x384xf32> -> vector<48x384xf32>
    %c0_16 = arith.constant 0 : index
    %c0_17 = arith.constant 0 : index
    %c0_18 = arith.constant 0 : index
    %33 = vector.load %arg9[%c0_16, %c0_17, %c0_18] : memref<1x1x384xf32, #tpu.memory_space<vmem>>, vector<1x1x384xf32>
    %34 = vector.shape_cast %33 : vector<1x1x384xf32> to vector<1x384xf32>
    %35 = vector.broadcast %34 : vector<1x384xf32> to vector<48x384xf32>
    %36 = arith.addf %32, %35 : vector<48x384xf32>
    %37 = vector.extract_strided_slice %36 {offsets = [0, 0], sizes = [48, 128], strides = [1, 1]} : vector<48x384xf32> to vector<48x128xf32>
    %38 = vector.shape_cast %37 : vector<48x128xf32> to vector<2x24x128xf32>
    %39 = vector.extract_strided_slice %36 {offsets = [0, 128], sizes = [48, 128], strides = [1, 1]} : vector<48x384xf32> to vector<48x128xf32>
    %40 = vector.shape_cast %39 : vector<48x128xf32> to vector<2x24x128xf32>
    %41 = vector.extract_strided_slice %36 {offsets = [0, 256], sizes = [48, 128], strides = [1, 1]} : vector<48x384xf32> to vector<48x128xf32>
    %42 = vector.shape_cast %41 : vector<48x128xf32> to vector<2x24x128xf32>
    %43 = vector.shape_cast %38 : vector<2x24x128xf32> to vector<2x1x24x128xf32>
    %44 = vector.shape_cast %40 : vector<2x24x128xf32> to vector<1x2x24x128xf32>
    %45 = vector.broadcast %43 : vector<2x1x24x128xf32> to vector<2x2x24x128xf32>
    %46 = vector.broadcast %44 : vector<1x2x24x128xf32> to vector<2x2x24x128xf32>
    %47 = arith.mulf %45, %46 : vector<2x2x24x128xf32>
    %48 = vector.shape_cast %47 : vector<2x2x24x128xf32> to vector<96x128xf32>
    %c0_19 = arith.constant 0 : index
    %c0_20 = arith.constant 0 : index
    %49 = vector.load %arg4[%c0_19, %c0_20] : memref<128x8xf32, #tpu.memory_space<vmem>>, vector<128x8xf32>
    %cst_21 = arith.constant dense<0.000000e+00> : vector<96x8xf32>
    %50 = tpu.matmul %48, %49, %cst_21 {dimension_numbers = #tpu.dot_dimension_numbers<[1], [0], [0], [1], [0, 0, 1, 1], [], []>} : vector<96x128xf32>, vector<128x8xf32>, vector<96x8xf32> -> vector<96x8xf32>
    %cst_22 = arith.constant 0.377964467 : f32
    %51 = vector.broadcast %cst_22 : f32 to vector<96x8xf32>
    %52 = arith.mulf %50, %51 : vector<96x8xf32>
    %53 = vector.shape_cast %52 : vector<96x8xf32> to vector<2x2x24x8xf32>
    %cst_23 = arith.constant dense<0xFF800000> : vector<2x24x8xf32>
    %54 = vector.multi_reduction <maximumf>, %53, %cst_23 [1] : vector<2x2x24x8xf32> to vector<2x24x8xf32>
    %55 = vector.shape_cast %54 : vector<2x24x8xf32> to vector<2x1x24x8xf32>
    %56 = vector.broadcast %55 : vector<2x1x24x8xf32> to vector<2x2x24x8xf32>
    %57 = arith.subf %53, %56 : vector<2x2x24x8xf32>
    %58 = math.exp %57 : vector<2x2x24x8xf32>
    %cst_24 = arith.constant dense<0.000000e+00> : vector<2x24x8xf32>
    %59 = vector.multi_reduction <add>, %58, %cst_24 [1] : vector<2x2x24x8xf32> to vector<2x24x8xf32>
    %60 = vector.shape_cast %59 : vector<2x24x8xf32> to vector<2x1x24x8xf32>
    %61 = vector.broadcast %60 : vector<2x1x24x8xf32> to vector<2x2x24x8xf32>
    %62 = arith.divf %58, %61 : vector<2x2x24x8xf32>
    %63 = vector.shape_cast %62 : vector<2x2x24x8xf32> to vector<96x8xf32>
    %c0_25 = arith.constant 0 : index
    %c0_26 = arith.constant 0 : index
    %64 = vector.load %arg5[%c0_25, %c0_26] : memref<8x128xf32, #tpu.memory_space<vmem>>, vector<8x128xf32>
    %cst_27 = arith.constant dense<0.000000e+00> : vector<96x128xf32>
    %65 = tpu.matmul %63, %64, %cst_27 {dimension_numbers = #tpu.dot_dimension_numbers<[1], [0], [0], [1], [0, 0, 1, 1], [], []>} : vector<96x8xf32>, vector<8x128xf32>, vector<96x128xf32> -> vector<96x128xf32>
    %66 = vector.shape_cast %65 : vector<96x128xf32> to vector<2x2x24x128xf32>
    %67 = vector.shape_cast %42 : vector<2x24x128xf32> to vector<1x2x24x128xf32>
    %68 = vector.broadcast %67 : vector<1x2x24x128xf32> to vector<2x2x24x128xf32>
    %69 = arith.mulf %66, %68 : vector<2x2x24x128xf32>
    %cst_28 = arith.constant dense<0.000000e+00> : vector<2x24x128xf32>
    %70 = vector.multi_reduction <add>, %69, %cst_28 [1] : vector<2x2x24x128xf32> to vector<2x24x128xf32>
    %71 = vector.shape_cast %70 : vector<2x24x128xf32> to vector<48x128xf32>
    %c0_29 = arith.constant 0 : index
    %c0_30 = arith.constant 0 : index
    %c0_31 = arith.constant 0 : index
    %72 = vector.load %arg10[%c0_29, %c0_30, %c0_31] : memref<1x128x128xf32, #tpu.memory_space<vmem>>, vector<1x128x128xf32>
    %73 = vector.shape_cast %72 : vector<1x128x128xf32> to vector<128x128xf32>
    %cst_32 = arith.constant dense<0.000000e+00> : vector<48x128xf32>
    %74 = tpu.matmul %71, %73, %cst_32 {dimension_numbers = #tpu.dot_dimension_numbers<[1], [0], [0], [1], [0, 0, 1, 1], [], []>} : vector<48x128xf32>, vector<128x128xf32>, vector<48x128xf32> -> vector<48x128xf32>
    %c0_33 = arith.constant 0 : index
    %c0_34 = arith.constant 0 : index
    %c0_35 = arith.constant 0 : index
    %75 = vector.load %arg11[%c0_33, %c0_34, %c0_35] : memref<1x1x128xf32, #tpu.memory_space<vmem>>, vector<1x1x128xf32>
    %76 = vector.shape_cast %75 : vector<1x1x128xf32> to vector<1x128xf32>
    %77 = vector.broadcast %76 : vector<1x128xf32> to vector<48x128xf32>
    %78 = arith.addf %74, %77 : vector<48x128xf32>
    %79 = arith.addf %78, %3 : vector<48x128xf32>
    %c0_36 = arith.constant 0 : index
    %c0_37 = arith.constant 0 : index
    %c0_38 = arith.constant 0 : index
    %80 = vector.load %arg12[%c0_36, %c0_37, %c0_38] : memref<1x1x128xf32, #tpu.memory_space<vmem>>, vector<1x1x128xf32>
    %81 = vector.shape_cast %80 : vector<1x1x128xf32> to vector<1x128xf32>
    %c0_39 = arith.constant 0 : index
    %c0_40 = arith.constant 0 : index
    %c0_41 = arith.constant 0 : index
    %82 = vector.load %arg13[%c0_39, %c0_40, %c0_41] : memref<1x1x128xf32, #tpu.memory_space<vmem>>, vector<1x1x128xf32>
    %83 = vector.shape_cast %82 : vector<1x1x128xf32> to vector<1x128xf32>
    %cst_42 = arith.constant dense<0.000000e+00> : vector<48xf32>
    %84 = vector.multi_reduction <add>, %79, %cst_42 [1] : vector<48x128xf32> to vector<48xf32>
    %85 = vector.shape_cast %84 : vector<48xf32> to vector<48x1xf32>
    %cst_43 = arith.constant 0.0204081628 : f32
    %86 = vector.broadcast %cst_43 : f32 to vector<48x1xf32>
    %87 = arith.mulf %85, %86 : vector<48x1xf32>
    %88 = arith.mulf %79, %79 : vector<48x128xf32>
    %cst_44 = arith.constant dense<0.000000e+00> : vector<48xf32>
    %89 = vector.multi_reduction <add>, %88, %cst_44 [1] : vector<48x128xf32> to vector<48xf32>
    %90 = vector.shape_cast %89 : vector<48xf32> to vector<48x1xf32>
    %cst_45 = arith.constant 0.0204081628 : f32
    %91 = vector.broadcast %cst_45 : f32 to vector<48x1xf32>
    %92 = arith.mulf %90, %91 : vector<48x1xf32>
    %93 = arith.mulf %87, %87 : vector<48x1xf32>
    %94 = arith.subf %92, %93 : vector<48x1xf32>
    %95 = vector.broadcast %87 : vector<48x1xf32> to vector<48x128xf32>
    %96 = arith.subf %79, %95 : vector<48x128xf32>
    %cst_46 = arith.constant 9.99999974E-6 : f32
    %97 = vector.broadcast %cst_46 : f32 to vector<48x1xf32>
    %98 = arith.addf %94, %97 : vector<48x1xf32>
    %99 = math.rsqrt %98 : vector<48x1xf32>
    %100 = vector.broadcast %99 : vector<48x1xf32> to vector<48x128xf32>
    %101 = arith.mulf %96, %100 : vector<48x128xf32>
    %102 = vector.broadcast %81 : vector<1x128xf32> to vector<48x128xf32>
    %103 = arith.mulf %101, %102 : vector<48x128xf32>
    %104 = vector.broadcast %83 : vector<1x128xf32> to vector<48x128xf32>
    %105 = arith.addf %103, %104 : vector<48x128xf32>
    %c0_47 = arith.constant 0 : index
    %c0_48 = arith.constant 0 : index
    %c0_49 = arith.constant 0 : index
    %106 = vector.load %arg14[%c0_47, %c0_48, %c0_49] : memref<1x128x256xf32, #tpu.memory_space<vmem>>, vector<1x128x256xf32>
    %107 = vector.shape_cast %106 : vector<1x128x256xf32> to vector<128x256xf32>
    %cst_50 = arith.constant dense<0.000000e+00> : vector<48x256xf32>
    %108 = tpu.matmul %105, %107, %cst_50 {dimension_numbers = #tpu.dot_dimension_numbers<[1], [0], [0], [1], [0, 0, 1, 1], [], []>} : vector<48x128xf32>, vector<128x256xf32>, vector<48x256xf32> -> vector<48x256xf32>
    %c0_51 = arith.constant 0 : index
    %c0_52 = arith.constant 0 : index
    %c0_53 = arith.constant 0 : index
    %109 = vector.load %arg15[%c0_51, %c0_52, %c0_53] : memref<1x1x256xf32, #tpu.memory_space<vmem>>, vector<1x1x256xf32>
    %110 = vector.shape_cast %109 : vector<1x1x256xf32> to vector<1x256xf32>
    %111 = vector.broadcast %110 : vector<1x256xf32> to vector<48x256xf32>
    %112 = arith.addf %108, %111 : vector<48x256xf32>
    %cst_54 = arith.constant 5.000000e-01 : f32
    %113 = vector.broadcast %cst_54 : f32 to vector<48x256xf32>
    %114 = arith.mulf %113, %112 : vector<48x256xf32>
    %cst_55 = arith.constant 0.707106769 : f32
    %115 = vector.broadcast %cst_55 : f32 to vector<48x256xf32>
    %116 = arith.mulf %112, %115 : vector<48x256xf32>
    %117 = math.absf %116 : vector<48x256xf32>
    %cst_56 = arith.constant 0.327591091 : f32
    %118 = vector.broadcast %cst_56 : f32 to vector<48x256xf32>
    %119 = arith.mulf %118, %117 : vector<48x256xf32>
    %cst_57 = arith.constant 1.000000e+00 : f32
    %120 = vector.broadcast %cst_57 : f32 to vector<48x256xf32>
    %121 = arith.addf %120, %119 : vector<48x256xf32>
    %cst_58 = arith.constant 1.000000e+00 : f32
    %122 = vector.broadcast %cst_58 : f32 to vector<48x256xf32>
    %123 = arith.divf %122, %121 : vector<48x256xf32>
    %cst_59 = arith.constant 1.06140542 : f32
    %124 = vector.broadcast %cst_59 : f32 to vector<48x256xf32>
    %125 = arith.mulf %124, %123 : vector<48x256xf32>
    %cst_60 = arith.constant -1.45315206 : f32
    %126 = vector.broadcast %cst_60 : f32 to vector<48x256xf32>
    %127 = arith.addf %125, %126 : vector<48x256xf32>
    %128 = arith.mulf %127, %123 : vector<48x256xf32>
    %cst_61 = arith.constant 1.42141378 : f32
    %129 = vector.broadcast %cst_61 : f32 to vector<48x256xf32>
    %130 = arith.addf %128, %129 : vector<48x256xf32>
    %131 = arith.mulf %130, %123 : vector<48x256xf32>
    %cst_62 = arith.constant -0.284496725 : f32
    %132 = vector.broadcast %cst_62 : f32 to vector<48x256xf32>
    %133 = arith.addf %131, %132 : vector<48x256xf32>
    %134 = arith.mulf %133, %123 : vector<48x256xf32>
    %cst_63 = arith.constant 0.254829586 : f32
    %135 = vector.broadcast %cst_63 : f32 to vector<48x256xf32>
    %136 = arith.addf %134, %135 : vector<48x256xf32>
    %137 = arith.mulf %136, %123 : vector<48x256xf32>
    %cst_64 = arith.constant 0.000000e+00 : f32
    %138 = vector.broadcast %cst_64 : f32 to vector<48x256xf32>
    %139 = arith.subf %138, %117 : vector<48x256xf32>
    %140 = arith.mulf %139, %117 : vector<48x256xf32>
    %141 = math.exp %140 : vector<48x256xf32>
    %142 = arith.mulf %137, %141 : vector<48x256xf32>
    %cst_65 = arith.constant 1.000000e+00 : f32
    %143 = vector.broadcast %cst_65 : f32 to vector<48x256xf32>
    %144 = arith.subf %143, %142 : vector<48x256xf32>
    %cst_66 = arith.constant 0.000000e+00 : f32
    %145 = vector.broadcast %cst_66 : f32 to vector<48x256xf32>
    %146 = arith.cmpf oge, %116, %145 : vector<48x256xf32>
    %cst_67 = arith.constant 0.000000e+00 : f32
    %147 = vector.broadcast %cst_67 : f32 to vector<48x256xf32>
    %148 = arith.subf %147, %144 : vector<48x256xf32>
    %149 = arith.select %146, %144, %148 : vector<48x256xi1>, vector<48x256xf32>
    %cst_68 = arith.constant 1.000000e+00 : f32
    %150 = vector.broadcast %cst_68 : f32 to vector<48x256xf32>
    %151 = arith.addf %150, %149 : vector<48x256xf32>
    %152 = arith.mulf %114, %151 : vector<48x256xf32>
    %c0_69 = arith.constant 0 : index
    %c0_70 = arith.constant 0 : index
    %c0_71 = arith.constant 0 : index
    %153 = vector.load %arg16[%c0_69, %c0_70, %c0_71] : memref<1x256x128xf32, #tpu.memory_space<vmem>>, vector<1x256x128xf32>
    %154 = vector.shape_cast %153 : vector<1x256x128xf32> to vector<256x128xf32>
    %cst_72 = arith.constant dense<0.000000e+00> : vector<48x128xf32>
    %155 = tpu.matmul %152, %154, %cst_72 {dimension_numbers = #tpu.dot_dimension_numbers<[1], [0], [0], [1], [0, 0, 1, 1], [], []>} : vector<48x256xf32>, vector<256x128xf32>, vector<48x128xf32> -> vector<48x128xf32>
    %c0_73 = arith.constant 0 : index
    %c0_74 = arith.constant 0 : index
    %c0_75 = arith.constant 0 : index
    %156 = vector.load %arg17[%c0_73, %c0_74, %c0_75] : memref<1x1x128xf32, #tpu.memory_space<vmem>>, vector<1x1x128xf32>
    %157 = vector.shape_cast %156 : vector<1x1x128xf32> to vector<1x128xf32>
    %158 = vector.broadcast %157 : vector<1x128xf32> to vector<48x128xf32>
    %159 = arith.addf %155, %158 : vector<48x128xf32>
    %160 = arith.addf %159, %79 : vector<48x128xf32>
    %c0_76 = arith.constant 0 : index
    %c0_77 = arith.constant 0 : index
    %161 = vector.load %arg23[%c0_76, %c0_77] : memref<48x128xf32, #tpu.memory_space<vmem>>, vector<48x128xf32>
    tpu.vector_store %arg23[%c0_76, %c0_77], %160 {strides = array<i32>} : memref<48x128xf32, #tpu.memory_space<vmem>>, vector<48x128xf32>,
    %c5_i32 = arith.constant 5 : i32
    %162 = arith.cmpi eq, %arg0, %c5_i32 : i32
    %163 = arith.extui %162 : i1 to i32
    %c0_i32_78 = arith.constant 0 : i32
    %164 = arith.cmpi ne, %163, %c0_i32_78 : i32
    scf.if %164 {
      %165 = vector.shape_cast %160 : vector<48x128xf32> to vector<2x24x128xf32>
      %166 = vector.extract_strided_slice %165 {offsets = [0, 0, 0], sizes = [2, 1, 128], strides = [1, 1, 1]} : vector<2x24x128xf32> to vector<2x1x128xf32>
      %167 = vector.shape_cast %166 : vector<2x1x128xf32> to vector<2x128xf32>
      %c0_79 = arith.constant 0 : index
      %c0_80 = arith.constant 0 : index
      %168 = vector.load %arg18[%c0_79, %c0_80] : memref<1x128xf32, #tpu.memory_space<vmem>>, vector<1x128xf32>
      %c0_81 = arith.constant 0 : index
      %c0_82 = arith.constant 0 : index
      %169 = vector.load %arg19[%c0_81, %c0_82] : memref<1x128xf32, #tpu.memory_space<vmem>>, vector<1x128xf32>
      %cst_83 = arith.constant dense<0.000000e+00> : vector<2xf32>
      %170 = vector.multi_reduction <add>, %167, %cst_83 [1] : vector<2x128xf32> to vector<2xf32>
      %171 = vector.shape_cast %170 : vector<2xf32> to vector<2x1xf32>
      %cst_84 = arith.constant 0.0204081628 : f32
      %172 = vector.broadcast %cst_84 : f32 to vector<2x1xf32>
      %173 = arith.mulf %171, %172 : vector<2x1xf32>
      %174 = arith.mulf %167, %167 : vector<2x128xf32>
      %cst_85 = arith.constant dense<0.000000e+00> : vector<2xf32>
      %175 = vector.multi_reduction <add>, %174, %cst_85 [1] : vector<2x128xf32> to vector<2xf32>
      %176 = vector.shape_cast %175 : vector<2xf32> to vector<2x1xf32>
      %cst_86 = arith.constant 0.0204081628 : f32
      %177 = vector.broadcast %cst_86 : f32 to vector<2x1xf32>
      %178 = arith.mulf %176, %177 : vector<2x1xf32>
      %179 = arith.mulf %173, %173 : vector<2x1xf32>
      %180 = arith.subf %178, %179 : vector<2x1xf32>
      %181 = vector.broadcast %173 : vector<2x1xf32> to vector<2x128xf32>
      %182 = arith.subf %167, %181 : vector<2x128xf32>
      %cst_87 = arith.constant 9.99999974E-6 : f32
      %183 = vector.broadcast %cst_87 : f32 to vector<2x1xf32>
      %184 = arith.addf %180, %183 : vector<2x1xf32>
      %185 = math.rsqrt %184 : vector<2x1xf32>
      %186 = vector.broadcast %185 : vector<2x1xf32> to vector<2x128xf32>
      %187 = arith.mulf %182, %186 : vector<2x128xf32>
      %188 = vector.broadcast %168 : vector<1x128xf32> to vector<2x128xf32>
      %189 = arith.mulf %187, %188 : vector<2x128xf32>
      %190 = vector.broadcast %169 : vector<1x128xf32> to vector<2x128xf32>
      %191 = arith.addf %189, %190 : vector<2x128xf32>
      %c0_88 = arith.constant 0 : index
      %c0_89 = arith.constant 0 : index
      %192 = vector.load %arg20[%c0_88, %c0_89] : memref<128x128xf32, #tpu.memory_space<vmem>>, vector<128x128xf32>
      %cst_90 = arith.constant dense<0.000000e+00> : vector<2x128xf32>
      %193 = tpu.matmul %191, %192, %cst_90 {dimension_numbers = #tpu.dot_dimension_numbers<[1], [0], [0], [1], [0, 0, 1, 1], [], []>} : vector<2x128xf32>, vector<128x128xf32>, vector<2x128xf32> -> vector<2x128xf32>
      %c0_91 = arith.constant 0 : index
      %c0_92 = arith.constant 0 : index
      %194 = vector.load %arg21[%c0_91, %c0_92] : memref<1x128xf32, #tpu.memory_space<vmem>>, vector<1x128xf32>
      %195 = vector.broadcast %194 : vector<1x128xf32> to vector<2x128xf32>
      %196 = arith.addf %193, %195 : vector<2x128xf32>
      %c0_93 = arith.constant 0 : index
      %c0_94 = arith.constant 0 : index
      %197 = vector.load %arg22[%c0_93, %c0_94] : memref<2x128xf32, #tpu.memory_space<vmem>>, vector<2x128xf32>
      tpu.vector_store %arg22[%c0_93, %c0_94], %196 {strides = array<i32>} : memref<2x128xf32, #tpu.memory_space<vmem>>, vector<2x128xf32>,
    } else {
    }
    return
  }
  func.func @transform_0(%arg0: i32) -> (i32, i32) {
    %c0_i32 = arith.constant 0 : i32
    %c0_i32_0 = arith.constant 0 : i32
    %c0_i32_1 = arith.constant 0 : i32
    return %c0_i32, %c0_i32_0 : i32, i32
  }
  func.func @transform_1(%arg0: i32) -> (i32, i32) {
    %c0_i32 = arith.constant 0 : i32
    %c0_i32_0 = arith.constant 0 : i32
    %c0_i32_1 = arith.constant 0 : i32
    return %c0_i32, %c0_i32_0 : i32, i32
  }
  func.func @transform_2(%arg0: i32) -> (i32, i32) {
    %c0_i32 = arith.constant 0 : i32
    %c0_i32_0 = arith.constant 0 : i32
    %c0_i32_1 = arith.constant 0 : i32
    return %c0_i32, %c0_i32_0 : i32, i32
  }
  func.func @transform_3(%arg0: i32) -> (i32, i32) {
    %c0_i32 = arith.constant 0 : i32
    %c0_i32_0 = arith.constant 0 : i32
    %c0_i32_1 = arith.constant 0 : i32
    return %c0_i32, %c0_i32_0 : i32, i32
  }
  func.func @transform_4(%arg0: i32) -> (i32, i32) {
    %c0_i32 = arith.constant 0 : i32
    %c0_i32_0 = arith.constant 0 : i32
    %c0_i32_1 = arith.constant 0 : i32
    return %c0_i32, %c0_i32_0 : i32, i32
  }
  func.func @transform_5(%arg0: i32) -> (i32, i32, i32) {
    %c0_i32 = arith.constant 0 : i32
    %c0_i32_0 = arith.constant 0 : i32
    %c0_i32_1 = arith.constant 0 : i32
    return %arg0, %c0_i32, %c0_i32_0 : i32, i32, i32
  }
  func.func @transform_6(%arg0: i32) -> (i32, i32, i32) {
    %c0_i32 = arith.constant 0 : i32
    %c0_i32_0 = arith.constant 0 : i32
    %c0_i32_1 = arith.constant 0 : i32
    return %arg0, %c0_i32, %c0_i32_0 : i32, i32, i32
  }
  func.func @transform_7(%arg0: i32) -> (i32, i32, i32) {
    %c0_i32 = arith.constant 0 : i32
    %c0_i32_0 = arith.constant 0 : i32
    %c0_i32_1 = arith.constant 0 : i32
    return %arg0, %c0_i32, %c0_i32_0 : i32, i32, i32
  }
  func.func @transform_8(%arg0: i32) -> (i32, i32, i32) {
    %c0_i32 = arith.constant 0 : i32
    %c0_i32_0 = arith.constant 0 : i32
    %c0_i32_1 = arith.constant 0 : i32
    return %arg0, %c0_i32, %c0_i32_0 : i32, i32, i32
  }
  func.func @transform_9(%arg0: i32) -> (i32, i32, i32) {
    %c0_i32 = arith.constant 0 : i32
    %c0_i32_0 = arith.constant 0 : i32
    %c0_i32_1 = arith.constant 0 : i32
    return %arg0, %c0_i32, %c0_i32_0 : i32, i32, i32
  }
  func.func @transform_10(%arg0: i32) -> (i32, i32, i32) {
    %c0_i32 = arith.constant 0 : i32
    %c0_i32_0 = arith.constant 0 : i32
    %c0_i32_1 = arith.constant 0 : i32
    return %arg0, %c0_i32, %c0_i32_0 : i32, i32, i32
  }
  func.func @transform_11(%arg0: i32) -> (i32, i32, i32) {
    %c0_i32 = arith.constant 0 : i32
    %c0_i32_0 = arith.constant 0 : i32
    %c0_i32_1 = arith.constant 0 : i32
    return %arg0, %c0_i32, %c0_i32_0 : i32, i32, i32
  }
  func.func @transform_12(%arg0: i32) -> (i32, i32, i32) {
    %c0_i32 = arith.constant 0 : i32
    %c0_i32_0 = arith.constant 0 : i32
    %c0_i32_1 = arith.constant 0 : i32
    return %arg0, %c0_i32, %c0_i32_0 : i32, i32, i32
  }
  func.func @transform_13(%arg0: i32) -> (i32, i32, i32) {
    %c0_i32 = arith.constant 0 : i32
    %c0_i32_0 = arith.constant 0 : i32
    %c0_i32_1 = arith.constant 0 : i32
    return %arg0, %c0_i32, %c0_i32_0 : i32, i32, i32
  }
  func.func @transform_14(%arg0: i32) -> (i32, i32, i32) {
    %c0_i32 = arith.constant 0 : i32
    %c0_i32_0 = arith.constant 0 : i32
    %c0_i32_1 = arith.constant 0 : i32
    return %arg0, %c0_i32, %c0_i32_0 : i32, i32, i32
  }
  func.func @transform_15(%arg0: i32) -> (i32, i32, i32) {
    %c0_i32 = arith.constant 0 : i32
    %c0_i32_0 = arith.constant 0 : i32
    %c0_i32_1 = arith.constant 0 : i32
    return %arg0, %c0_i32, %c0_i32_0 : i32, i32, i32
  }
  func.func @transform_16(%arg0: i32) -> (i32, i32, i32) {
    %c0_i32 = arith.constant 0 : i32
    %c0_i32_0 = arith.constant 0 : i32
    %c0_i32_1 = arith.constant 0 : i32
    return %arg0, %c0_i32, %c0_i32_0 : i32, i32, i32
  }
  func.func @transform_17(%arg0: i32) -> (i32, i32) {
    %c0_i32 = arith.constant 0 : i32
    %c0_i32_0 = arith.constant 0 : i32
    %c0_i32_1 = arith.constant 0 : i32
    return %c0_i32, %c0_i32_0 : i32, i32
  }
  func.func @transform_18(%arg0: i32) -> (i32, i32) {
    %c0_i32 = arith.constant 0 : i32
    %c0_i32_0 = arith.constant 0 : i32
    %c0_i32_1 = arith.constant 0 : i32
    return %c0_i32, %c0_i32_0 : i32, i32
  }
  func.func @transform_19(%arg0: i32) -> (i32, i32) {
    %c0_i32 = arith.constant 0 : i32
    %c0_i32_0 = arith.constant 0 : i32
    %c0_i32_1 = arith.constant 0 : i32
    return %c0_i32, %c0_i32_0 : i32, i32
  }
  func.func @transform_20(%arg0: i32) -> (i32, i32) {
    %c0_i32 = arith.constant 0 : i32
    %c0_i32_0 = arith.constant 0 : i32
    %c0_i32_1 = arith.constant 0 : i32
    return %c0_i32, %c0_i32_0 : i32, i32
  }
  func.func @transform_21(%arg0: i32) -> (i32, i32) {
    %c0_i32 = arith.constant 0 : i32
    %c0_i32_0 = arith.constant 0 : i32
    %c0_i32_1 = arith.constant 0 : i32
    return %c0_i32, %c0_i32_0 : i32, i32
  }
}

</mosaic_0001>

<llo_original>
// kernel: vit_forward.1
$region0: #{vit_forward.1}
  #allocation0 [shape = 'u32[]', space=smem, size = 0x4, offset = 0x4, fixed_abs, tag = 'smem constant byte address 0x4 - core index']
  #allocation1 [shape = 'u32[144,128]{1,0:T(1,128)}', space=vmem, size = 0x12000, scoped, tag = 'internal scratch']
  #allocation2 [shape = 'f32[48,128]{1,0:T(8,128)}', space=vmem, size = 0x6000, scoped, tag = 'scratch operand']
  %s0 = inlined_call_operand.vmem [shape: f32[48,128], index: 0, kind: input, shape index: {}]
  %s1 = inlined_call_operand.hbm [shape: f32[128,128], index: 1, kind: input, shape index: {}]
  %s2 = inlined_call_operand.hbm [shape: f32[24,128], index: 2, kind: input, shape index: {}]
  %s3 = inlined_call_operand.vmem [shape: f32[128,8], index: 3, kind: input, shape index: {}]
  %s4 = inlined_call_operand.hbm [shape: f32[8,128], index: 4, kind: input, shape index: {}]
  %s5 = inlined_call_operand.hbm [shape: f32[6,1,128], index: 5, kind: input, shape index: {}]
  %s6 = inlined_call_operand.hbm [shape: f32[6,1,128], index: 6, kind: input, shape index: {}]
  %s7 = inlined_call_operand.hbm [shape: f32[6,128,384], index: 7, kind: input, shape index: {}]
  %s8 = inlined_call_operand.hbm [shape: f32[6,1,384], index: 8, kind: input, shape index: {}]
  %s9 = inlined_call_operand.hbm [shape: f32[6,128,128], index: 9, kind: input, shape index: {}]
  %s10 = inlined_call_operand.hbm [shape: f32[6,1,128], index: 10, kind: input, shape index: {}]
  %s11 = inlined_call_operand.hbm [shape: f32[6,1,128], index: 11, kind: input, shape index: {}]
  %s12 = inlined_call_operand.hbm [shape: f32[6,1,128], index: 12, kind: input, shape index: {}]
  %s13 = inlined_call_operand.hbm [shape: f32[6,128,256], index: 13, kind: input, shape index: {}]
  %s14 = inlined_call_operand.hbm [shape: f32[6,1,256], index: 14, kind: input, shape index: {}]
  %s15 = inlined_call_operand.hbm [shape: f32[6,256,128], index: 15, kind: input, shape index: {}]
  %s16 = inlined_call_operand.hbm [shape: f32[6,1,128], index: 16, kind: input, shape index: {}]
  %s17 = inlined_call_operand.hbm [shape: f32[1,128], index: 17, kind: input, shape index: {}]
  %s18 = inlined_call_operand.hbm [shape: f32[1,128], index: 18, kind: input, shape index: {}]
  %s19 = inlined_call_operand.hbm [shape: f32[128,128], index: 19, kind: input, shape index: {}]
  %s20 = inlined_call_operand.hbm [shape: f32[1,128], index: 20, kind: input, shape index: {}]
  %s21 = inlined_call_operand.hbm [shape: f32[2,128], index: 21, kind: output, shape index: {}]
  %s22 = sld [smem:[#allocation0]]
  $region201: #{vit_forward.1} parent=0
    _
  %s24 = ssub.s32 1, %s22
  %s25 = scalar_select 0, %s24, %s22
  $region1: #{vit_forward.1} parent=0
    #allocation3 [shape = 'u8[65536]{0}', space=vmem, size = 0x10000, scoped, tag = 'input window, operand 1, single buffered']
    #allocation4 [shape = 's32[2]{0}', space=sflag, size = 0x8, scoped, tag = 'scoped memory for vit_forward.1']
    #allocation5 [shape = 's32[2]{0}', space=sflag, size = 0x8, scoped, tag = 'scoped memory for vit_forward.1']
    #allocation6 [shape = 'u8[12288]{0}', space=vmem, size = 0x3000, scoped, tag = 'input window, operand 2, single buffered']
    #allocation7 [shape = 's32[1]{0}', space=sflag, size = 0x4, scoped, tag = 'scoped memory for vit_forward.1']
    #allocation8 [shape = 'u8[4096]{0}', space=vmem, size = 0x1000, scoped, tag = 'input window, operand 4, single buffered']
    #allocation9 [shape = 'u8[1024]{0}', space=vmem, size = 0x400, scoped, tag = 'input window, operand 5']
    #allocation10 [shape = 's32[2]{0}', space=sflag, size = 0x8, scoped, tag = 'scoped memory for vit_forward.1']
    #allocation11 [shape = 'u8[1024]{0}', space=vmem, size = 0x400, scoped, tag = 'input window, operand 6']
    #allocation12 [shape = 'u8[393216]{0}', space=vmem, size = 0x60000, scoped, tag = 'input window, operand 7']
    #allocation13 [shape = 's32[2]{0}', space=sflag, size = 0x8, scoped, tag = 'scoped memory for vit_forward.1']
    #allocation14 [shape = 'u8[3072]{0}', space=vmem, size = 0xc00, scoped, tag = 'input window, operand 8']
    #allocation15 [shape = 'u8[131072]{0}', space=vmem, size = 0x20000, scoped, tag = 'input window, operand 9']
    #allocation16 [shape = 's32[2]{0}', space=sflag, size = 0x8, scoped, tag = 'scoped memory for vit_forward.1']
    #allocation17 [shape = 'u8[1024]{0}', space=vmem, size = 0x400, scoped, tag = 'input window, operand 10']
    #allocation18 [shape = 'u8[1024]{0}', space=vmem, size = 0x400, scoped, tag = 'input window, operand 11']
    #allocation19 [shape = 's32[2]{0}', space=sflag, size = 0x8, scoped, tag = 'scoped memory for vit_forward.1']
    #allocation20 [shape = 'u8[1024]{0}', space=vmem, size = 0x400, scoped, tag = 'input window, operand 12']
    #allocation21 [shape = 'u8[262144]{0}', space=vmem, size = 0x40000, scoped, tag = 'input window, operand 13']
    #allocation22 [shape = 's32[2]{0}', space=sflag, size = 0x8, scoped, tag = 'scoped memory for vit_forward.1']
    #allocation23 [shape = 'u8[2048]{0}', space=vmem, size = 0x800, scoped, tag = 'input window, operand 14']
    #allocation24 [shape = 'u8[262144]{0}', space=vmem, size = 0x40000, scoped, tag = 'input window, operand 15']
    #allocation25 [shape = 's32[2]{0}', space=sflag, size = 0x8, scoped, tag = 'scoped memory for vit_forward.1']
    #allocation26 [shape = 'u8[1024]{0}', space=vmem, size = 0x400, scoped, tag = 'input window, operand 16']
    #allocation27 [shape = 'u8[512]{0}', space=vmem, size = 0x400, scoped, tag = 'input window, operand 17, single buffered']
    #allocation28 [shape = 's32[1]{0}', space=sflag, size = 0x4, scoped, tag = 'scoped memory for vit_forward.1']
    #allocation29 [shape = 'u8[512]{0}', space=vmem, size = 0x400, scoped, tag = 'input window, operand 18, single buffered']
    #allocation30 [shape = 'u8[65536]{0}', space=vmem, size = 0x10000, scoped, tag = 'input window, operand 19, single buffered']
    #allocation31 [shape = 's32[1]{0}', space=sflag, size = 0x4, scoped, tag = 'scoped memory for vit_forward.1']
    #allocation32 [shape = 'u8[512]{0}', space=vmem, size = 0x400, scoped, tag = 'input window, operand 20, single buffered']
    #allocation33 [shape = 'u8[1024]{0}', space=vmem, size = 0x400, scoped, tag = 'output window, operand 0, single buffered']
    %26 = vsyncpa [#allocation4], 0
    %27 = vsyncpa [#allocation7], 0
    %28 = vsyncpa [#allocation10], 0
    %s29 = scalar_lea.sflag [#allocation10], 1
    %30 = vsyncpa %s29, 0
    %31 = vsyncpa [#allocation13], 0
    %s32 = scalar_lea.sflag [#allocation13], 1
    %33 = vsyncpa %s32, 0
    %34 = vsyncpa [#allocation16], 0
    %s35 = scalar_lea.sflag [#allocation16], 1
    %36 = vsyncpa %s35, 0
    %37 = vsyncpa [#allocation19], 0
    %s38 = scalar_lea.sflag [#allocation19], 1
    %39 = vsyncpa %s38, 0
    %40 = vsyncpa [#allocation22], 0
    %s41 = scalar_lea.sflag [#allocation22], 1
    %42 = vsyncpa %s41, 0
    %43 = vsyncpa [#allocation25], 0
    %s44 = scalar_lea.sflag [#allocation25], 1
    %45 = vsyncpa %s44, 0
    %46 = vsyncpa [#allocation28], 0
    %47 = vsyncpa [#allocation31], 0
    %48 = vsyncpa [#allocation5], 0
    loop: start=0, step=1, limit=8
    $region2: #{vit_forward.1} parent=1 // loop_pre_header
      _
    $region3: #{vit_forward.1} parent=1 // loop_header
      %s50 = sphi 0, %s54
      %p51 = scmp.ge.s32.totalorder %s50, 8
      %s58 = sphi 0, %s58
      %s60 = sphi 0, %s58
      %s61 = sphi 0, %s60
      %s75 = sphi 0, %s61
      %s79 = sphi 0, %s79
      %s81 = sphi 0, %s79
      %s82 = sphi 0, %s81
      %s96 = sphi 0, %s82
      %s100 = sphi 0, %s100
      %s102 = sphi 0, %s100
      %s103 = sphi 0, %s102
      %s117 = sphi 0, %s103
      %s121 = sphi 0, %s121
      %s123 = sphi 0, %s121
      %s124 = sphi 0, %s123
      %s138 = sphi 0, %s124
      %s142 = sphi 0, %s142
      %s144 = sphi 0, %s142
      %s145 = sphi 0, %s144
      %s159 = sphi 0, %s145
      %s165 = sphi 0, %s167
      %s168 = sphi 0, %s165
      %s169 = sphi 0, %s168
      %s185 = sphi 0, %s169
      %s191 = sphi 0, %s193
      %s194 = sphi 0, %s191
      %s195 = sphi 0, %s194
      %s211 = sphi 0, %s195
      %s217 = sphi 0, %s219
      %s220 = sphi 0, %s217
      %s221 = sphi 0, %s220
      %s237 = sphi 0, %s221
      %s243 = sphi 0, %s245
      %s246 = sphi 0, %s243
      %s247 = sphi 0, %s246
      %s263 = sphi 0, %s247
      %s269 = sphi 0, %s271
      %s272 = sphi 0, %s269
      %s273 = sphi 0, %s272
      %s289 = sphi 0, %s273
      %s295 = sphi 0, %s297
      %s298 = sphi 0, %s295
      %s299 = sphi 0, %s298
      %s315 = sphi 0, %s299
      %s321 = sphi 0, %s323
      %s324 = sphi 0, %s321
      %s325 = sphi 0, %s324
      %s341 = sphi 0, %s325
      %s347 = sphi 0, %s349
      %s350 = sphi 0, %s347
      %s351 = sphi 0, %s350
      %s367 = sphi 0, %s351
      %s373 = sphi 0, %s375
      %s376 = sphi 0, %s373
      %s377 = sphi 0, %s376
      %s393 = sphi 0, %s377
      %s399 = sphi 0, %s401
      %s402 = sphi 0, %s399
      %s403 = sphi 0, %s402
      %s419 = sphi 0, %s403
      %s425 = sphi 0, %s427
      %s428 = sphi 0, %s425
      %s429 = sphi 0, %s428
      %s445 = sphi 0, %s429
      %s451 = sphi 0, %s453
      %s454 = sphi 0, %s451
      %s455 = sphi 0, %s454
      %s471 = sphi 0, %s455
      %s475 = sphi 0, %s475
      %s477 = sphi 0, %s475
      %s478 = sphi 0, %s477
      %s492 = sphi 0, %s478
      %s496 = sphi 0, %s496
      %s498 = sphi 0, %s496
      %s499 = sphi 0, %s498
      %s513 = sphi 0, %s499
      %s517 = sphi 0, %s517
      %s519 = sphi 0, %s517
      %s520 = sphi 0, %s519
      %s534 = sphi 0, %s520
      %s538 = sphi 0, %s538
      %s540 = sphi 0, %s538
      %s541 = sphi 0, %s540
      %s555 = sphi 0, %s541
      %s559 = sphi 0, %s559
      %s561 = sphi 0, %s559
      %s562 = sphi 0, %s561
      %s576 = sphi 0, %s562
    $region4: #{vit_forward.1} parent=1 // loop_header_branch
      %53 = sbr.rel (%p51) target = $region8
    $region5: #{vit_forward.1} parent=1 // loop_body
      %s55 = ssub.s32 %s50, 1
      %s56 = ssub.s32 %s50, 2
      %s57 = sadd.s32 %s50, 1
      %s59 = sadd.s32 %s58, 1
      %p62 = scmp.eq.s32.totalorder %s50, 5
      %p63 = scmp.ne.s32.totalorder %s58, %s60
      %p64 = scmp.eq.s32.totalorder %s50, 0
      %p65 = por %p63, %p64
      %p66 = scmp.ne.s32.totalorder %s58, %s60
      %p67 = scmp.eq.s32.totalorder %s55, 5
      %p68 = por %p66, %p67
      %p69 = scmp.ne.s32.totalorder %s60, %s61
      %p70 = scmp.eq.s32.totalorder %s55, 0
      %p71 = por %p69, %p70
      %p72 = scmp.ne.s32.totalorder %s60, %s61
      %p73 = scmp.eq.s32.totalorder %s56, 5
      %p74 = por %p72, %p73
      %p76 = scmp.ne.s32.totalorder %s61, %s75
      %p77 = scmp.eq.s32.totalorder %s56, 0
      %p78 = por %p76, %p77
      %s80 = sadd.s32 %s79, 1
      %p83 = scmp.eq.s32.totalorder %s50, 5
      %p84 = scmp.ne.s32.totalorder %s79, %s81
      %p85 = scmp.eq.s32.totalorder %s50, 0
      %p86 = por %p84, %p85
      %p87 = scmp.ne.s32.totalorder %s79, %s81
      %p88 = scmp.eq.s32.totalorder %s55, 5
      %p89 = por %p87, %p88
      %p90 = scmp.ne.s32.totalorder %s81, %s82
      %p91 = scmp.eq.s32.totalorder %s55, 0
      %p92 = por %p90, %p91
      %p93 = scmp.ne.s32.totalorder %s81, %s82
      %p94 = scmp.eq.s32.totalorder %s56, 5
      %p95 = por %p93, %p94
      %p97 = scmp.ne.s32.totalorder %s82, %s96
      %p98 = scmp.eq.s32.totalorder %s56, 0
      %p99 = por %p97, %p98
      %s101 = sadd.s32 %s100, 1
      %p104 = scmp.eq.s32.totalorder %s50, 5
      %p105 = scmp.ne.s32.totalorder %s100, %s102
      %p106 = scmp.eq.s32.totalorder %s50, 0
      %p107 = por %p105, %p106
      %p108 = scmp.ne.s32.totalorder %s100, %s102
      %p109 = scmp.eq.s32.totalorder %s55, 5
      %p110 = por %p108, %p109
      %p111 = scmp.ne.s32.totalorder %s102, %s103
      %p112 = scmp.eq.s32.totalorder %s55, 0
      %p113 = por %p111, %p112
      %p114 = scmp.ne.s32.totalorder %s102, %s103
      %p115 = scmp.eq.s32.totalorder %s56, 5
      %p116 = por %p114, %p115
      %p118 = scmp.ne.s32.totalorder %s103, %s117
      %p119 = scmp.eq.s32.totalorder %s56, 0
      %p120 = por %p118, %p119
      %s122 = sadd.s32 %s121, 1
      %p125 = scmp.eq.s32.totalorder %s50, 5
      %p126 = scmp.ne.s32.totalorder %s121, %s123
      %p127 = scmp.eq.s32.totalorder %s50, 0
      %p128 = por %p126, %p127
      %p129 = scmp.ne.s32.totalorder %s121, %s123
      %p130 = scmp.eq.s32.totalorder %s55, 5
      %p131 = por %p129, %p130
      %p132 = scmp.ne.s32.totalorder %s123, %s124
      %p133 = scmp.eq.s32.totalorder %s55, 0
      %p134 = por %p132, %p133
      %p135 = scmp.ne.s32.totalorder %s123, %s124
      %p136 = scmp.eq.s32.totalorder %s56, 5
      %p137 = por %p135, %p136
      %p139 = scmp.ne.s32.totalorder %s124, %s138
      %p140 = scmp.eq.s32.totalorder %s56, 0
      %p141 = por %p139, %p140
      %s143 = sadd.s32 %s142, 1
      %p146 = scmp.eq.s32.totalorder %s50, 5
      %p147 = scmp.ne.s32.totalorder %s142, %s144
      %p148 = scmp.eq.s32.totalorder %s50, 0
      %p149 = por %p147, %p148
      %p150 = scmp.ne.s32.totalorder %s142, %s144
      %p151 = scmp.eq.s32.totalorder %s55, 5
      %p152 = por %p150, %p151
      %p153 = scmp.ne.s32.totalorder %s144, %s145
      %p154 = scmp.eq.s32.totalorder %s55, 0
      %p155 = por %p153, %p154
      %p156 = scmp.ne.s32.totalorder %s144, %s145
      %p157 = scmp.eq.s32.totalorder %s56, 5
      %p158 = por %p156, %p157
      %p160 = scmp.ne.s32.totalorder %s145, %s159
      %p161 = scmp.eq.s32.totalorder %s56, 0
      %p162 = por %p160, %p161
      %s163 = ssub.s32 %s50, %s57
      %p164 = scmp.eq.s32.totalorder %s163, 0
      %s166 = sadd.s32 %s165, 1
      %s167 = scalar_select %p164, %s165, %s166
      %p170 = pneg %p164
      %p171 = scmp.eq.s32.totalorder %s50, 5
      %p172 = por %p170, %p171
      %p173 = scmp.ne.s32.totalorder %s165, %s168
      %p174 = scmp.eq.s32.totalorder %s50, 0
      %p175 = por %p173, %p174
      %p176 = scmp.ne.s32.totalorder %s165, %s168
      %p177 = scmp.eq.s32.totalorder %s55, 5
      %p178 = por %p176, %p177
      %p179 = scmp.ne.s32.totalorder %s168, %s169
      %p180 = scmp.eq.s32.totalorder %s55, 0
      %p181 = por %p179, %p180
      %p182 = scmp.ne.s32.totalorder %s168, %s169
      %p183 = scmp.eq.s32.totalorder %s56, 5
      %p184 = por %p182, %p183
      %p186 = scmp.ne.s32.totalorder %s169, %s185
      %p187 = scmp.eq.s32.totalorder %s56, 0
      %p188 = por %p186, %p187
      %s189 = ssub.s32 %s50, %s57
      %p190 = scmp.eq.s32.totalorder %s189, 0
      %s192 = sadd.s32 %s191, 1
      %s193 = scalar_select %p190, %s191, %s192
      %p196 = pneg %p190
      %p197 = scmp.eq.s32.totalorder %s50, 5
      %p198 = por %p196, %p197
      %p199 = scmp.ne.s32.totalorder %s191, %s194
      %p200 = scmp.eq.s32.totalorder %s50, 0
      %p201 = por %p199, %p200
      %p202 = scmp.ne.s32.totalorder %s191, %s194
      %p203 = scmp.eq.s32.totalorder %s55, 5
      %p204 = por %p202, %p203
      %p205 = scmp.ne.s32.totalorder %s194, %s195
      %p206 = scmp.eq.s32.totalorder %s55, 0
      %p207 = por %p205, %p206
      %p208 = scmp.ne.s32.totalorder %s194, %s195
      %p209 = scmp.eq.s32.totalorder %s56, 5
      %p210 = por %p208, %p209
      %p212 = scmp.ne.s32.totalorder %s195, %s211
      %p213 = scmp.eq.s32.totalorder %s56, 0
      %p214 = por %p212, %p213
      %s215 = ssub.s32 %s50, %s57
      %p216 = scmp.eq.s32.totalorder %s215, 0
      %s218 = sadd.s32 %s217, 1
      %s219 = scalar_select %p216, %s217, %s218
      %p222 = pneg %p216
      %p223 = scmp.eq.s32.totalorder %s50, 5
      %p224 = por %p222, %p223
      %p225 = scmp.ne.s32.totalorder %s217, %s220
      %p226 = scmp.eq.s32.totalorder %s50, 0
      %p227 = por %p225, %p226
      %p228 = scmp.ne.s32.totalorder %s217, %s220
      %p229 = scmp.eq.s32.totalorder %s55, 5
      %p230 = por %p228, %p229
      %p231 = scmp.ne.s32.totalorder %s220, %s221
      %p232 = scmp.eq.s32.totalorder %s55, 0
      %p233 = por %p231, %p232
      %p234 = scmp.ne.s32.totalorder %s220, %s221
      %p235 = scmp.eq.s32.totalorder %s56, 5
      %p236 = por %p234, %p235
      %p238 = scmp.ne.s32.totalorder %s221, %s237
      %p239 = scmp.eq.s32.totalorder %s56, 0
      %p240 = por %p238, %p239
      %s241 = ssub.s32 %s50, %s57
      %p242 = scmp.eq.s32.totalorder %s241, 0
      %s244 = sadd.s32 %s243, 1
      %s245 = scalar_select %p242, %s243, %s244
      %p248 = pneg %p242
      %p249 = scmp.eq.s32.totalorder %s50, 5
      %p250 = por %p248, %p249
      %p251 = scmp.ne.s32.totalorder %s243, %s246
      %p252 = scmp.eq.s32.totalorder %s50, 0
      %p253 = por %p251, %p252
      %p254 = scmp.ne.s32.totalorder %s243, %s246
      %p255 = scmp.eq.s32.totalorder %s55, 5
      %p256 = por %p254, %p255
      %p257 = scmp.ne.s32.totalorder %s246, %s247
      %p258 = scmp.eq.s32.totalorder %s55, 0
      %p259 = por %p257, %p258
      %p260 = scmp.ne.s32.totalorder %s246, %s247
      %p261 = scmp.eq.s32.totalorder %s56, 5
      %p262 = por %p260, %p261
      %p264 = scmp.ne.s32.totalorder %s247, %s263
      %p265 = scmp.eq.s32.totalorder %s56, 0
      %p266 = por %p264, %p265
      %s267 = ssub.s32 %s50, %s57
      %p268 = scmp.eq.s32.totalorder %s267, 0
      %s270 = sadd.s32 %s269, 1
      %s271 = scalar_select %p268, %s269, %s270
      %p274 = pneg %p268
      %p275 = scmp.eq.s32.totalorder %s50, 5
      %p276 = por %p274, %p275
      %p277 = scmp.ne.s32.totalorder %s269, %s272
      %p278 = scmp.eq.s32.totalorder %s50, 0
      %p279 = por %p277, %p278
      %p280 = scmp.ne.s32.totalorder %s269, %s272
      %p281 = scmp.eq.s32.totalorder %s55, 5
      %p282 = por %p280, %p281
      %p283 = scmp.ne.s32.totalorder %s272, %s273
      %p284 = scmp.eq.s32.totalorder %s55, 0
      %p285 = por %p283, %p284
      %p286 = scmp.ne.s32.totalorder %s272, %s273
      %p287 = scmp.eq.s32.totalorder %s56, 5
      %p288 = por %p286, %p287
      %p290 = scmp.ne.s32.totalorder %s273, %s289
      %p291 = scmp.eq.s32.totalorder %s56, 0
      %p292 = por %p290, %p291
      %s293 = ssub.s32 %s50, %s57
      %p294 = scmp.eq.s32.totalorder %s293, 0
      %s296 = sadd.s32 %s295, 1
      %s297 = scalar_select %p294, %s295, %s296
      %p300 = pneg %p294
      %p301 = scmp.eq.s32.totalorder %s50, 5
      %p302 = por %p300, %p301
      %p303 = scmp.ne.s32.totalorder %s295, %s298
      %p304 = scmp.eq.s32.totalorder %s50, 0
      %p305 = por %p303, %p304
      %p306 = scmp.ne.s32.totalorder %s295, %s298
      %p307 = scmp.eq.s32.totalorder %s55, 5
      %p308 = por %p306, %p307
      %p309 = scmp.ne.s32.totalorder %s298, %s299
      %p310 = scmp.eq.s32.totalorder %s55, 0
      %p311 = por %p309, %p310
      %p312 = scmp.ne.s32.totalorder %s298, %s299
      %p313 = scmp.eq.s32.totalorder %s56, 5
      %p314 = por %p312, %p313
      %p316 = scmp.ne.s32.totalorder %s299, %s315
      %p317 = scmp.eq.s32.totalorder %s56, 0
      %p318 = por %p316, %p317
      %s319 = ssub.s32 %s50, %s57
      %p320 = scmp.eq.s32.totalorder %s319, 0
      %s322 = sadd.s32 %s321, 1
      %s323 = scalar_select %p320, %s321, %s322
      %p326 = pneg %p320
      %p327 = scmp.eq.s32.totalorder %s50, 5
      %p328 = por %p326, %p327
      %p329 = scmp.ne.s32.totalorder %s321, %s324
      %p330 = scmp.eq.s32.totalorder %s50, 0
      %p331 = por %p329, %p330
      %p332 = scmp.ne.s32.totalorder %s321, %s324
      %p333 = scmp.eq.s32.totalorder %s55, 5
      %p334 = por %p332, %p333
      %p335 = scmp.ne.s32.totalorder %s324, %s325
      %p336 = scmp.eq.s32.totalorder %s55, 0
      %p337 = por %p335, %p336
      %p338 = scmp.ne.s32.totalorder %s324, %s325
      %p339 = scmp.eq.s32.totalorder %s56, 5
      %p340 = por %p338, %p339
      %p342 = scmp.ne.s32.totalorder %s325, %s341
      %p343 = scmp.eq.s32.totalorder %s56, 0
      %p344 = por %p342, %p343
      %s345 = ssub.s32 %s50, %s57
      %p346 = scmp.eq.s32.totalorder %s345, 0
      %s348 = sadd.s32 %s347, 1
      %s349 = scalar_select %p346, %s347, %s348
      %p352 = pneg %p346
      %p353 = scmp.eq.s32.totalorder %s50, 5
      %p354 = por %p352, %p353
      %p355 = scmp.ne.s32.totalorder %s347, %s350
      %p356 = scmp.eq.s32.totalorder %s50, 0
      %p357 = por %p355, %p356
      %p358 = scmp.ne.s32.totalorder %s347, %s350
      %p359 = scmp.eq.s32.totalorder %s55, 5
      %p360 = por %p358, %p359
      %p361 = scmp.ne.s32.totalorder %s350, %s351
      %p362 = scmp.eq.s32.totalorder %s55, 0
      %p363 = por %p361, %p362
      %p364 = scmp.ne.s32.totalorder %s350, %s351
      %p365 = scmp.eq.s32.totalorder %s56, 5
      %p366 = por %p364, %p365
      %p368 = scmp.ne.s32.totalorder %s351, %s367
      %p369 = scmp.eq.s32.totalorder %s56, 0
      %p370 = por %p368, %p369
      %s371 = ssub.s32 %s50, %s57
      %p372 = scmp.eq.s32.totalorder %s371, 0
      %s374 = sadd.s32 %s373, 1
      %s375 = scalar_select %p372, %s373, %s374
      %p378 = pneg %p372
      %p379 = scmp.eq.s32.totalorder %s50, 5
      %p380 = por %p378, %p379
      %p381 = scmp.ne.s32.totalorder %s373, %s376
      %p382 = scmp.eq.s32.totalorder %s50, 0
      %p383 = por %p381, %p382
      %p384 = scmp.ne.s32.totalorder %s373, %s376
      %p385 = scmp.eq.s32.totalorder %s55, 5
      %p386 = por %p384, %p385
      %p387 = scmp.ne.s32.totalorder %s376, %s377
      %p388 = scmp.eq.s32.totalorder %s55, 0
      %p389 = por %p387, %p388
      %p390 = scmp.ne.s32.totalorder %s376, %s377
      %p391 = scmp.eq.s32.totalorder %s56, 5
      %p392 = por %p390, %p391
      %p394 = scmp.ne.s32.totalorder %s377, %s393
      %p395 = scmp.eq.s32.totalorder %s56, 0
      %p396 = por %p394, %p395
      %s397 = ssub.s32 %s50, %s57
      %p398 = scmp.eq.s32.totalorder %s397, 0
      %s400 = sadd.s32 %s399, 1
      %s401 = scalar_select %p398, %s399, %s400
      %p404 = pneg %p398
      %p405 = scmp.eq.s32.totalorder %s50, 5
      %p406 = por %p404, %p405
      %p407 = scmp.ne.s32.totalorder %s399, %s402
      %p408 = scmp.eq.s32.totalorder %s50, 0
      %p409 = por %p407, %p408
      %p410 = scmp.ne.s32.totalorder %s399, %s402
      %p411 = scmp.eq.s32.totalorder %s55, 5
      %p412 = por %p410, %p411
      %p413 = scmp.ne.s32.totalorder %s402, %s403
      %p414 = scmp.eq.s32.totalorder %s55, 0
      %p415 = por %p413, %p414
      %p416 = scmp.ne.s32.totalorder %s402, %s403
      %p417 = scmp.eq.s32.totalorder %s56, 5
      %p418 = por %p416, %p417
      %p420 = scmp.ne.s32.totalorder %s403, %s419
      %p421 = scmp.eq.s32.totalorder %s56, 0
      %p422 = por %p420, %p421
      %s423 = ssub.s32 %s50, %s57
      %p424 = scmp.eq.s32.totalorder %s423, 0
      %s426 = sadd.s32 %s425, 1
      %s427 = scalar_select %p424, %s425, %s426
      %p430 = pneg %p424
      %p431 = scmp.eq.s32.totalorder %s50, 5
      %p432 = por %p430, %p431
      %p433 = scmp.ne.s32.totalorder %s425, %s428
      %p434 = scmp.eq.s32.totalorder %s50, 0
      %p435 = por %p433, %p434
      %p436 = scmp.ne.s32.totalorder %s425, %s428
      %p437 = scmp.eq.s32.totalorder %s55, 5
      %p438 = por %p436, %p437
      %p439 = scmp.ne.s32.totalorder %s428, %s429
      %p440 = scmp.eq.s32.totalorder %s55, 0
      %p441 = por %p439, %p440
      %p442 = scmp.ne.s32.totalorder %s428, %s429
      %p443 = scmp.eq.s32.totalorder %s56, 5
      %p444 = por %p442, %p443
      %p446 = scmp.ne.s32.totalorder %s429, %s445
      %p447 = scmp.eq.s32.totalorder %s56, 0
      %p448 = por %p446, %p447
      %s449 = ssub.s32 %s50, %s57
      %p450 = scmp.eq.s32.totalorder %s449, 0
      %s452 = sadd.s32 %s451, 1
      %s453 = scalar_select %p450, %s451, %s452
      %p456 = pneg %p450
      %p457 = scmp.eq.s32.totalorder %s50, 5
      %p458 = por %p456, %p457
      %p459 = scmp.ne.s32.totalorder %s451, %s454
      %p460 = scmp.eq.s32.totalorder %s50, 0
      %p461 = por %p459, %p460
      %p462 = scmp.ne.s32.totalorder %s451, %s454
      %p463 = scmp.eq.s32.totalorder %s55, 5
      %p464 = por %p462, %p463
      %p465 = scmp.ne.s32.totalorder %s454, %s455
      %p466 = scmp.eq.s32.totalorder %s55, 0
      %p467 = por %p465, %p466
      %p468 = scmp.ne.s32.totalorder %s454, %s455
      %p469 = scmp.eq.s32.totalorder %s56, 5
      %p470 = por %p468, %p469
      %p472 = scmp.ne.s32.totalorder %s455, %s471
      %p473 = scmp.eq.s32.totalorder %s56, 0
      %p474 = por %p472, %p473
      %s476 = sadd.s32 %s475, 1
      %p479 = scmp.eq.s32.totalorder %s50, 5
      %p480 = scmp.ne.s32.totalorder %s475, %s477
      %p481 = scmp.eq.s32.totalorder %s50, 0
      %p482 = por %p480, %p481
      %p483 = scmp.ne.s32.totalorder %s475, %s477
      %p484 = scmp.eq.s32.totalorder %s55, 5
      %p485 = por %p483, %p484
      %p486 = scmp.ne.s32.totalorder %s477, %s478
      %p487 = scmp.eq.s32.totalorder %s55, 0
      %p488 = por %p486, %p487
      %p489 = scmp.ne.s32.totalorder %s477, %s478
      %p490 = scmp.eq.s32.totalorder %s56, 5
      %p491 = por %p489, %p490
      %p493 = scmp.ne.s32.totalorder %s478, %s492
      %p494 = scmp.eq.s32.totalorder %s56, 0
      %p495 = por %p493, %p494
      %s497 = sadd.s32 %s496, 1
      %p500 = scmp.eq.s32.totalorder %s50, 5
      %p501 = scmp.ne.s32.totalorder %s496, %s498
      %p502 = scmp.eq.s32.totalorder %s50, 0
      %p503 = por %p501, %p502
      %p504 = scmp.ne.s32.totalorder %s496, %s498
      %p505 = scmp.eq.s32.totalorder %s55, 5
      %p506 = por %p504, %p505
      %p507 = scmp.ne.s32.totalorder %s498, %s499
      %p508 = scmp.eq.s32.totalorder %s55, 0
      %p509 = por %p507, %p508
      %p510 = scmp.ne.s32.totalorder %s498, %s499
      %p511 = scmp.eq.s32.totalorder %s56, 5
      %p512 = por %p510, %p511
      %p514 = scmp.ne.s32.totalorder %s499, %s513
      %p515 = scmp.eq.s32.totalorder %s56, 0
      %p516 = por %p514, %p515
      %s518 = sadd.s32 %s517, 1
      %p521 = scmp.eq.s32.totalorder %s50, 5
      %p522 = scmp.ne.s32.totalorder %s517, %s519
      %p523 = scmp.eq.s32.totalorder %s50, 0
      %p524 = por %p522, %p523
      %p525 = scmp.ne.s32.totalorder %s517, %s519
      %p526 = scmp.eq.s32.totalorder %s55, 5
      %p527 = por %p525, %p526
      %p528 = scmp.ne.s32.totalorder %s519, %s520
      %p529 = scmp.eq.s32.totalorder %s55, 0
      %p530 = por %p528, %p529
      %p531 = scmp.ne.s32.totalorder %s519, %s520
      %p532 = scmp.eq.s32.totalorder %s56, 5
      %p533 = por %p531, %p532
      %p535 = scmp.ne.s32.totalorder %s520, %s534
      %p536 = scmp.eq.s32.totalorder %s56, 0
      %p537 = por %p535, %p536
      %s539 = sadd.s32 %s538, 1
      %p542 = scmp.eq.s32.totalorder %s50, 5
      %p543 = scmp.ne.s32.totalorder %s538, %s540
      %p544 = scmp.eq.s32.totalorder %s50, 0
      %p545 = por %p543, %p544
      %p546 = scmp.ne.s32.totalorder %s538, %s540
      %p547 = scmp.eq.s32.totalorder %s55, 5
      %p548 = por %p546, %p547
      %p549 = scmp.ne.s32.totalorder %s540, %s541
      %p550 = scmp.eq.s32.totalorder %s55, 0
      %p551 = por %p549, %p550
      %p552 = scmp.ne.s32.totalorder %s540, %s541
      %p553 = scmp.eq.s32.totalorder %s56, 5
      %p554 = por %p552, %p553
      %p556 = scmp.ne.s32.totalorder %s541, %s555
      %p557 = scmp.eq.s32.totalorder %s56, 0
      %p558 = por %p556, %p557
      %s560 = sadd.s32 %s559, 1
      %p563 = scmp.eq.s32.totalorder %s50, 5
      %p564 = scmp.ne.s32.totalorder %s559, %s561
      %p565 = scmp.eq.s32.totalorder %s50, 0
      %p566 = por %p564, %p565
      %p567 = scmp.ne.s32.totalorder %s559, %s561
      %p568 = scmp.eq.s32.totalorder %s55, 5
      %p569 = por %p567, %p568
      %p570 = scmp.ne.s32.totalorder %s561, %s562
      %p571 = scmp.eq.s32.totalorder %s55, 0
      %p572 = por %p570, %p571
      %p573 = scmp.ne.s32.totalorder %s561, %s562
      %p574 = scmp.eq.s32.totalorder %s56, 5
      %p575 = por %p573, %p574
      %p577 = scmp.ne.s32.totalorder %s562, %s576
      %p578 = scmp.eq.s32.totalorder %s56, 0
      %p579 = por %p577, %p578
      %p580 = scmp.le.s32.totalorder 1, %s50
      %p581 = scmp.lt.s32.totalorder %s50, 7
      %p582 = pnand %p580, %p581
      %p583 = pneg %p582
      // Predicated region
      $region9: #{vit_forward.1} parent=5 // pred_check
        _
      $region10: #{vit_forward.1} parent=5 // pred_check_branch
        %585 = sbr.rel (%p582) target = $region12
      $region11: #{vit_forward.1} parent=5 // pred_region
        %s586 = ssub.s32 %s50, 1
        // Predicated region
        $region13: #{vit_forward.1} parent=11 // pred_check
          %p587 = pneg %p71
        $region14: #{vit_forward.1} parent=11 // pred_check_branch
          %589 = sbr.rel (%p587) target = $region16
        $region15: #{vit_forward.1} parent=11 // pred_region
          _
        $region16: #{vit_forward.1} parent=11 // pred_fallthru
          _
        // Predicated region
        $region17: #{vit_forward.1} parent=11 // pred_check
          %p590 = pneg %p92
        $region18: #{vit_forward.1} parent=11 // pred_check_branch
          %592 = sbr.rel (%p590) target = $region20
        $region19: #{vit_forward.1} parent=11 // pred_region
          %s594 = ssub.s32 2048, 2048
          %595 = vsyncadd [#allocation4], %s594
          %s596 = sshll.u32 [#allocation3], 4
          %s597 = int_to_ptr.vmem [resolvable:$true] %s596
          %602 = dma.hbm_to_vmem [thread:$0]  %s1, 2048, %s597, [#allocation4], 128, 128, 8
        $region20: #{vit_forward.1} parent=11 // pred_fallthru
          _
        // Predicated region
        $region21: #{vit_forward.1} parent=11 // pred_check
          %p603 = pneg %p113
        $region22: #{vit_forward.1} parent=11 // pred_check_branch
          %605 = sbr.rel (%p603) target = $region24
        $region23: #{vit_forward.1} parent=11 // pred_region
          %s607 = ssub.s32 384, 384
          %608 = vsyncadd [#allocation7], %s607
          %s609 = sshll.u32 [#allocation6], 4
          %s610 = int_to_ptr.vmem [resolvable:$true] %s609
          %615 = dma.hbm_to_vmem [thread:$0]  %s2, 384, %s610, [#allocation7], 128, 128, 8
        $region24: #{vit_forward.1} parent=11 // pred_fallthru
          _
        // Predicated region
        $region25: #{vit_forward.1} parent=11 // pred_check
          %p616 = pneg %p134
        $region26: #{vit_forward.1} parent=11 // pred_check_branch
          %618 = sbr.rel (%p616) target = $region28
        $region27: #{vit_forward.1} parent=11 // pred_region
          _
        $region28: #{vit_forward.1} parent=11 // pred_fallthru
          _
        // Predicated region
        $region29: #{vit_forward.1} parent=11 // pred_check
          %p619 = pneg %p155
        $region30: #{vit_forward.1} parent=11 // pred_check_branch
          %621 = sbr.rel (%p619) target = $region32
        $region31: #{vit_forward.1} parent=11 // pred_region
          %s623 = ssub.s32 128, 128
          %624 = vsyncadd [#allocation7], %s623
          %s626 = sshll.u32 [#allocation8], 4
          %s627 = int_to_ptr.vmem [resolvable:$true] %s626
          %629 = dma.hbm_to_vmem [thread:$0]  %s4, 128, %s627, [#allocation7]
        $region32: #{vit_forward.1} parent=11 // pred_fallthru
          _
        // Predicated region
        $region33: #{vit_forward.1} parent=11 // pred_check
          %p630 = pneg %p488
        $region34: #{vit_forward.1} parent=11 // pred_check_branch
          %632 = sbr.rel (%p630) target = $region36
        $region35: #{vit_forward.1} parent=11 // pred_region
          %s634 = ssub.s32 16, 16
          %635 = vsyncadd [#allocation28], %s634
          %s637 = sshll.u32 [#allocation27], 4
          %s638 = int_to_ptr.vmem [resolvable:$true] %s637
          %640 = dma.hbm_to_vmem [thread:$0]  %s17, 16, %s638, [#allocation28]
        $region36: #{vit_forward.1} parent=11 // pred_fallthru
          _
        // Predicated region
        $region37: #{vit_forward.1} parent=11 // pred_check
          %p641 = pneg %p509
        $region38: #{vit_forward.1} parent=11 // pred_check_branch
          %643 = sbr.rel (%p641) target = $region40
        $region39: #{vit_forward.1} parent=11 // pred_region
          %s645 = ssub.s32 16, 16
          %646 = vsyncadd [#allocation28], %s645
          %s648 = sshll.u32 [#allocation29], 4
          %s649 = int_to_ptr.vmem [resolvable:$true] %s648
          %651 = dma.hbm_to_vmem [thread:$0]  %s18, 16, %s649, [#allocation28]
        $region40: #{vit_forward.1} parent=11 // pred_fallthru
          _
        // Predicated region
        $region41: #{vit_forward.1} parent=11 // pred_check
          %p652 = pneg %p530
        $region42: #{vit_forward.1} parent=11 // pred_check_branch
          %654 = sbr.rel (%p652) target = $region44
        $region43: #{vit_forward.1} parent=11 // pred_region
          %s656 = ssub.s32 2048, 2048
          %657 = vsyncadd [#allocation31], %s656
          %s658 = sshll.u32 [#allocation30], 4
          %s659 = int_to_ptr.vmem [resolvable:$true] %s658
          %664 = dma.hbm_to_vmem [thread:$0]  %s19, 2048, %s659, [#allocation31], 128, 128, 8
        $region44: #{vit_forward.1} parent=11 // pred_fallthru
          _
        // Predicated region
        $region45: #{vit_forward.1} parent=11 // pred_check
          %p665 = pneg %p551
        $region46: #{vit_forward.1} parent=11 // pred_check_branch
          %667 = sbr.rel (%p665) target = $region48
        $region47: #{vit_forward.1} parent=11 // pred_region
          %s669 = ssub.s32 16, 16
          %670 = vsyncadd [#allocation31], %s669
          %s672 = sshll.u32 [#allocation32], 4
          %s673 = int_to_ptr.vmem [resolvable:$true] %s672
          %675 = dma.hbm_to_vmem [thread:$0]  %s20, 16, %s673, [#allocation31]
        $region48: #{vit_forward.1} parent=11 // pred_fallthru
          _
      $region12: #{vit_forward.1} parent=5 // pred_fallthru
        _
      %p676 = scmp.lt.s32.totalorder %s50, 6
      // Predicated region
      $region49: #{vit_forward.1} parent=5 // pred_check
        %p677 = pneg %p676
      $region50: #{vit_forward.1} parent=5 // pred_check_branch
        %679 = sbr.rel (%p677) target = $region52
      $region51: #{vit_forward.1} parent=5 // pred_region
        // Predicated region
        $region53: #{vit_forward.1} parent=51 // pred_check
          %p680 = pneg %p175
        $region54: #{vit_forward.1} parent=51 // pred_check_branch
          %682 = sbr.rel (%p680) target = $region56
        $region55: #{vit_forward.1} parent=51 // pred_region
          %s683 = sand.u32 %s50, 1
          %s684 = scalar_lea.sflag [#allocation10], %s683
          %s685 = sand.u32 %s165, 1
          %s686 = scalar_lea.vmem [#allocation9], %s685
          %s688 = ssub.s32 16, 16
          %689 = vsyncadd %s684, %s688
          %s690 = smul.addr %s50, 16
          %s691 = scalar_lea.hbm %s5, %s690
          %s693 = sshll.u32 %s686, 4
          %s694 = int_to_ptr.vmem [resolvable:$true] %s693
          %696 = dma.hbm_to_vmem [thread:$0]  %s691, 16, %s694, %s684
        $region56: #{vit_forward.1} parent=51 // pred_fallthru
          _
        // Predicated region
        $region57: #{vit_forward.1} parent=51 // pred_check
          %p697 = pneg %p201
        $region58: #{vit_forward.1} parent=51 // pred_check_branch
          %699 = sbr.rel (%p697) target = $region60
        $region59: #{vit_forward.1} parent=51 // pred_region
          %s700 = sand.u32 %s50, 1
          %s701 = scalar_lea.sflag [#allocation10], %s700
          %s702 = sand.u32 %s191, 1
          %s703 = scalar_lea.vmem [#allocation11], %s702
          %s705 = ssub.s32 16, 16
          %706 = vsyncadd %s701, %s705
          %s707 = smul.addr %s50, 16
          %s708 = scalar_lea.hbm %s6, %s707
          %s710 = sshll.u32 %s703, 4
          %s711 = int_to_ptr.vmem [resolvable:$true] %s710
          %713 = dma.hbm_to_vmem [thread:$0]  %s708, 16, %s711, %s701
        $region60: #{vit_forward.1} parent=51 // pred_fallthru
          _
        // Predicated region
        $region61: #{vit_forward.1} parent=51 // pred_check
          %p714 = pneg %p227
        $region62: #{vit_forward.1} parent=51 // pred_check_branch
          %716 = sbr.rel (%p714) target = $region64
        $region63: #{vit_forward.1} parent=51 // pred_region
          %s717 = sand.u32 %s50, 1
          %s718 = scalar_lea.sflag [#allocation13], %s717
          %s719 = sand.u32 %s217, 1
          %s720 = smul.addr %s719, 384
          %s721 = scalar_lea.vmem [#allocation12], %s720
          %s723 = ssub.s32 6144, 6144
          %724 = vsyncadd %s718, %s723
          %s725 = smul.addr %s50, 48
          %s726 = smul.addr %s725, 128
          %s727 = scalar_lea.hbm %s7, %s726
          %s728 = sshll.u32 %s721, 4
          %s729 = int_to_ptr.vmem [resolvable:$true] %s728
          %734 = dma.hbm_to_vmem [thread:$0]  %s727, 6144, %s729, %s718, 384, 384, 24
        $region64: #{vit_forward.1} parent=51 // pred_fallthru
          _
        // Predicated region
        $region65: #{vit_forward.1} parent=51 // pred_check
          %p735 = pneg %p253
        $region66: #{vit_forward.1} parent=51 // pred_check_branch
          %737 = sbr.rel (%p735) target = $region68
        $region67: #{vit_forward.1} parent=51 // pred_region
          %s738 = sand.u32 %s50, 1
          %s739 = scalar_lea.sflag [#allocation13], %s738
          %s740 = sand.u32 %s243, 1
          %s741 = smul.addr %s740, 3
          %s742 = scalar_lea.vmem [#allocation14], %s741
          %s744 = ssub.s32 48, 48
          %745 = vsyncadd %s739, %s744
          %s746 = smul.addr %s50, 3
          %s747 = smul.addr %s746, 16
          %s748 = scalar_lea.hbm %s8, %s747
          %s750 = sshll.u32 %s742, 4
          %s751 = int_to_ptr.vmem [resolvable:$true] %s750
          %753 = dma.hbm_to_vmem [thread:$0]  %s748, 48, %s751, %s739
        $region68: #{vit_forward.1} parent=51 // pred_fallthru
          _
        // Predicated region
        $region69: #{vit_forward.1} parent=51 // pred_check
          %p754 = pneg %p279
        $region70: #{vit_forward.1} parent=51 // pred_check_branch
          %756 = sbr.rel (%p754) target = $region72
        $region71: #{vit_forward.1} parent=51 // pred_region
          %s757 = sand.u32 %s50, 1
          %s758 = scalar_lea.sflag [#allocation16], %s757
          %s759 = sand.u32 %s269, 1
          %s760 = smul.addr %s759, 128
          %s761 = scalar_lea.vmem [#allocation15], %s760
          %s763 = ssub.s32 2048, 2048
          %764 = vsyncadd %s758, %s763
          %s765 = smul.addr %s50, 16
          %s766 = smul.addr %s765, 128
          %s767 = scalar_lea.hbm %s9, %s766
          %s768 = sshll.u32 %s761, 4
          %s769 = int_to_ptr.vmem [resolvable:$true] %s768
          %774 = dma.hbm_to_vmem [thread:$0]  %s767, 2048, %s769, %s758, 128, 128, 8
        $region72: #{vit_forward.1} parent=51 // pred_fallthru
          _
        // Predicated region
        $region73: #{vit_forward.1} parent=51 // pred_check
          %p775 = pneg %p305
        $region74: #{vit_forward.1} parent=51 // pred_check_branch
          %777 = sbr.rel (%p775) target = $region76
        $region75: #{vit_forward.1} parent=51 // pred_region
          %s778 = sand.u32 %s50, 1
          %s779 = scalar_lea.sflag [#allocation16], %s778
          %s780 = sand.u32 %s295, 1
          %s781 = scalar_lea.vmem [#allocation17], %s780
          %s783 = ssub.s32 16, 16
          %784 = vsyncadd %s779, %s783
          %s785 = smul.addr %s50, 16
          %s786 = scalar_lea.hbm %s10, %s785
          %s788 = sshll.u32 %s781, 4
          %s789 = int_to_ptr.vmem [resolvable:$true] %s788
          %791 = dma.hbm_to_vmem [thread:$0]  %s786, 16, %s789, %s779
        $region76: #{vit_forward.1} parent=51 // pred_fallthru
          _
        // Predicated region
        $region77: #{vit_forward.1} parent=51 // pred_check
          %p792 = pneg %p331
        $region78: #{vit_forward.1} parent=51 // pred_check_branch
          %794 = sbr.rel (%p792) target = $region80
        $region79: #{vit_forward.1} parent=51 // pred_region
          %s795 = sand.u32 %s50, 1
          %s796 = scalar_lea.sflag [#allocation19], %s795
          %s797 = sand.u32 %s321, 1
          %s798 = scalar_lea.vmem [#allocation18], %s797
          %s800 = ssub.s32 16, 16
          %801 = vsyncadd %s796, %s800
          %s802 = smul.addr %s50, 16
          %s803 = scalar_lea.hbm %s11, %s802
          %s805 = sshll.u32 %s798, 4
          %s806 = int_to_ptr.vmem [resolvable:$true] %s805
          %808 = dma.hbm_to_vmem [thread:$0]  %s803, 16, %s806, %s796
        $region80: #{vit_forward.1} parent=51 // pred_fallthru
          _
        // Predicated region
        $region81: #{vit_forward.1} parent=51 // pred_check
          %p809 = pneg %p357
        $region82: #{vit_forward.1} parent=51 // pred_check_branch
          %811 = sbr.rel (%p809) target = $region84
        $region83: #{vit_forward.1} parent=51 // pred_region
          %s812 = sand.u32 %s50, 1
          %s813 = scalar_lea.sflag [#allocation19], %s812
          %s814 = sand.u32 %s347, 1
          %s815 = scalar_lea.vmem [#allocation20], %s814
          %s817 = ssub.s32 16, 16
          %818 = vsyncadd %s813, %s817
          %s819 = smul.addr %s50, 16
          %s820 = scalar_lea.hbm %s12, %s819
          %s822 = sshll.u32 %s815, 4
          %s823 = int_to_ptr.vmem [resolvable:$true] %s822
          %825 = dma.hbm_to_vmem [thread:$0]  %s820, 16, %s823, %s813
        $region84: #{vit_forward.1} parent=51 // pred_fallthru
          _
        // Predicated region
        $region85: #{vit_forward.1} parent=51 // pred_check
          %p826 = pneg %p383
        $region86: #{vit_forward.1} parent=51 // pred_check_branch
          %828 = sbr.rel (%p826) target = $region88
        $region87: #{vit_forward.1} parent=51 // pred_region
          %s829 = sand.u32 %s50, 1
          %s830 = scalar_lea.sflag [#allocation22], %s829
          %s831 = sand.u32 %s373, 1
          %s832 = smul.addr %s831, 256
          %s833 = scalar_lea.vmem [#allocation21], %s832
          %s835 = ssub.s32 4096, 4096
          %836 = vsyncadd %s830, %s835
          %s837 = smul.addr %s50, 32
          %s838 = smul.addr %s837, 128
          %s839 = scalar_lea.hbm %s13, %s838
          %s840 = sshll.u32 %s833, 4
          %s841 = int_to_ptr.vmem [resolvable:$true] %s840
          %846 = dma.hbm_to_vmem [thread:$0]  %s839, 4096, %s841, %s830, 256, 256, 16
        $region88: #{vit_forward.1} parent=51 // pred_fallthru
          _
        // Predicated region
        $region89: #{vit_forward.1} parent=51 // pred_check
          %p847 = pneg %p409
        $region90: #{vit_forward.1} parent=51 // pred_check_branch
          %849 = sbr.rel (%p847) target = $region92
        $region91: #{vit_forward.1} parent=51 // pred_region
          %s850 = sand.u32 %s50, 1
          %s851 = scalar_lea.sflag [#allocation22], %s850
          %s852 = sand.u32 %s399, 1
          %s853 = smul.addr %s852, 2
          %s854 = scalar_lea.vmem [#allocation23], %s853
          %s856 = ssub.s32 32, 32
          %857 = vsyncadd %s851, %s856
          %s858 = smul.addr %s50, 2
          %s859 = smul.addr %s858, 16
          %s860 = scalar_lea.hbm %s14, %s859
          %s862 = sshll.u32 %s854, 4
          %s863 = int_to_ptr.vmem [resolvable:$true] %s862
          %865 = dma.hbm_to_vmem [thread:$0]  %s860, 32, %s863, %s851
        $region92: #{vit_forward.1} parent=51 // pred_fallthru
          _
        // Predicated region
        $region93: #{vit_forward.1} parent=51 // pred_check
          %p866 = pneg %p435
        $region94: #{vit_forward.1} parent=51 // pred_check_branch
          %868 = sbr.rel (%p866) target = $region96
        $region95: #{vit_forward.1} parent=51 // pred_region
          %s869 = sand.u32 %s50, 1
          %s870 = scalar_lea.sflag [#allocation25], %s869
          %s871 = sand.u32 %s425, 1
          %s872 = smul.addr %s871, 256
          %s873 = scalar_lea.vmem [#allocation24], %s872
          %s875 = ssub.s32 4096, 4096
          %876 = vsyncadd %s870, %s875
          %s877 = smul.addr %s50, 32
          %s878 = smul.addr %s877, 128
          %s879 = scalar_lea.hbm %s15, %s878
          %s880 = sshll.u32 %s873, 4
          %s881 = int_to_ptr.vmem [resolvable:$true] %s880
          %886 = dma.hbm_to_vmem [thread:$0]  %s879, 4096, %s881, %s870, 128, 128, 8
        $region96: #{vit_forward.1} parent=51 // pred_fallthru
          _
        // Predicated region
        $region97: #{vit_forward.1} parent=51 // pred_check
          %p887 = pneg %p461
        $region98: #{vit_forward.1} parent=51 // pred_check_branch
          %889 = sbr.rel (%p887) target = $region100
        $region99: #{vit_forward.1} parent=51 // pred_region
          %s890 = sand.u32 %s50, 1
          %s891 = scalar_lea.sflag [#allocation25], %s890
          %s892 = sand.u32 %s451, 1
          %s893 = scalar_lea.vmem [#allocation26], %s892
          %s895 = ssub.s32 16, 16
          %896 = vsyncadd %s891, %s895
          %s897 = smul.addr %s50, 16
          %s898 = scalar_lea.hbm %s16, %s897
          %s900 = sshll.u32 %s893, 4
          %s901 = int_to_ptr.vmem [resolvable:$true] %s900
          %903 = dma.hbm_to_vmem [thread:$0]  %s898, 16, %s901, %s891
        $region100: #{vit_forward.1} parent=51 // pred_fallthru
          _
      $region52: #{vit_forward.1} parent=5 // pred_fallthru
        _
      %p904 = scmp.le.s32.totalorder 1, %s50
      %p905 = scmp.lt.s32.totalorder %s50, 7
      %p906 = pnand %p904, %p905
      %p907 = pneg %p906
      // Predicated region
      $region101: #{vit_forward.1} parent=5 // pred_check
        _
      $region102: #{vit_forward.1} parent=5 // pred_check_branch
        %909 = sbr.rel (%p906) target = $region104
      $region103: #{vit_forward.1} parent=5 // pred_region
        %s910 = ssub.s32 %s50, 1
        // Predicated region
        $region105: #{vit_forward.1} parent=103 // pred_check
          %p911 = pneg %p92
        $region106: #{vit_forward.1} parent=103 // pred_check_branch
          %913 = sbr.rel (%p911) target = $region108
        $region107: #{vit_forward.1} parent=103 // pred_region
          %914 = dma.done [#allocation4], 2048
        $region108: #{vit_forward.1} parent=103 // pred_fallthru
          _
        // Predicated region
        $region109: #{vit_forward.1} parent=103 // pred_check
          %p915 = pneg %p113
        $region110: #{vit_forward.1} parent=103 // pred_check_branch
          %917 = sbr.rel (%p915) target = $region112
        $region111: #{vit_forward.1} parent=103 // pred_region
          %918 = dma.done [#allocation7], 384
        $region112: #{vit_forward.1} parent=103 // pred_fallthru
          _
        // Predicated region
        $region113: #{vit_forward.1} parent=103 // pred_check
          %p919 = pneg %p155
        $region114: #{vit_forward.1} parent=103 // pred_check_branch
          %921 = sbr.rel (%p919) target = $region116
        $region115: #{vit_forward.1} parent=103 // pred_region
          %922 = dma.done [#allocation7], 128
        $region116: #{vit_forward.1} parent=103 // pred_fallthru
          _
        %s923 = sand.u32 %s55, 1
        %s924 = scalar_lea.sflag [#allocation10], %s923
        %s925 = sand.u32 %s168, 1
        %s926 = scalar_lea.vmem [#allocation9], %s925
        // Predicated region
        $region117: #{vit_forward.1} parent=103 // pred_check
          %p927 = pneg %p181
        $region118: #{vit_forward.1} parent=103 // pred_check_branch
          %929 = sbr.rel (%p927) target = $region120
        $region119: #{vit_forward.1} parent=103 // pred_region
          %930 = dma.done %s924, 16
        $region120: #{vit_forward.1} parent=103 // pred_fallthru
          _
        %s931 = sand.u32 %s55, 1
        %s932 = scalar_lea.sflag [#allocation10], %s931
        %s933 = sand.u32 %s194, 1
        %s934 = scalar_lea.vmem [#allocation11], %s933
        // Predicated region
        $region121: #{vit_forward.1} parent=103 // pred_check
          %p935 = pneg %p207
        $region122: #{vit_forward.1} parent=103 // pred_check_branch
          %937 = sbr.rel (%p935) target = $region124
        $region123: #{vit_forward.1} parent=103 // pred_region
          %938 = dma.done %s932, 16
        $region124: #{vit_forward.1} parent=103 // pred_fallthru
          _
        %s939 = sand.u32 %s55, 1
        %s940 = scalar_lea.sflag [#allocation13], %s939
        %s941 = sand.u32 %s220, 1
        %s942 = smul.addr %s941, 384
        %s943 = scalar_lea.vmem [#allocation12], %s942
        // Predicated region
        $region125: #{vit_forward.1} parent=103 // pred_check
          %p944 = pneg %p233
        $region126: #{vit_forward.1} parent=103 // pred_check_branch
          %946 = sbr.rel (%p944) target = $region128
        $region127: #{vit_forward.1} parent=103 // pred_region
          %947 = dma.done %s940, 6144
        $region128: #{vit_forward.1} parent=103 // pred_fallthru
          _
        %s948 = sand.u32 %s55, 1
        %s949 = scalar_lea.sflag [#allocation13], %s948
        %s950 = sand.u32 %s246, 1
        %s951 = smul.addr %s950, 3
        %s952 = scalar_lea.vmem [#allocation14], %s951
        // Predicated region
        $region129: #{vit_forward.1} parent=103 // pred_check
          %p953 = pneg %p259
        $region130: #{vit_forward.1} parent=103 // pred_check_branch
          %955 = sbr.rel (%p953) target = $region132
        $region131: #{vit_forward.1} parent=103 // pred_region
          %956 = dma.done %s949, 48
        $region132: #{vit_forward.1} parent=103 // pred_fallthru
          _
        %s957 = sand.u32 %s55, 1
        %s958 = scalar_lea.sflag [#allocation16], %s957
        %s959 = sand.u32 %s272, 1
        %s960 = smul.addr %s959, 128
        %s961 = scalar_lea.vmem [#allocation15], %s960
        // Predicated region
        $region133: #{vit_forward.1} parent=103 // pred_check
          %p962 = pneg %p285
        $region134: #{vit_forward.1} parent=103 // pred_check_branch
          %964 = sbr.rel (%p962) target = $region136
        $region135: #{vit_forward.1} parent=103 // pred_region
          %965 = dma.done %s958, 2048
        $region136: #{vit_forward.1} parent=103 // pred_fallthru
          _
        %s966 = sand.u32 %s55, 1
        %s967 = scalar_lea.sflag [#allocation16], %s966
        %s968 = sand.u32 %s298, 1
        %s969 = scalar_lea.vmem [#allocation17], %s968
        // Predicated region
        $region137: #{vit_forward.1} parent=103 // pred_check
          %p970 = pneg %p311
        $region138: #{vit_forward.1} parent=103 // pred_check_branch
          %972 = sbr.rel (%p970) target = $region140
        $region139: #{vit_forward.1} parent=103 // pred_region
          %973 = dma.done %s967, 16
        $region140: #{vit_forward.1} parent=103 // pred_fallthru
          _
        %s974 = sand.u32 %s55, 1
        %s975 = scalar_lea.sflag [#allocation19], %s974
        %s976 = sand.u32 %s324, 1
        %s977 = scalar_lea.vmem [#allocation18], %s976
        // Predicated region
        $region141: #{vit_forward.1} parent=103 // pred_check
          %p978 = pneg %p337
        $region142: #{vit_forward.1} parent=103 // pred_check_branch
          %980 = sbr.rel (%p978) target = $region144
        $region143: #{vit_forward.1} parent=103 // pred_region
          %981 = dma.done %s975, 16
        $region144: #{vit_forward.1} parent=103 // pred_fallthru
          _
        %s982 = sand.u32 %s55, 1
        %s983 = scalar_lea.sflag [#allocation19], %s982
        %s984 = sand.u32 %s350, 1
        %s985 = scalar_lea.vmem [#allocation20], %s984
        // Predicated region
        $region145: #{vit_forward.1} parent=103 // pred_check
          %p986 = pneg %p363
        $region146: #{vit_forward.1} parent=103 // pred_check_branch
          %988 = sbr.rel (%p986) target = $region148
        $region147: #{vit_forward.1} parent=103 // pred_region
          %989 = dma.done %s983, 16
        $region148: #{vit_forward.1} parent=103 // pred_fallthru
          _
        %s990 = sand.u32 %s55, 1
        %s991 = scalar_lea.sflag [#allocation22], %s990
        %s992 = sand.u32 %s376, 1
        %s993 = smul.addr %s992, 256
        %s994 = scalar_lea.vmem [#allocation21], %s993
        // Predicated region
        $region149: #{vit_forward.1} parent=103 // pred_check
          %p995 = pneg %p389
        $region150: #{vit_forward.1} parent=103 // pred_check_branch
          %997 = sbr.rel (%p995) target = $region152
        $region151: #{vit_forward.1} parent=103 // pred_region
          %998 = dma.done %s991, 4096
        $region152: #{vit_forward.1} parent=103 // pred_fallthru
          _
        %s999 = sand.u32 %s55, 1
        %s1000 = scalar_lea.sflag [#allocation22], %s999
        %s1001 = sand.u32 %s402, 1
        %s1002 = smul.addr %s1001, 2
        %s1003 = scalar_lea.vmem [#allocation23], %s1002
        // Predicated region
        $region153: #{vit_forward.1} parent=103 // pred_check
          %p1004 = pneg %p415
        $region154: #{vit_forward.1} parent=103 // pred_check_branch
          %1006 = sbr.rel (%p1004) target = $region156
        $region155: #{vit_forward.1} parent=103 // pred_region
          %1007 = dma.done %s1000, 32
        $region156: #{vit_forward.1} parent=103 // pred_fallthru
          _
        %s1008 = sand.u32 %s55, 1
        %s1009 = scalar_lea.sflag [#allocation25], %s1008
        %s1010 = sand.u32 %s428, 1
        %s1011 = smul.addr %s1010, 256
        %s1012 = scalar_lea.vmem [#allocation24], %s1011
        // Predicated region
        $region157: #{vit_forward.1} parent=103 // pred_check
          %p1013 = pneg %p441
        $region158: #{vit_forward.1} parent=103 // pred_check_branch
          %1015 = sbr.rel (%p1013) target = $region160
        $region159: #{vit_forward.1} parent=103 // pred_region
          %1016 = dma.done %s1009, 4096
        $region160: #{vit_forward.1} parent=103 // pred_fallthru
          _
        %s1017 = sand.u32 %s55, 1
        %s1018 = scalar_lea.sflag [#allocation25], %s1017
        %s1019 = sand.u32 %s454, 1
        %s1020 = scalar_lea.vmem [#allocation26], %s1019
        // Predicated region
        $region161: #{vit_forward.1} parent=103 // pred_check
          %p1021 = pneg %p467
        $region162: #{vit_forward.1} parent=103 // pred_check_branch
          %1023 = sbr.rel (%p1021) target = $region164
        $region163: #{vit_forward.1} parent=103 // pred_region
          %1024 = dma.done %s1018, 16
        $region164: #{vit_forward.1} parent=103 // pred_fallthru
          _
        // Predicated region
        $region165: #{vit_forward.1} parent=103 // pred_check
          %p1025 = pneg %p488
        $region166: #{vit_forward.1} parent=103 // pred_check_branch
          %1027 = sbr.rel (%p1025) target = $region168
        $region167: #{vit_forward.1} parent=103 // pred_region
          %1028 = dma.done [#allocation28], 16
        $region168: #{vit_forward.1} parent=103 // pred_fallthru
          _
        // Predicated region
        $region169: #{vit_forward.1} parent=103 // pred_check
          %p1029 = pneg %p509
        $region170: #{vit_forward.1} parent=103 // pred_check_branch
          %1031 = sbr.rel (%p1029) target = $region172
        $region171: #{vit_forward.1} parent=103 // pred_region
          %1032 = dma.done [#allocation28], 16
        $region172: #{vit_forward.1} parent=103 // pred_fallthru
          _
        // Predicated region
        $region173: #{vit_forward.1} parent=103 // pred_check
          %p1033 = pneg %p530
        $region174: #{vit_forward.1} parent=103 // pred_check_branch
          %1035 = sbr.rel (%p1033) target = $region176
        $region175: #{vit_forward.1} parent=103 // pred_region
          %1036 = dma.done [#allocation31], 2048
        $region176: #{vit_forward.1} parent=103 // pred_fallthru
          _
        // Predicated region
        $region177: #{vit_forward.1} parent=103 // pred_check
          %p1037 = pneg %p551
        $region178: #{vit_forward.1} parent=103 // pred_check_branch
          %1039 = sbr.rel (%p1037) target = $region180
        $region179: #{vit_forward.1} parent=103 // pred_region
          %1040 = dma.done [#allocation31], 16
        $region180: #{vit_forward.1} parent=103 // pred_fallthru
          _
        %p1041 = pneg %p71
        %p1042 = pneg %p68
        %p1043 = pneg %p92
        %p1044 = pneg %p89
        %p1045 = pneg %p113
        %p1046 = pneg %p110
        %p1047 = pneg %p134
        %p1048 = pneg %p131
        %p1049 = pneg %p155
        %p1050 = pneg %p152
        %s1051 = sand.u32 %s55, 1
        %s1052 = scalar_lea.sflag [#allocation10], %s1051
        %s1053 = sand.u32 %s168, 1
        %s1054 = scalar_lea.vmem [#allocation9], %s1053
        %p1055 = pneg %p181
        %p1056 = pneg %p178
        %s1057 = sand.u32 %s55, 1
        %s1058 = scalar_lea.sflag [#allocation10], %s1057
        %s1059 = sand.u32 %s194, 1
        %s1060 = scalar_lea.vmem [#allocation11], %s1059
        %p1061 = pneg %p207
        %p1062 = pneg %p204
        %s1063 = sand.u32 %s55, 1
        %s1064 = scalar_lea.sflag [#allocation13], %s1063
        %s1065 = sand.u32 %s220, 1
        %s1066 = smul.addr %s1065, 384
        %s1067 = scalar_lea.vmem [#allocation12], %s1066
        %p1068 = pneg %p233
        %p1069 = pneg %p230
        %s1070 = sand.u32 %s55, 1
        %s1071 = scalar_lea.sflag [#allocation13], %s1070
        %s1072 = sand.u32 %s246, 1
        %s1073 = smul.addr %s1072, 3
        %s1074 = scalar_lea.vmem [#allocation14], %s1073
        %p1075 = pneg %p259
        %p1076 = pneg %p256
        %s1077 = sand.u32 %s55, 1
        %s1078 = scalar_lea.sflag [#allocation16], %s1077
        %s1079 = sand.u32 %s272, 1
        %s1080 = smul.addr %s1079, 128
        %s1081 = scalar_lea.vmem [#allocation15], %s1080
        %p1082 = pneg %p285
        %p1083 = pneg %p282
        %s1084 = sand.u32 %s55, 1
        %s1085 = scalar_lea.sflag [#allocation16], %s1084
        %s1086 = sand.u32 %s298, 1
        %s1087 = scalar_lea.vmem [#allocation17], %s1086
        %p1088 = pneg %p311
        %p1089 = pneg %p308
        %s1090 = sand.u32 %s55, 1
        %s1091 = scalar_lea.sflag [#allocation19], %s1090
        %s1092 = sand.u32 %s324, 1
        %s1093 = scalar_lea.vmem [#allocation18], %s1092
        %p1094 = pneg %p337
        %p1095 = pneg %p334
        %s1096 = sand.u32 %s55, 1
        %s1097 = scalar_lea.sflag [#allocation19], %s1096
        %s1098 = sand.u32 %s350, 1
        %s1099 = scalar_lea.vmem [#allocation20], %s1098
        %p1100 = pneg %p363
        %p1101 = pneg %p360
        %s1102 = sand.u32 %s55, 1
        %s1103 = scalar_lea.sflag [#allocation22], %s1102
        %s1104 = sand.u32 %s376, 1
        %s1105 = smul.addr %s1104, 256
        %s1106 = scalar_lea.vmem [#allocation21], %s1105
        %p1107 = pneg %p389
        %p1108 = pneg %p386
        %s1109 = sand.u32 %s55, 1
        %s1110 = scalar_lea.sflag [#allocation22], %s1109
        %s1111 = sand.u32 %s402, 1
        %s1112 = smul.addr %s1111, 2
        %s1113 = scalar_lea.vmem [#allocation23], %s1112
        %p1114 = pneg %p415
        %p1115 = pneg %p412
        %s1116 = sand.u32 %s55, 1
        %s1117 = scalar_lea.sflag [#allocation25], %s1116
        %s1118 = sand.u32 %s428, 1
        %s1119 = smul.addr %s1118, 256
        %s1120 = scalar_lea.vmem [#allocation24], %s1119
        %p1121 = pneg %p441
        %p1122 = pneg %p438
        %s1123 = sand.u32 %s55, 1
        %s1124 = scalar_lea.sflag [#allocation25], %s1123
        %s1125 = sand.u32 %s454, 1
        %s1126 = scalar_lea.vmem [#allocation26], %s1125
        %p1127 = pneg %p467
        %p1128 = pneg %p464
        %p1129 = pneg %p488
        %p1130 = pneg %p485
        %p1131 = pneg %p509
        %p1132 = pneg %p506
        %p1133 = pneg %p530
        %p1134 = pneg %p527
        %p1135 = pneg %p551
        %p1136 = pneg %p548
        %p1137 = pneg %p572
        %p1138 = pneg %p569
        %p1139 = scmp.eq.s32.totalorder %s55, 0
        // Predicated region
        $region181: #{vit_forward.1} parent=103 // pred_check
          %p1140 = pneg %p1139
        $region182: #{vit_forward.1} parent=103 // pred_check_branch
          %1142 = sbr.rel (%p1140) target = $region184
        $region183: #{vit_forward.1} parent=103 // pred_region
          %v1143 = vld [vmem:[%s0] sm:$0xff]
          %v1144 = vld [vmem:[%s0 + $0x8] sm:$0xff]
          %v1145 = vld [vmem:[%s0 + $0x10] sm:$0xff]
          %v1146 = vld [vmem:[%s0 + $0x18] sm:$0xff]
          %v1147 = vld [vmem:[%s0 + $0x20] sm:$0xff]
          %v1148 = vld [vmem:[%s0 + $0x28] sm:$0xff]
          %v1149 = vld [vmem:[#allocation3] sm:$0xff]
          %v1150 = vld [vmem:[#allocation3 + $0x8] sm:$0xff]
          %v1151 = vld [vmem:[#allocation3 + $0x10] sm:$0xff]
          %v1152 = vld [vmem:[#allocation3 + $0x18] sm:$0xff]
          %v1153 = vld [vmem:[#allocation3 + $0x20] sm:$0xff]
          %v1154 = vld [vmem:[#allocation3 + $0x28] sm:$0xff]
          %v1155 = vld [vmem:[#allocation3 + $0x30] sm:$0xff]
          %v1156 = vld [vmem:[#allocation3 + $0x38] sm:$0xff]
          %v1157 = vld [vmem:[#allocation3 + $0x40] sm:$0xff]
          %v1158 = vld [vmem:[#allocation3 + $0x48] sm:$0xff]
          %v1159 = vld [vmem:[#allocation3 + $0x50] sm:$0xff]
          %v1160 = vld [vmem:[#allocation3 + $0x58] sm:$0xff]
          %v1161 = vld [vmem:[#allocation3 + $0x60] sm:$0xff]
          %v1162 = vld [vmem:[#allocation3 + $0x68] sm:$0xff]
          %v1163 = vld [vmem:[#allocation3 + $0x70] sm:$0xff]
          %v1164 = vld [vmem:[#allocation3 + $0x78] sm:$0xff]
          %1165 = vmatprep.subr.mxu0 0.0
          %1166 = vmatpush1.msra.mxu0 %v1149
          %1167 = vmatprep.subr.mxu0 0.0
          %1168 = vmatpush1.msra.mxu0 %v1150
          %1169 = vmatprep.subr.mxu0 0.0
          %1170 = vmatpush1.msra.mxu0 %v1151
          %1171 = vmatprep.subr.mxu0 0.0
          %1172 = vmatpush1.msra.mxu0 %v1152
          %1173 = vmatprep.subr.mxu0 0.0
          %1174 = vmatpush1.msra.mxu0 %v1153
          %1175 = vmatprep.subr.mxu0 0.0
          %1176 = vmatpush1.msra.mxu0 %v1154
          %1177 = vmatprep.subr.mxu0 0.0
          %1178 = vmatpush1.msra.mxu0 %v1155
          %1179 = vmatprep.subr.mxu0 0.0
          %1180 = vmatpush1.msra.mxu0 %v1156
          %1181 = vmatprep.subr.mxu0 0.0
          %1182 = vmatpush1.msra.mxu0 %v1157
          %1183 = vmatprep.subr.mxu0 0.0
          %1184 = vmatpush1.msra.mxu0 %v1158
          %1185 = vmatprep.subr.mxu0 0.0
          %1186 = vmatpush1.msra.mxu0 %v1159
          %1187 = vmatprep.subr.mxu0 0.0
          %1188 = vmatpush1.msra.mxu0 %v1160
          %1189 = vmatprep.subr.mxu0 0.0
          %1190 = vmatpush1.msra.mxu0 %v1161
          %1191 = vmatprep.subr.mxu0 0.0
          %1192 = vmatpush1.msra.mxu0 %v1162
          %1193 = vmatprep.subr.mxu0 0.0
          %1194 = vmatpush1.msra.mxu0 %v1163
          %1195 = vmatprep.subr.mxu0 0.0
          %1196 = vmatpush1.msra.mxu0 %v1164
          %1197 = vmatprep.subr.mxu0 0.0
          %1198 = vmatpush1.msra.mxu0 0.0
          %1199 = vmatprep.subr.mxu0 0.0
          %1200 = vmatpush1.msra.mxu0 0.0
          %1201 = vmatprep.subr.mxu0 0.0
          %1202 = vmatpush1.msra.mxu0 0.0
          %1203 = vmatprep.subr.mxu0 0.0
          %1204 = vmatpush1.msra.mxu0 0.0
          %1205 = vmatprep.subr.mxu0 0.0
          %1206 = vmatpush1.msra.mxu0 0.0
          %1207 = vmatprep.subr.mxu0 0.0
          %1208 = vmatpush1.msra.mxu0 0.0
          %1209 = vmatprep.subr.mxu0 0.0
          %1210 = vmatpush1.msra.mxu0 0.0
          %1211 = vmatprep.subr.mxu0 0.0
          %1212 = vmatpush1.msra.mxu0 0.0
          %1213 = vmatprep.subr.mxu0 0.0
          %1214 = vmatpush1.msra.mxu0 0.0
          %1215 = vmatprep.subr.mxu0 0.0
          %1216 = vmatpush1.msra.mxu0 0.0
          %1217 = vmatprep.subr.mxu0 0.0
          %1218 = vmatpush1.msra.mxu0 0.0
          %1219 = vmatprep.subr.mxu0 0.0
          %1220 = vmatpush1.msra.mxu0 0.0
          %1221 = vmatprep.subr.mxu0 0.0
          %1222 = vmatpush1.msra.mxu0 0.0
          %1223 = vmatprep.subr.mxu0 0.0
          %1224 = vmatpush1.msra.mxu0 0.0
          %1225 = vmatprep.subr.mxu0 0.0
          %1226 = vmatpush1.msra.mxu0 0.0
          %1227 = vmatprep.subr.mxu0 0.0
          %1228 = vmatpush1.msra.mxu0 0.0
          %1229 = vmatprep.mubr.f32.mxu0 0.0
          %1230 = vmatmul.mubr.f32.gmra.mrb[0].mxu0 %v1143
          %v1231 = vpop.f32.mrb[0].mxu0
          %v1232 = vadd.f32 0.0, %v1231
          %v1233 = vpop.f32.mrb[0].mxu0
          %1234 = vmatprep.mubr.f32.mxu0 0.0
          %1235 = vmatmul.mubr.f32.gmra.mrb[0].mxu0 %v1144
          %v1236 = vpop.f32.mrb[0].mxu0
          %v1237 = vadd.f32 0.0, %v1236
          %v1238 = vpop.f32.mrb[0].mxu0
          %1239 = vmatprep.mubr.f32.mxu0 0.0
          %1240 = vmatmul.mubr.f32.gmra.mrb[0].mxu0 %v1145
          %v1241 = vpop.f32.mrb[0].mxu0
          %v1242 = vadd.f32 0.0, %v1241
          %v1243 = vpop.f32.mrb[0].mxu0
          %1244 = vmatprep.mubr.f32.mxu0 0.0
          %1245 = vmatmul.mubr.f32.gmra.mrb[0].mxu0 %v1146
          %v1246 = vpop.f32.mrb[0].mxu0
          %v1247 = vadd.f32 0.0, %v1246
          %v1248 = vpop.f32.mrb[0].mxu0
          %1249 = vmatprep.mubr.f32.mxu0 0.0
          %1250 = vmatmul.mubr.f32.gmra.mrb[0].mxu0 %v1147
          %v1251 = vpop.f32.mrb[0].mxu0
          %v1252 = vadd.f32 0.0, %v1251
          %v1253 = vpop.f32.mrb[0].mxu0
          %1254 = vmatprep.mubr.f32.mxu0 0.0
          %1255 = vmatmul.mubr.f32.gmra.mrb[0].mxu0 %v1148
          %v1256 = vpop.f32.mrb[0].mxu0
          %v1257 = vadd.f32 0.0, %v1256
          %v1258 = vpop.f32.mrb[0].mxu0
          %1259 = vdwg.mxu0
          %v1260 = vld [vmem:[#allocation6] sm:$0xff]
          %v1261 = vld [vmem:[#allocation6 + $0x8] sm:$0xff]
          %v1262 = vld [vmem:[#allocation6 + $0x10] sm:$0xff]
          %v1263 = vadd.f32 %v1232, %v1260
          %v1264 = vadd.f32 %v1237, %v1261
          %v1265 = vadd.f32 %v1242, %v1262
          %v1266 = vadd.f32 %v1247, %v1260
          %v1267 = vadd.f32 %v1252, %v1261
          %v1268 = vadd.f32 %v1257, %v1262
          %1269 = vst [vmem:[#allocation2] sm:$0xff] %v1263
          %1270 = vst [vmem:[#allocation2 + $0x8] sm:$0xff] %v1264
          %1271 = vst [vmem:[#allocation2 + $0x10] sm:$0xff] %v1265
          %1272 = vst [vmem:[#allocation2 + $0x18] sm:$0xff] %v1266
          %1273 = vst [vmem:[#allocation2 + $0x20] sm:$0xff] %v1267
          %1274 = vst [vmem:[#allocation2 + $0x28] sm:$0xff] %v1268
        $region184: #{vit_forward.1} parent=103 // pred_fallthru
          _
        %v1275 = vld [vmem:[#allocation2] sm:$0xff]
        %v1276 = vld [vmem:[#allocation2 + $0x8] sm:$0xff]
        %v1277 = vld [vmem:[#allocation2 + $0x10] sm:$0xff]
        %v1278 = vld [vmem:[#allocation2 + $0x18] sm:$0xff]
        %v1279 = vld [vmem:[#allocation2 + $0x20] sm:$0xff]
        %v1280 = vld [vmem:[#allocation2 + $0x28] sm:$0xff]
        %v1281 = vld [vmem:[%s926] sm:$0x1]
        %v1282 = vld [vmem:[%s934] sm:$0x1]
        %1283 = vadd.xlane.f32.xlu0 %v1275
        %v1284 = vpop.xlane.xlu0 %1283
        %1285 = vadd.xlane.f32.xlu0 %v1276
        %v1286 = vpop.xlane.xlu0 %1285
        %1287 = vadd.xlane.f32.xlu0 %v1277
        %v1288 = vpop.xlane.xlu0 %1287
        %1289 = vadd.xlane.f32.xlu0 %v1278
        %v1290 = vpop.xlane.xlu0 %1289
        %1291 = vadd.xlane.f32.xlu0 %v1279
        %v1292 = vpop.xlane.xlu0 %1291
        %1293 = vadd.xlane.f32.xlu0 %v1280
        %v1294 = vpop.xlane.xlu0 %1293
        %v1295 = vmul.f32 %v1284, 0.020408163
        %v1296 = vmul.f32 %v1286, 0.020408163
        %v1297 = vmul.f32 %v1288, 0.020408163
        %v1298 = vmul.f32 %v1290, 0.020408163
        %v1299 = vmul.f32 %v1292, 0.020408163
        %v1300 = vmul.f32 %v1294, 0.020408163
        %v1301 = vmul.f32 %v1275, %v1275
        %v1302 = vmul.f32 %v1276, %v1276
        %v1303 = vmul.f32 %v1277, %v1277
        %v1304 = vmul.f32 %v1278, %v1278
        %v1305 = vmul.f32 %v1279, %v1279
        %v1306 = vmul.f32 %v1280, %v1280
        %1307 = vadd.xlane.f32.xlu0 %v1301
        %v1308 = vpop.xlane.xlu0 %1307
        %1309 = vadd.xlane.f32.xlu0 %v1302
        %v1310 = vpop.xlane.xlu0 %1309
        %1311 = vadd.xlane.f32.xlu0 %v1303
        %v1312 = vpop.xlane.xlu0 %1311
        %1313 = vadd.xlane.f32.xlu0 %v1304
        %v1314 = vpop.xlane.xlu0 %1313
        %1315 = vadd.xlane.f32.xlu0 %v1305
        %v1316 = vpop.xlane.xlu0 %1315
        %1317 = vadd.xlane.f32.xlu0 %v1306
        %v1318 = vpop.xlane.xlu0 %1317
        %v1319 = vmul.f32 %v1308, 0.020408163
        %v1320 = vmul.f32 %v1310, 0.020408163
        %v1321 = vmul.f32 %v1312, 0.020408163
        %v1322 = vmul.f32 %v1314, 0.020408163
        %v1323 = vmul.f32 %v1316, 0.020408163
        %v1324 = vmul.f32 %v1318, 0.020408163
        %v1325 = vmul.f32 %v1295, %v1295
        %v1326 = vmul.f32 %v1296, %v1296
        %v1327 = vmul.f32 %v1297, %v1297
        %v1328 = vmul.f32 %v1298, %v1298
        %v1329 = vmul.f32 %v1299, %v1299
        %v1330 = vmul.f32 %v1300, %v1300
        %v1331 = vsub.f32 %v1319, %v1325
        %v1332 = vsub.f32 %v1320, %v1326
        %v1333 = vsub.f32 %v1321, %v1327
        %v1334 = vsub.f32 %v1322, %v1328
        %v1335 = vsub.f32 %v1323, %v1329
        %v1336 = vsub.f32 %v1324, %v1330
        %v1337 = vsub.f32 %v1275, %v1295
        %v1338 = vsub.f32 %v1276, %v1296
        %v1339 = vsub.f32 %v1277, %v1297
        %v1340 = vsub.f32 %v1278, %v1298
        %v1341 = vsub.f32 %v1279, %v1299
        %v1342 = vsub.f32 %v1280, %v1300
        %v1343 = vadd.f32 %v1331, 1e-05
        %v1344 = vadd.f32 %v1332, 1e-05
        %v1345 = vadd.f32 %v1333, 1e-05
        %v1346 = vadd.f32 %v1334, 1e-05
        %v1347 = vadd.f32 %v1335, 1e-05
        %v1348 = vadd.f32 %v1336, 1e-05
        %v1349 = vrsqrt.pop %v1343
        %v1350 = vrsqrt.pop %v1344
        %v1351 = vrsqrt.pop %v1345
        %v1352 = vrsqrt.pop %v1346
        %v1353 = vrsqrt.pop %v1347
        %v1354 = vrsqrt.pop %v1348
        %v1355 = vmul.f32 %v1337, %v1349
        %v1356 = vmul.f32 %v1338, %v1350
        %v1357 = vmul.f32 %v1339, %v1351
        %v1358 = vmul.f32 %v1340, %v1352
        %v1359 = vmul.f32 %v1341, %v1353
        %v1360 = vmul.f32 %v1342, %v1354
        %v1362 = vlaneseq
        %v1363 = vshrl.u32 %v1362, 7
        %v1364 = vsub.s32 0, %v1363
        %v1365 = vrot.slane %v1281, %v1364
        %v1367 = vmul.f32 %v1355, %v1365
        %v1368 = vmul.f32 %v1356, %v1365
        %v1369 = vmul.f32 %v1357, %v1365
        %v1370 = vmul.f32 %v1358, %v1365
        %v1371 = vmul.f32 %v1359, %v1365
        %v1372 = vmul.f32 %v1360, %v1365
        %v1374 = vlaneseq
        %v1375 = vshrl.u32 %v1374, 7
        %v1376 = vsub.s32 0, %v1375
        %v1377 = vrot.slane %v1282, %v1376
        %v1379 = vadd.f32 %v1367, %v1377
        %v1380 = vadd.f32 %v1368, %v1377
        %v1381 = vadd.f32 %v1369, %v1377
        %v1382 = vadd.f32 %v1370, %v1377
        %v1383 = vadd.f32 %v1371, %v1377
        %v1384 = vadd.f32 %v1372, %v1377
        %v1385 = vld [vmem:[%s943] sm:$0xff]
        %v1386 = vld [vmem:[%s943 + $0x8] sm:$0xff]
        %v1387 = vld [vmem:[%s943 + $0x10] sm:$0xff]
        %v1388 = vld [vmem:[%s943 + $0x18] sm:$0xff]
        %v1389 = vld [vmem:[%s943 + $0x20] sm:$0xff]
        %v1390 = vld [vmem:[%s943 + $0x28] sm:$0xff]
        %v1391 = vld [vmem:[%s943 + $0x30] sm:$0xff]
        %v1392 = vld [vmem:[%s943 + $0x38] sm:$0xff]
        %v1393 = vld [vmem:[%s943 + $0x40] sm:$0xff]
        %v1394 = vld [vmem:[%s943 + $0x48] sm:$0xff]
        %v1395 = vld [vmem:[%s943 + $0x50] sm:$0xff]
        %v1396 = vld [vmem:[%s943 + $0x58] sm:$0xff]
        %v1397 = vld [vmem:[%s943 + $0x60] sm:$0xff]
        %v1398 = vld [vmem:[%s943 + $0x68] sm:$0xff]
        %v1399 = vld [vmem:[%s943 + $0x70] sm:$0xff]
        %v1400 = vld [vmem:[%s943 + $0x78] sm:$0xff]
        %v1401 = vld [vmem:[%s943 + $0x80] sm:$0xff]
        %v1402 = vld [vmem:[%s943 + $0x88] sm:$0xff]
        %v1403 = vld [vmem:[%s943 + $0x90] sm:$0xff]
        %v1404 = vld [vmem:[%s943 + $0x98] sm:$0xff]
        %v1405 = vld [vmem:[%s943 + $0xa0] sm:$0xff]
        %v1406 = vld [vmem:[%s943 + $0xa8] sm:$0xff]
        %v1407 = vld [vmem:[%s943 + $0xb0] sm:$0xff]
        %v1408 = vld [vmem:[%s943 + $0xb8] sm:$0xff]
        %v1409 = vld [vmem:[%s943 + $0xc0] sm:$0xff]
        %v1410 = vld [vmem:[%s943 + $0xc8] sm:$0xff]
        %v1411 = vld [vmem:[%s943 + $0xd0] sm:$0xff]
        %v1412 = vld [vmem:[%s943 + $0xd8] sm:$0xff]
        %v1413 = vld [vmem:[%s943 + $0xe0] sm:$0xff]
        %v1414 = vld [vmem:[%s943 + $0xe8] sm:$0xff]
        %v1415 = vld [vmem:[%s943 + $0xf0] sm:$0xff]
        %v1416 = vld [vmem:[%s943 + $0xf8] sm:$0xff]
        %v1417 = vld [vmem:[%s943 + $0x100] sm:$0xff]
        %v1418 = vld [vmem:[%s943 + $0x108] sm:$0xff]
        %v1419 = vld [vmem:[%s943 + $0x110] sm:$0xff]
        %v1420 = vld [vmem:[%s943 + $0x118] sm:$0xff]
        %v1421 = vld [vmem:[%s943 + $0x120] sm:$0xff]
        %v1422 = vld [vmem:[%s943 + $0x128] sm:$0xff]
        %v1423 = vld [vmem:[%s943 + $0x130] sm:$0xff]
        %v1424 = vld [vmem:[%s943 + $0x138] sm:$0xff]
        %v1425 = vld [vmem:[%s943 + $0x140] sm:$0xff]
        %v1426 = vld [vmem:[%s943 + $0x148] sm:$0xff]
        %v1427 = vld [vmem:[%s943 + $0x150] sm:$0xff]
        %v1428 = vld [vmem:[%s943 + $0x158] sm:$0xff]
        %v1429 = vld [vmem:[%s943 + $0x160] sm:$0xff]
        %v1430 = vld [vmem:[%s943 + $0x168] sm:$0xff]
        %v1431 = vld [vmem:[%s943 + $0x170] sm:$0xff]
        %v1432 = vld [vmem:[%s943 + $0x178] sm:$0xff]
        %v1433 = vld [vmem:[%s952] sm:$0x7]
        %v1435 = vlaneseq
        %v1436 = vshrl.u32 %v1435, 7
        %v1437 = vsub.s32 0, %v1436
        %v1438 = vrot.slane %v1433, %v1437
        %v1439 = vlaneseq
        %v1440 = vshrl.u32 %v1439, 7
        %v1441 = vsub.s32 1, %v1440
        %v1442 = vrot.slane %v1433, %v1441
        %v1443 = vlaneseq
        %v1444 = vshrl.u32 %v1443, 7
        %v1445 = vsub.s32 2, %v1444
        %v1446 = vrot.slane %v1433, %v1445
        %1450 = vmatprep.subr.mxu0 %v1386
        %1451 = vmatpush1.msra.mxu0 %v1385
        %1452 = vmatprep.subr.mxu0 %v1389
        %1453 = vmatpush1.msra.mxu0 %v1388
        %1454 = vmatprep.subr.mxu0 %v1392
        %1455 = vmatpush1.msra.mxu0 %v1391
        %1456 = vmatprep.subr.mxu0 %v1395
        %1457 = vmatpush1.msra.mxu0 %v1394
        %1458 = vmatprep.subr.mxu0 %v1398
        %1459 = vmatpush1.msra.mxu0 %v1397
        %1460 = vmatprep.subr.mxu0 %v1401
        %1461 = vmatpush1.msra.mxu0 %v1400
        %1462 = vmatprep.subr.mxu0 %v1404
        %1463 = vmatpush1.msra.mxu0 %v1403
        %1464 = vmatprep.subr.mxu0 %v1407
        %1465 = vmatpush1.msra.mxu0 %v1406
        %1466 = vmatprep.subr.mxu0 %v1410
        %1467 = vmatpush1.msra.mxu0 %v1409
        %1468 = vmatprep.subr.mxu0 %v1413
        %1469 = vmatpush1.msra.mxu0 %v1412
        %1470 = vmatprep.subr.mxu0 %v1416
        %1471 = vmatpush1.msra.mxu0 %v1415
        %1472 = vmatprep.subr.mxu0 %v1419
        %1473 = vmatpush1.msra.mxu0 %v1418
        %1474 = vmatprep.subr.mxu0 %v1422
        %1475 = vmatpush1.msra.mxu0 %v1421
        %1476 = vmatprep.subr.mxu0 %v1425
        %1477 = vmatpush1.msra.mxu0 %v1424
        %1478 = vmatprep.subr.mxu0 %v1428
        %1479 = vmatpush1.msra.mxu0 %v1427
        %1480 = vmatprep.subr.mxu0 %v1431
        %1481 = vmatpush1.msra.mxu0 %v1430
        %1482 = vmatprep.subr.mxu0 0.0
        %1483 = vmatpush1.msra.mxu0 0.0
        %1484 = vmatprep.subr.mxu0 0.0
        %1485 = vmatpush1.msra.mxu0 0.0
        %1486 = vmatprep.subr.mxu0 0.0
        %1487 = vmatpush1.msra.mxu0 0.0
        %1488 = vmatprep.subr.mxu0 0.0
        %1489 = vmatpush1.msra.mxu0 0.0
        %1490 = vmatprep.subr.mxu0 0.0
        %1491 = vmatpush1.msra.mxu0 0.0
        %1492 = vmatprep.subr.mxu0 0.0
        %1493 = vmatpush1.msra.mxu0 0.0
        %1494 = vmatprep.subr.mxu0 0.0
        %1495 = vmatpush1.msra.mxu0 0.0
        %1496 = vmatprep.subr.mxu0 0.0
        %1497 = vmatpush1.msra.mxu0 0.0
        %1498 = vmatprep.subr.mxu0 0.0
        %1499 = vmatpush1.msra.mxu0 0.0
        %1500 = vmatprep.subr.mxu0 0.0
        %1501 = vmatpush1.msra.mxu0 0.0
        %1502 = vmatprep.subr.mxu0 0.0
        %1503 = vmatpush1.msra.mxu0 0.0
        %1504 = vmatprep.subr.mxu0 0.0
        %1505 = vmatpush1.msra.mxu0 0.0
        %1506 = vmatprep.subr.mxu0 0.0
        %1507 = vmatpush1.msra.mxu0 0.0
        %1508 = vmatprep.subr.mxu0 0.0
        %1509 = vmatpush1.msra.mxu0 0.0
        %1510 = vmatprep.subr.mxu0 0.0
        %1511 = vmatpush1.msra.mxu0 0.0
        %1512 = vmatprep.subr.mxu0 0.0
        %1513 = vmatpush1.msra.mxu0 0.0
        %1514 = vmatprep.mubr.f32.mxu0 0.0
        %1515 = vmatmul.mubr.f32.gmra.mrb[0].mxu0 %v1379
        %v1516 = vpop.f32.mrb[0].mxu0
        %v1517 = vadd.f32 %v1438, %v1516
        %v1518 = vpop.f32.mrb[0].mxu0
        %v1519 = vadd.f32 %v1442, %v1518
        %1520 = vmatprep.mubr.f32.mxu0 0.0
        %1521 = vmatmul.mubr.f32.gmra.mrb[0].mxu0 %v1380
        %v1522 = vpop.f32.mrb[0].mxu0
        %v1523 = vadd.f32 %v1438, %v1522
        %v1524 = vpop.f32.mrb[0].mxu0
        %v1525 = vadd.f32 %v1442, %v1524
        %1526 = vmatprep.mubr.f32.mxu0 0.0
        %1527 = vmatmul.mubr.f32.gmra.mrb[0].mxu0 %v1381
        %v1528 = vpop.f32.mrb[0].mxu0
        %v1529 = vadd.f32 %v1438, %v1528
        %v1530 = vpop.f32.mrb[0].mxu0
        %v1531 = vadd.f32 %v1442, %v1530
        %1532 = vmatprep.mubr.f32.mxu0 0.0
        %1533 = vmatmul.mubr.f32.gmra.mrb[0].mxu0 %v1382
        %v1534 = vpop.f32.mrb[0].mxu0
        %v1535 = vadd.f32 %v1438, %v1534
        %v1536 = vpop.f32.mrb[0].mxu0
        %v1537 = vadd.f32 %v1442, %v1536
        %1538 = vmatprep.mubr.f32.mxu0 0.0
        %1539 = vmatmul.mubr.f32.gmra.mrb[0].mxu0 %v1383
        %v1540 = vpop.f32.mrb[0].mxu0
        %v1541 = vadd.f32 %v1438, %v1540
        %v1542 = vpop.f32.mrb[0].mxu0
        %v1543 = vadd.f32 %v1442, %v1542
        %1544 = vmatprep.mubr.f32.mxu0 0.0
        %1545 = vmatmul.mubr.f32.gmra.mrb[0].mxu0 %v1384
        %v1546 = vpop.f32.mrb[0].mxu0
        %v1547 = vadd.f32 %v1438, %v1546
        %v1548 = vpop.f32.mrb[0].mxu0
        %v1549 = vadd.f32 %v1442, %v1548
        %1550 = vdwg.mxu0
        %1551 = vmatprep.subr.mxu0 0.0
        %1552 = vmatpush1.msra.mxu0 %v1387
        %1553 = vmatprep.subr.mxu0 0.0
        %1554 = vmatpush1.msra.mxu0 %v1390
        %1555 = vmatprep.subr.mxu0 0.0
        %1556 = vmatpush1.msra.mxu0 %v1393
        %1557 = vmatprep.subr.mxu0 0.0
        %1558 = vmatpush1.msra.mxu0 %v1396
        %1559 = vmatprep.subr.mxu0 0.0
        %1560 = vmatpush1.msra.mxu0 %v1399
        %1561 = vmatprep.subr.mxu0 0.0
        %1562 = vmatpush1.msra.mxu0 %v1402
        %1563 = vmatprep.subr.mxu0 0.0
        %1564 = vmatpush1.msra.mxu0 %v1405
        %1565 = vmatprep.subr.mxu0 0.0
        %1566 = vmatpush1.msra.mxu0 %v1408
        %1567 = vmatprep.subr.mxu0 0.0
        %1568 = vmatpush1.msra.mxu0 %v1411
        %1569 = vmatprep.subr.mxu0 0.0
        %1570 = vmatpush1.msra.mxu0 %v1414
        %1571 = vmatprep.subr.mxu0 0.0
        %1572 = vmatpush1.msra.mxu0 %v1417
        %1573 = vmatprep.subr.mxu0 0.0
        %1574 = vmatpush1.msra.mxu0 %v1420
        %1575 = vmatprep.subr.mxu0 0.0
        %1576 = vmatpush1.msra.mxu0 %v1423
        %1577 = vmatprep.subr.mxu0 0.0
        %1578 = vmatpush1.msra.mxu0 %v1426
        %1579 = vmatprep.subr.mxu0 0.0
        %1580 = vmatpush1.msra.mxu0 %v1429
        %1581 = vmatprep.subr.mxu0 0.0
        %1582 = vmatpush1.msra.mxu0 %v1432
        %1583 = vmatprep.subr.mxu0 0.0
        %1584 = vmatpush1.msra.mxu0 0.0
        %1585 = vmatprep.subr.mxu0 0.0
        %1586 = vmatpush1.msra.mxu0 0.0
        %1587 = vmatprep.subr.mxu0 0.0
        %1588 = vmatpush1.msra.mxu0 0.0
        %1589 = vmatprep.subr.mxu0 0.0
        %1590 = vmatpush1.msra.mxu0 0.0
        %1591 = vmatprep.subr.mxu0 0.0
        %1592 = vmatpush1.msra.mxu0 0.0
        %1593 = vmatprep.subr.mxu0 0.0
        %1594 = vmatpush1.msra.mxu0 0.0
        %1595 = vmatprep.subr.mxu0 0.0
        %1596 = vmatpush1.msra.mxu0 0.0
        %1597 = vmatprep.subr.mxu0 0.0
        %1598 = vmatpush1.msra.mxu0 0.0
        %1599 = vmatprep.subr.mxu0 0.0
        %1600 = vmatpush1.msra.mxu0 0.0
        %1601 = vmatprep.subr.mxu0 0.0
        %1602 = vmatpush1.msra.mxu0 0.0
        %1603 = vmatprep.subr.mxu0 0.0
        %1604 = vmatpush1.msra.mxu0 0.0
        %1605 = vmatprep.subr.mxu0 0.0
        %1606 = vmatpush1.msra.mxu0 0.0
        %1607 = vmatprep.subr.mxu0 0.0
        %1608 = vmatpush1.msra.mxu0 0.0
        %1609 = vmatprep.subr.mxu0 0.0
        %1610 = vmatpush1.msra.mxu0 0.0
        %1611 = vmatprep.subr.mxu0 0.0
        %1612 = vmatpush1.msra.mxu0 0.0
        %1613 = vmatprep.subr.mxu0 0.0
        %1614 = vmatpush1.msra.mxu0 0.0
        %1615 = vmatprep.mubr.f32.mxu0 0.0
        %1616 = vmatmul.mubr.f32.gmra.mrb[0].mxu0 %v1379
        %v1617 = vpop.f32.mrb[0].mxu0
        %v1618 = vadd.f32 %v1446, %v1617
        %v1619 = vpop.f32.mrb[0].mxu0
        %1620 = vmatprep.mubr.f32.mxu0 0.0
        %1621 = vmatmul.mubr.f32.gmra.mrb[0].mxu0 %v1380
        %v1622 = vpop.f32.mrb[0].mxu0
        %v1623 = vadd.f32 %v1446, %v1622
        %v1624 = vpop.f32.mrb[0].mxu0
        %1625 = vmatprep.mubr.f32.mxu0 0.0
        %1626 = vmatmul.mubr.f32.gmra.mrb[0].mxu0 %v1381
        %v1627 = vpop.f32.mrb[0].mxu0
        %v1628 = vadd.f32 %v1446, %v1627
        %v1629 = vpop.f32.mrb[0].mxu0
        %1630 = vmatprep.mubr.f32.mxu0 0.0
        %1631 = vmatmul.mubr.f32.gmra.mrb[0].mxu0 %v1382
        %v1632 = vpop.f32.mrb[0].mxu0
        %v1633 = vadd.f32 %v1446, %v1632
        %v1634 = vpop.f32.mrb[0].mxu0
        %1635 = vmatprep.mubr.f32.mxu0 0.0
        %1636 = vmatmul.mubr.f32.gmra.mrb[0].mxu0 %v1383
        %v1637 = vpop.f32.mrb[0].mxu0
        %v1638 = vadd.f32 %v1446, %v1637
        %v1639 = vpop.f32.mrb[0].mxu0
        %1640 = vmatprep.mubr.f32.mxu0 0.0
        %1641 = vmatmul.mubr.f32.gmra.mrb[0].mxu0 %v1384
        %v1642 = vpop.f32.mrb[0].mxu0
        %v1643 = vadd.f32 %v1446, %v1642
        %v1644 = vpop.f32.mrb[0].mxu0
        %1645 = vdwg.mxu0
        %v1646 = vmul.f32 %v1517, %v1519
        %v1647 = vmul.f32 %v1523, %v1525
        %v1648 = vmul.f32 %v1529, %v1531
        %v1649 = vmul.f32 %v1517, %v1537
        %v1650 = vmul.f32 %v1523, %v1543
        %v1651 = vmul.f32 %v1529, %v1549
        %v1652 = vmul.f32 %v1535, %v1519
        %v1653 = vmul.f32 %v1541, %v1525
        %v1654 = vmul.f32 %v1547, %v1531
        %v1655 = vmul.f32 %v1535, %v1537
        %v1656 = vmul.f32 %v1541, %v1543
        %v1657 = vmul.f32 %v1547, %v1549
        %v1658 = vld [vmem:[%s3] sm:$0xff]
        %v1659 = vld [vmem:[%s3 + $0x8] sm:$0xff]
        %v1660 = vld [vmem:[%s3 + $0x10] sm:$0xff]
        %v1661 = vld [vmem:[%s3 + $0x18] sm:$0xff]
        %v1662 = vld [vmem:[%s3 + $0x20] sm:$0xff]
        %v1663 = vld [vmem:[%s3 + $0x28] sm:$0xff]
        %v1664 = vld [vmem:[%s3 + $0x30] sm:$0xff]
        %v1665 = vld [vmem:[%s3 + $0x38] sm:$0xff]
        %v1666 = vld [vmem:[%s3 + $0x40] sm:$0xff]
        %v1667 = vld [vmem:[%s3 + $0x48] sm:$0xff]
        %v1668 = vld [vmem:[%s3 + $0x50] sm:$0xff]
        %v1669 = vld [vmem:[%s3 + $0x58] sm:$0xff]
        %v1670 = vld [vmem:[%s3 + $0x60] sm:$0xff]
        %v1671 = vld [vmem:[%s3 + $0x68] sm:$0xff]
        %v1672 = vld [vmem:[%s3 + $0x70] sm:$0xff]
        %v1673 = vld [vmem:[%s3 + $0x78] sm:$0xff]
        %1674 = vmatprep.subr.mxu0 0.0
        %1675 = vmatpush1.msra.mxu0 %v1658
        %1676 = vmatprep.subr.mxu0 0.0
        %1677 = vmatpush1.msra.mxu0 %v1659
        %1678 = vmatprep.subr.mxu0 0.0
        %1679 = vmatpush1.msra.mxu0 %v1660
        %1680 = vmatprep.subr.mxu0 0.0
        %1681 = vmatpush1.msra.mxu0 %v1661
        %1682 = vmatprep.subr.mxu0 0.0
        %1683 = vmatpush1.msra.mxu0 %v1662
        %1684 = vmatprep.subr.mxu0 0.0
        %1685 = vmatpush1.msra.mxu0 %v1663
        %1686 = vmatprep.subr.mxu0 0.0
        %1687 = vmatpush1.msra.mxu0 %v1664
        %1688 = vmatprep.subr.mxu0 0.0
        %1689 = vmatpush1.msra.mxu0 %v1665
        %1690 = vmatprep.subr.mxu0 0.0
        %1691 = vmatpush1.msra.mxu0 %v1666
        %1692 = vmatprep.subr.mxu0 0.0
        %1693 = vmatpush1.msra.mxu0 %v1667
        %1694 = vmatprep.subr.mxu0 0.0
        %1695 = vmatpush1.msra.mxu0 %v1668
        %1696 = vmatprep.subr.mxu0 0.0
        %1697 = vmatpush1.msra.mxu0 %v1669
        %1698 = vmatprep.subr.mxu0 0.0
        %1699 = vmatpush1.msra.mxu0 %v1670
        %1700 = vmatprep.subr.mxu0 0.0
        %1701 = vmatpush1.msra.mxu0 %v1671
        %1702 = vmatprep.subr.mxu0 0.0
        %1703 = vmatpush1.msra.mxu0 %v1672
        %1704 = vmatprep.subr.mxu0 0.0
        %1705 = vmatpush1.msra.mxu0 %v1673
        %1706 = vmatprep.subr.mxu0 0.0
        %1707 = vmatpush1.msra.mxu0 0.0
        %1708 = vmatprep.subr.mxu0 0.0
        %1709 = vmatpush1.msra.mxu0 0.0
        %1710 = vmatprep.subr.mxu0 0.0
        %1711 = vmatpush1.msra.mxu0 0.0
        %1712 = vmatprep.subr.mxu0 0.0
        %1713 = vmatpush1.msra.mxu0 0.0
        %1714 = vmatprep.subr.mxu0 0.0
        %1715 = vmatpush1.msra.mxu0 0.0
        %1716 = vmatprep.subr.mxu0 0.0
        %1717 = vmatpush1.msra.mxu0 0.0
        %1718 = vmatprep.subr.mxu0 0.0
        %1719 = vmatpush1.msra.mxu0 0.0
        %1720 = vmatprep.subr.mxu0 0.0
        %1721 = vmatpush1.msra.mxu0 0.0
        %1722 = vmatprep.subr.mxu0 0.0
        %1723 = vmatpush1.msra.mxu0 0.0
        %1724 = vmatprep.subr.mxu0 0.0
        %1725 = vmatpush1.msra.mxu0 0.0
        %1726 = vmatprep.subr.mxu0 0.0
        %1727 = vmatpush1.msra.mxu0 0.0
        %1728 = vmatprep.subr.mxu0 0.0
        %1729 = vmatpush1.msra.mxu0 0.0
        %1730 = vmatprep.subr.mxu0 0.0
        %1731 = vmatpush1.msra.mxu0 0.0
        %1732 = vmatprep.subr.mxu0 0.0
        %1733 = vmatpush1.msra.mxu0 0.0
        %1734 = vmatprep.subr.mxu0 0.0
        %1735 = vmatpush1.msra.mxu0 0.0
        %1736 = vmatprep.subr.mxu0 0.0
        %1737 = vmatpush1.msra.mxu0 0.0
        %1738 = vmatprep.mubr.f32.mxu0 0.0
        %1739 = vmatmul.mubr.f32.gmra.mrb[0].mxu0 %v1646
        %v1740 = vpop.f32.mrb[0].mxu0
        %v1741 = vadd.f32 0.0, %v1740
        %v1742 = vpop.f32.mrb[0].mxu0
        %1743 = vmatprep.mubr.f32.mxu0 0.0
        %1744 = vmatmul.mubr.f32.gmra.mrb[0].mxu0 %v1647
        %v1745 = vpop.f32.mrb[0].mxu0
        %v1746 = vadd.f32 0.0, %v1745
        %v1747 = vpop.f32.mrb[0].mxu0
        %1748 = vmatprep.mubr.f32.mxu0 0.0
        %1749 = vmatmul.mubr.f32.gmra.mrb[0].mxu0 %v1648
        %v1750 = vpop.f32.mrb[0].mxu0
        %v1751 = vadd.f32 0.0, %v1750
        %v1752 = vpop.f32.mrb[0].mxu0
        %1753 = vmatprep.mubr.f32.mxu0 0.0
        %1754 = vmatmul.mubr.f32.gmra.mrb[0].mxu0 %v1649
        %v1755 = vpop.f32.mrb[0].mxu0
        %v1756 = vadd.f32 0.0, %v1755
        %v1757 = vpop.f32.mrb[0].mxu0
        %1758 = vmatprep.mubr.f32.mxu0 0.0
        %1759 = vmatmul.mubr.f32.gmra.mrb[0].mxu0 %v1650
        %v1760 = vpop.f32.mrb[0].mxu0
        %v1761 = vadd.f32 0.0, %v1760
        %v1762 = vpop.f32.mrb[0].mxu0
        %1763 = vmatprep.mubr.f32.mxu0 0.0
        %1764 = vmatmul.mubr.f32.gmra.mrb[0].mxu0 %v1651
        %v1765 = vpop.f32.mrb[0].mxu0
        %v1766 = vadd.f32 0.0, %v1765
        %v1767 = vpop.f32.mrb[0].mxu0
        %1768 = vmatprep.mubr.f32.mxu0 0.0
        %1769 = vmatmul.mubr.f32.gmra.mrb[0].mxu0 %v1652
        %v1770 = vpop.f32.mrb[0].mxu0
        %v1771 = vadd.f32 0.0, %v1770
        %v1772 = vpop.f32.mrb[0].mxu0
        %1773 = vmatprep.mubr.f32.mxu0 0.0
        %1774 = vmatmul.mubr.f32.gmra.mrb[0].mxu0 %v1653
        %v1775 = vpop.f32.mrb[0].mxu0
        %v1776 = vadd.f32 0.0, %v1775
        %v1777 = vpop.f32.mrb[0].mxu0
        %1778 = vmatprep.mubr.f32.mxu0 0.0
        %1779 = vmatmul.mubr.f32.gmra.mrb[0].mxu0 %v1654
        %v1780 = vpop.f32.mrb[0].mxu0
        %v1781 = vadd.f32 0.0, %v1780
        %v1782 = vpop.f32.mrb[0].mxu0
        %1783 = vmatprep.mubr.f32.mxu0 0.0
        %1784 = vmatmul.mubr.f32.gmra.mrb[0].mxu0 %v1655
        %v1785 = vpop.f32.mrb[0].mxu0
        %v1786 = vadd.f32 0.0, %v1785
        %v1787 = vpop.f32.mrb[0].mxu0
        %1788 = vmatprep.mubr.f32.mxu0 0.0
        %1789 = vmatmul.mubr.f32.gmra.mrb[0].mxu0 %v1656
        %v1790 = vpop.f32.mrb[0].mxu0
        %v1791 = vadd.f32 0.0, %v1790
        %v1792 = vpop.f32.mrb[0].mxu0
        %1793 = vmatprep.mubr.f32.mxu0 0.0
        %1794 = vmatmul.mubr.f32.gmra.mrb[0].mxu0 %v1657
        %v1795 = vpop.f32.mrb[0].mxu0
        %v1796 = vadd.f32 0.0, %v1795
        %v1797 = vpop.f32.mrb[0].mxu0
        %1798 = vdwg.mxu0
        %v1799 = vmul.f32 %v1741, 0.37796447
        %v1800 = vmul.f32 %v1746, 0.37796447
        %v1801 = vmul.f32 %v1751, 0.37796447
        %v1802 = vmul.f32 %v1756, 0.37796447
        %v1803 = vmul.f32 %v1761, 0.37796447
        %v1804 = vmul.f32 %v1766, 0.37796447
        %v1805 = vmul.f32 %v1771, 0.37796447
        %v1806 = vmul.f32 %v1776, 0.37796447
        %v1807 = vmul.f32 %v1781, 0.37796447
        %v1808 = vmul.f32 %v1786, 0.37796447
        %v1809 = vmul.f32 %v1791, 0.37796447
        %v1810 = vmul.f32 %v1796, 0.37796447
        %vm1811 = vcmask 64512
        %v1812 = vsel %vm1811, %v1799, -inf
        %v1813 = vsel %vm1811, %v1802, -inf
        %v1814 = vmax.f32 %v1812, %v1813
        %v1815 = vsel %vm1811, %v1800, -inf
        %v1816 = vsel %vm1811, %v1803, -inf
        %v1817 = vmax.f32 %v1815, %v1816
        %v1818 = vsel %vm1811, %v1801, -inf
        %v1819 = vsel %vm1811, %v1804, -inf
        %v1820 = vmax.f32 %v1818, %v1819
        %v1821 = vsel %vm1811, %v1805, -inf
        %v1822 = vsel %vm1811, %v1808, -inf
        %v1823 = vmax.f32 %v1821, %v1822
        %v1824 = vsel %vm1811, %v1806, -inf
        %v1825 = vsel %vm1811, %v1809, -inf
        %v1826 = vmax.f32 %v1824, %v1825
        %v1827 = vsel %vm1811, %v1807, -inf
        %v1828 = vsel %vm1811, %v1810, -inf
        %v1829 = vmax.f32 %v1827, %v1828
        %v1830 = vsub.f32 %v1799, %v1814
        %v1831 = vsub.f32 %v1800, %v1817
        %v1832 = vsub.f32 %v1801, %v1820
        %v1833 = vsub.f32 %v1802, %v1814
        %v1834 = vsub.f32 %v1803, %v1817
        %v1835 = vsub.f32 %v1804, %v1820
        %v1836 = vsub.f32 %v1805, %v1823
        %v1837 = vsub.f32 %v1806, %v1826
        %v1838 = vsub.f32 %v1807, %v1829
        %v1839 = vsub.f32 %v1808, %v1823
        %v1840 = vsub.f32 %v1809, %v1826
        %v1841 = vsub.f32 %v1810, %v1829
        %v1842 = vmul.f32 %v1830, 1.442695
        %v1843 = vpow.pop %v1842
        %v1844 = vmul.f32 %v1831, 1.442695
        %v1845 = vpow.pop %v1844
        %v1846 = vmul.f32 %v1832, 1.442695
        %v1847 = vpow.pop %v1846
        %v1848 = vmul.f32 %v1833, 1.442695
        %v1849 = vpow.pop %v1848
        %v1850 = vmul.f32 %v1834, 1.442695
        %v1851 = vpow.pop %v1850
        %v1852 = vmul.f32 %v1835, 1.442695
        %v1853 = vpow.pop %v1852
        %v1854 = vmul.f32 %v1836, 1.442695
        %v1855 = vpow.pop %v1854
        %v1856 = vmul.f32 %v1837, 1.442695
        %v1857 = vpow.pop %v1856
        %v1858 = vmul.f32 %v1838, 1.442695
        %v1859 = vpow.pop %v1858
        %v1860 = vmul.f32 %v1839, 1.442695
        %v1861 = vpow.pop %v1860
        %v1862 = vmul.f32 %v1840, 1.442695
        %v1863 = vpow.pop %v1862
        %v1864 = vmul.f32 %v1841, 1.442695
        %v1865 = vpow.pop %v1864
        %v1866 = vsel %vm1811, %v1843, 0.0
        %v1867 = vsel %vm1811, %v1849, 0.0
        %v1868 = vadd.f32 %v1866, %v1867
        %v1869 = vsel %vm1811, %v1845, 0.0
        %v1870 = vsel %vm1811, %v1851, 0.0
        %v1871 = vadd.f32 %v1869, %v1870
        %v1872 = vsel %vm1811, %v1847, 0.0
        %v1873 = vsel %vm1811, %v1853, 0.0
        %v1874 = vadd.f32 %v1872, %v1873
        %v1875 = vsel %vm1811, %v1855, 0.0
        %v1876 = vsel %vm1811, %v1861, 0.0
        %v1877 = vadd.f32 %v1875, %v1876
        %v1878 = vsel %vm1811, %v1857, 0.0
        %v1879 = vsel %vm1811, %v1863, 0.0
        %v1880 = vadd.f32 %v1878, %v1879
        %v1881 = vsel %vm1811, %v1859, 0.0
        %v1882 = vsel %vm1811, %v1865, 0.0
        %v1883 = vadd.f32 %v1881, %v1882
        %v1884 = vrcp.pop %v1868
        %v1885 = vmul.f32 %v1843, %v1884
        %v1886 = vrcp.pop %v1871
        %v1887 = vmul.f32 %v1845, %v1886
        %v1888 = vrcp.pop %v1874
        %v1889 = vmul.f32 %v1847, %v1888
        %v1890 = vmul.f32 %v1849, %v1884
        %v1891 = vmul.f32 %v1851, %v1886
        %v1892 = vmul.f32 %v1853, %v1888
        %v1893 = vrcp.pop %v1877
        %v1894 = vmul.f32 %v1855, %v1893
        %v1895 = vrcp.pop %v1880
        %v1896 = vmul.f32 %v1857, %v1895
        %v1897 = vrcp.pop %v1883
        %v1898 = vmul.f32 %v1859, %v1897
        %v1899 = vmul.f32 %v1861, %v1893
        %v1900 = vmul.f32 %v1863, %v1895
        %v1901 = vmul.f32 %v1865, %v1897
        %v1902 = vld [vmem:[#allocation8] sm:$0xff]
        %v1904 = vsel %vm1811, %v1885, 0
        %v1907 = vsel %vm1811, %v1887, 0
        %v1910 = vsel %vm1811, %v1889, 0
        %v1913 = vsel %vm1811, %v1890, 0
        %v1916 = vsel %vm1811, %v1891, 0
        %v1919 = vsel %vm1811, %v1892, 0
        %v1922 = vsel %vm1811, %v1894, 0
        %v1925 = vsel %vm1811, %v1896, 0
        %v1928 = vsel %vm1811, %v1898, 0
        %v1931 = vsel %vm1811, %v1899, 0
        %v1934 = vsel %vm1811, %v1900, 0
        %v1937 = vsel %vm1811, %v1901, 0
        %1939 = vmatprep.subr.mxu0 0.0
        %1940 = vmatpush1.msra.mxu0 %v1902
        %1941 = vmatprep.subr.mxu0 0.0
        %1942 = vmatpush1.msra.mxu0 0.0
        %1943 = vmatprep.subr.mxu0 0.0
        %1944 = vmatpush1.msra.mxu0 0.0
        %1945 = vmatprep.subr.mxu0 0.0
        %1946 = vmatpush1.msra.mxu0 0.0
        %1947 = vmatprep.subr.mxu0 0.0
        %1948 = vmatpush1.msra.mxu0 0.0
        %1949 = vmatprep.subr.mxu0 0.0
        %1950 = vmatpush1.msra.mxu0 0.0
        %1951 = vmatprep.subr.mxu0 0.0
        %1952 = vmatpush1.msra.mxu0 0.0
        %1953 = vmatprep.subr.mxu0 0.0
        %1954 = vmatpush1.msra.mxu0 0.0
        %1955 = vmatprep.subr.mxu0 0.0
        %1956 = vmatpush1.msra.mxu0 0.0
        %1957 = vmatprep.subr.mxu0 0.0
        %1958 = vmatpush1.msra.mxu0 0.0
        %1959 = vmatprep.subr.mxu0 0.0
        %1960 = vmatpush1.msra.mxu0 0.0
        %1961 = vmatprep.subr.mxu0 0.0
        %1962 = vmatpush1.msra.mxu0 0.0
        %1963 = vmatprep.subr.mxu0 0.0
        %1964 = vmatpush1.msra.mxu0 0.0
        %1965 = vmatprep.subr.mxu0 0.0
        %1966 = vmatpush1.msra.mxu0 0.0
        %1967 = vmatprep.subr.mxu0 0.0
        %1968 = vmatpush1.msra.mxu0 0.0
        %1969 = vmatprep.subr.mxu0 0.0
        %1970 = vmatpush1.msra.mxu0 0.0
        %1971 = vmatprep.subr.mxu0 0.0
        %1972 = vmatpush1.msra.mxu0 0.0
        %1973 = vmatprep.subr.mxu0 0.0
        %1974 = vmatpush1.msra.mxu0 0.0
        %1975 = vmatprep.subr.mxu0 0.0
        %1976 = vmatpush1.msra.mxu0 0.0
        %1977 = vmatprep.subr.mxu0 0.0
        %1978 = vmatpush1.msra.mxu0 0.0
        %1979 = vmatprep.subr.mxu0 0.0
        %1980 = vmatpush1.msra.mxu0 0.0
        %1981 = vmatprep.subr.mxu0 0.0
        %1982 = vmatpush1.msra.mxu0 0.0
        %1983 = vmatprep.subr.mxu0 0.0
        %1984 = vmatpush1.msra.mxu0 0.0
        %1985 = vmatprep.subr.mxu0 0.0
        %1986 = vmatpush1.msra.mxu0 0.0
        %1987 = vmatprep.subr.mxu0 0.0
        %1988 = vmatpush1.msra.mxu0 0.0
        %1989 = vmatprep.subr.mxu0 0.0
        %1990 = vmatpush1.msra.mxu0 0.0
        %1991 = vmatprep.subr.mxu0 0.0
        %1992 = vmatpush1.msra.mxu0 0.0
        %1993 = vmatprep.subr.mxu0 0.0
        %1994 = vmatpush1.msra.mxu0 0.0
        %1995 = vmatprep.subr.mxu0 0.0
        %1996 = vmatpush1.msra.mxu0 0.0
        %1997 = vmatprep.subr.mxu0 0.0
        %1998 = vmatpush1.msra.mxu0 0.0
        %1999 = vmatprep.subr.mxu0 0.0
        %2000 = vmatpush1.msra.mxu0 0.0
        %2001 = vmatprep.subr.mxu0 0.0
        %2002 = vmatpush1.msra.mxu0 0.0
        %2003 = vmatprep.mubr.f32.mxu0 0.0
        %2004 = vmatmul.mubr.f32.gmra.mrb[0].mxu0 %v1904
        %v2005 = vpop.f32.mrb[0].mxu0
        %v2006 = vadd.f32 0.0, %v2005
        %v2007 = vpop.f32.mrb[0].mxu0
        %2008 = vmatprep.mubr.f32.mxu0 0.0
        %2009 = vmatmul.mubr.f32.gmra.mrb[0].mxu0 %v1907
        %v2010 = vpop.f32.mrb[0].mxu0
        %v2011 = vadd.f32 0.0, %v2010
        %v2012 = vpop.f32.mrb[0].mxu0
        %2013 = vmatprep.mubr.f32.mxu0 0.0
        %2014 = vmatmul.mubr.f32.gmra.mrb[0].mxu0 %v1910
        %v2015 = vpop.f32.mrb[0].mxu0
        %v2016 = vadd.f32 0.0, %v2015
        %v2017 = vpop.f32.mrb[0].mxu0
        %2018 = vmatprep.mubr.f32.mxu0 0.0
        %2019 = vmatmul.mubr.f32.gmra.mrb[0].mxu0 %v1913
        %v2020 = vpop.f32.mrb[0].mxu0
        %v2021 = vadd.f32 0.0, %v2020
        %v2022 = vpop.f32.mrb[0].mxu0
        %2023 = vmatprep.mubr.f32.mxu0 0.0
        %2024 = vmatmul.mubr.f32.gmra.mrb[0].mxu0 %v1916
        %v2025 = vpop.f32.mrb[0].mxu0
        %v2026 = vadd.f32 0.0, %v2025
        %v2027 = vpop.f32.mrb[0].mxu0
        %2028 = vmatprep.mubr.f32.mxu0 0.0
        %2029 = vmatmul.mubr.f32.gmra.mrb[0].mxu0 %v1919
        %v2030 = vpop.f32.mrb[0].mxu0
        %v2031 = vadd.f32 0.0, %v2030
        %v2032 = vpop.f32.mrb[0].mxu0
        %2033 = vmatprep.mubr.f32.mxu0 0.0
        %2034 = vmatmul.mubr.f32.gmra.mrb[0].mxu0 %v1922
        %v2035 = vpop.f32.mrb[0].mxu0
        %v2036 = vadd.f32 0.0, %v2035
        %v2037 = vpop.f32.mrb[0].mxu0
        %2038 = vmatprep.mubr.f32.mxu0 0.0
        %2039 = vmatmul.mubr.f32.gmra.mrb[0].mxu0 %v1925
        %v2040 = vpop.f32.mrb[0].mxu0
        %v2041 = vadd.f32 0.0, %v2040
        %v2042 = vpop.f32.mrb[0].mxu0
        %2043 = vmatprep.mubr.f32.mxu0 0.0
        %2044 = vmatmul.mubr.f32.gmra.mrb[0].mxu0 %v1928
        %v2045 = vpop.f32.mrb[0].mxu0
        %v2046 = vadd.f32 0.0, %v2045
        %v2047 = vpop.f32.mrb[0].mxu0
        %2048 = vmatprep.mubr.f32.mxu0 0.0
        %2049 = vmatmul.mubr.f32.gmra.mrb[0].mxu0 %v1931
        %v2050 = vpop.f32.mrb[0].mxu0
        %v2051 = vadd.f32 0.0, %v2050
        %v2052 = vpop.f32.mrb[0].mxu0
        %2053 = vmatprep.mubr.f32.mxu0 0.0
        %2054 = vmatmul.mubr.f32.gmra.mrb[0].mxu0 %v1934
        %v2055 = vpop.f32.mrb[0].mxu0
        %v2056 = vadd.f32 0.0, %v2055
        %v2057 = vpop.f32.mrb[0].mxu0
        %2058 = vmatprep.mubr.f32.mxu0 0.0
        %2059 = vmatmul.mubr.f32.gmra.mrb[0].mxu0 %v1937
        %v2060 = vpop.f32.mrb[0].mxu0
        %v2061 = vadd.f32 0.0, %v2060
        %v2062 = vpop.f32.mrb[0].mxu0
        %2063 = vdwg.mxu0
        %v2064 = vmul.f32 %v2006, %v1618
        %v2065 = vmul.f32 %v2011, %v1623
        %v2066 = vmul.f32 %v2016, %v1628
        %v2067 = vmul.f32 %v2021, %v1633
        %v2068 = vmul.f32 %v2026, %v1638
        %v2069 = vmul.f32 %v2031, %v1643
        %v2070 = vmul.f32 %v2036, %v1618
        %v2071 = vmul.f32 %v2041, %v1623
        %v2072 = vmul.f32 %v2046, %v1628
        %v2073 = vmul.f32 %v2051, %v1633
        %v2074 = vmul.f32 %v2056, %v1638
        %v2075 = vmul.f32 %v2061, %v1643
        %v2076 = vadd.f32 %v2064, %v2067
        %v2077 = vadd.f32 %v2065, %v2068
        %v2078 = vadd.f32 %v2066, %v2069
        %v2079 = vadd.f32 %v2070, %v2073
        %v2080 = vadd.f32 %v2071, %v2074
        %v2081 = vadd.f32 %v2072, %v2075
        %v2082 = vld [vmem:[%s961] sm:$0xff]
        %v2083 = vld [vmem:[%s961 + $0x8] sm:$0xff]
        %v2084 = vld [vmem:[%s961 + $0x10] sm:$0xff]
        %v2085 = vld [vmem:[%s961 + $0x18] sm:$0xff]
        %v2086 = vld [vmem:[%s961 + $0x20] sm:$0xff]
        %v2087 = vld [vmem:[%s961 + $0x28] sm:$0xff]
        %v2088 = vld [vmem:[%s961 + $0x30] sm:$0xff]
        %v2089 = vld [vmem:[%s961 + $0x38] sm:$0xff]
        %v2090 = vld [vmem:[%s961 + $0x40] sm:$0xff]
        %v2091 = vld [vmem:[%s961 + $0x48] sm:$0xff]
        %v2092 = vld [vmem:[%s961 + $0x50] sm:$0xff]
        %v2093 = vld [vmem:[%s961 + $0x58] sm:$0xff]
        %v2094 = vld [vmem:[%s961 + $0x60] sm:$0xff]
        %v2095 = vld [vmem:[%s961 + $0x68] sm:$0xff]
        %v2096 = vld [vmem:[%s961 + $0x70] sm:$0xff]
        %v2097 = vld [vmem:[%s961 + $0x78] sm:$0xff]
        %v2098 = vld [vmem:[%s969] sm:$0x1]
        %v2100 = vlaneseq
        %v2101 = vshrl.u32 %v2100, 7
        %v2102 = vsub.s32 0, %v2101
        %v2103 = vrot.slane %v2098, %v2102
        %2105 = vmatprep.subr.mxu0 0.0
        %2106 = vmatpush1.msra.mxu0 %v2082
        %2107 = vmatprep.subr.mxu0 0.0
        %2108 = vmatpush1.msra.mxu0 %v2083
        %2109 = vmatprep.subr.mxu0 0.0
        %2110 = vmatpush1.msra.mxu0 %v2084
        %2111 = vmatprep.subr.mxu0 0.0
        %2112 = vmatpush1.msra.mxu0 %v2085
        %2113 = vmatprep.subr.mxu0 0.0
        %2114 = vmatpush1.msra.mxu0 %v2086
        %2115 = vmatprep.subr.mxu0 0.0
        %2116 = vmatpush1.msra.mxu0 %v2087
        %2117 = vmatprep.subr.mxu0 0.0
        %2118 = vmatpush1.msra.mxu0 %v2088
        %2119 = vmatprep.subr.mxu0 0.0
        %2120 = vmatpush1.msra.mxu0 %v2089
        %2121 = vmatprep.subr.mxu0 0.0
        %2122 = vmatpush1.msra.mxu0 %v2090
        %2123 = vmatprep.subr.mxu0 0.0
        %2124 = vmatpush1.msra.mxu0 %v2091
        %2125 = vmatprep.subr.mxu0 0.0
        %2126 = vmatpush1.msra.mxu0 %v2092
        %2127 = vmatprep.subr.mxu0 0.0
        %2128 = vmatpush1.msra.mxu0 %v2093
        %2129 = vmatprep.subr.mxu0 0.0
        %2130 = vmatpush1.msra.mxu0 %v2094
        %2131 = vmatprep.subr.mxu0 0.0
        %2132 = vmatpush1.msra.mxu0 %v2095
        %2133 = vmatprep.subr.mxu0 0.0
        %2134 = vmatpush1.msra.mxu0 %v2096
        %2135 = vmatprep.subr.mxu0 0.0
        %2136 = vmatpush1.msra.mxu0 %v2097
        %2137 = vmatprep.subr.mxu0 0.0
        %2138 = vmatpush1.msra.mxu0 0.0
        %2139 = vmatprep.subr.mxu0 0.0
        %2140 = vmatpush1.msra.mxu0 0.0
        %2141 = vmatprep.subr.mxu0 0.0
        %2142 = vmatpush1.msra.mxu0 0.0
        %2143 = vmatprep.subr.mxu0 0.0
        %2144 = vmatpush1.msra.mxu0 0.0
        %2145 = vmatprep.subr.mxu0 0.0
        %2146 = vmatpush1.msra.mxu0 0.0
        %2147 = vmatprep.subr.mxu0 0.0
        %2148 = vmatpush1.msra.mxu0 0.0
        %2149 = vmatprep.subr.mxu0 0.0
        %2150 = vmatpush1.msra.mxu0 0.0
        %2151 = vmatprep.subr.mxu0 0.0
        %2152 = vmatpush1.msra.mxu0 0.0
        %2153 = vmatprep.subr.mxu0 0.0
        %2154 = vmatpush1.msra.mxu0 0.0
        %2155 = vmatprep.subr.mxu0 0.0
        %2156 = vmatpush1.msra.mxu0 0.0
        %2157 = vmatprep.subr.mxu0 0.0
        %2158 = vmatpush1.msra.mxu0 0.0
        %2159 = vmatprep.subr.mxu0 0.0
        %2160 = vmatpush1.msra.mxu0 0.0
        %2161 = vmatprep.subr.mxu0 0.0
        %2162 = vmatpush1.msra.mxu0 0.0
        %2163 = vmatprep.subr.mxu0 0.0
        %2164 = vmatpush1.msra.mxu0 0.0
        %2165 = vmatprep.subr.mxu0 0.0
        %2166 = vmatpush1.msra.mxu0 0.0
        %2167 = vmatprep.subr.mxu0 0.0
        %2168 = vmatpush1.msra.mxu0 0.0
        %2169 = vmatprep.mubr.f32.mxu0 0.0
        %2170 = vmatmul.mubr.f32.gmra.mrb[0].mxu0 %v2076
        %v2171 = vpop.f32.mrb[0].mxu0
        %v2172 = vadd.f32 %v2103, %v2171
        %v2173 = vpop.f32.mrb[0].mxu0
        %2174 = vmatprep.mubr.f32.mxu0 0.0
        %2175 = vmatmul.mubr.f32.gmra.mrb[0].mxu0 %v2077
        %v2176 = vpop.f32.mrb[0].mxu0
        %v2177 = vadd.f32 %v2103, %v2176
        %v2178 = vpop.f32.mrb[0].mxu0
        %2179 = vmatprep.mubr.f32.mxu0 0.0
        %2180 = vmatmul.mubr.f32.gmra.mrb[0].mxu0 %v2078
        %v2181 = vpop.f32.mrb[0].mxu0
        %v2182 = vadd.f32 %v2103, %v2181
        %v2183 = vpop.f32.mrb[0].mxu0
        %2184 = vmatprep.mubr.f32.mxu0 0.0
        %2185 = vmatmul.mubr.f32.gmra.mrb[0].mxu0 %v2079
        %v2186 = vpop.f32.mrb[0].mxu0
        %v2187 = vadd.f32 %v2103, %v2186
        %v2188 = vpop.f32.mrb[0].mxu0
        %2189 = vmatprep.mubr.f32.mxu0 0.0
        %2190 = vmatmul.mubr.f32.gmra.mrb[0].mxu0 %v2080
        %v2191 = vpop.f32.mrb[0].mxu0
        %v2192 = vadd.f32 %v2103, %v2191
        %v2193 = vpop.f32.mrb[0].mxu0
        %2194 = vmatprep.mubr.f32.mxu0 0.0
        %2195 = vmatmul.mubr.f32.gmra.mrb[0].mxu0 %v2081
        %v2196 = vpop.f32.mrb[0].mxu0
        %v2197 = vadd.f32 %v2103, %v2196
        %v2198 = vpop.f32.mrb[0].mxu0
        %2199 = vdwg.mxu0
        %v2200 = vadd.f32 %v2172, %v1275
        %v2201 = vadd.f32 %v2177, %v1276
        %v2202 = vadd.f32 %v2182, %v1277
        %v2203 = vadd.f32 %v2187, %v1278
        %v2204 = vadd.f32 %v2192, %v1279
        %v2205 = vadd.f32 %v2197, %v1280
        %v2206 = vld [vmem:[%s977] sm:$0x1]
        %v2207 = vld [vmem:[%s985] sm:$0x1]
        %2208 = vadd.xlane.f32.xlu0 %v2200
        %v2209 = vpop.xlane.xlu0 %2208
        %2210 = vadd.xlane.f32.xlu0 %v2201
        %v2211 = vpop.xlane.xlu0 %2210
        %2212 = vadd.xlane.f32.xlu0 %v2202
        %v2213 = vpop.xlane.xlu0 %2212
        %2214 = vadd.xlane.f32.xlu0 %v2203
        %v2215 = vpop.xlane.xlu0 %2214
        %2216 = vadd.xlane.f32.xlu0 %v2204
        %v2217 = vpop.xlane.xlu0 %2216
        %2218 = vadd.xlane.f32.xlu0 %v2205
        %v2219 = vpop.xlane.xlu0 %2218
        %v2220 = vmul.f32 %v2209, 0.020408163
        %v2221 = vmul.f32 %v2211, 0.020408163
        %v2222 = vmul.f32 %v2213, 0.020408163
        %v2223 = vmul.f32 %v2215, 0.020408163
        %v2224 = vmul.f32 %v2217, 0.020408163
        %v2225 = vmul.f32 %v2219, 0.020408163
        %v2226 = vmul.f32 %v2200, %v2200
        %v2227 = vmul.f32 %v2201, %v2201
        %v2228 = vmul.f32 %v2202, %v2202
        %v2229 = vmul.f32 %v2203, %v2203
        %v2230 = vmul.f32 %v2204, %v2204
        %v2231 = vmul.f32 %v2205, %v2205
        %2232 = vadd.xlane.f32.xlu0 %v2226
        %v2233 = vpop.xlane.xlu0 %2232
        %2234 = vadd.xlane.f32.xlu0 %v2227
        %v2235 = vpop.xlane.xlu0 %2234
        %2236 = vadd.xlane.f32.xlu0 %v2228
        %v2237 = vpop.xlane.xlu0 %2236
        %2238 = vadd.xlane.f32.xlu0 %v2229
        %v2239 = vpop.xlane.xlu0 %2238
        %2240 = vadd.xlane.f32.xlu0 %v2230
        %v2241 = vpop.xlane.xlu0 %2240
        %2242 = vadd.xlane.f32.xlu0 %v2231
        %v2243 = vpop.xlane.xlu0 %2242
        %v2244 = vmul.f32 %v2233, 0.020408163
        %v2245 = vmul.f32 %v2235, 0.020408163
        %v2246 = vmul.f32 %v2237, 0.020408163
        %v2247 = vmul.f32 %v2239, 0.020408163
        %v2248 = vmul.f32 %v2241, 0.020408163
        %v2249 = vmul.f32 %v2243, 0.020408163
        %v2250 = vmul.f32 %v2220, %v2220
        %v2251 = vmul.f32 %v2221, %v2221
        %v2252 = vmul.f32 %v2222, %v2222
        %v2253 = vmul.f32 %v2223, %v2223
        %v2254 = vmul.f32 %v2224, %v2224
        %v2255 = vmul.f32 %v2225, %v2225
        %v2256 = vsub.f32 %v2244, %v2250
        %v2257 = vsub.f32 %v2245, %v2251
        %v2258 = vsub.f32 %v2246, %v2252
        %v2259 = vsub.f32 %v2247, %v2253
        %v2260 = vsub.f32 %v2248, %v2254
        %v2261 = vsub.f32 %v2249, %v2255
        %v2262 = vsub.f32 %v2200, %v2220
        %v2263 = vsub.f32 %v2201, %v2221
        %v2264 = vsub.f32 %v2202, %v2222
        %v2265 = vsub.f32 %v2203, %v2223
        %v2266 = vsub.f32 %v2204, %v2224
        %v2267 = vsub.f32 %v2205, %v2225
        %v2268 = vadd.f32 %v2256, 1e-05
        %v2269 = vadd.f32 %v2257, 1e-05
        %v2270 = vadd.f32 %v2258, 1e-05
        %v2271 = vadd.f32 %v2259, 1e-05
        %v2272 = vadd.f32 %v2260, 1e-05
        %v2273 = vadd.f32 %v2261, 1e-05
        %v2274 = vrsqrt.pop %v2268
        %v2275 = vrsqrt.pop %v2269
        %v2276 = vrsqrt.pop %v2270
        %v2277 = vrsqrt.pop %v2271
        %v2278 = vrsqrt.pop %v2272
        %v2279 = vrsqrt.pop %v2273
        %v2280 = vmul.f32 %v2262, %v2274
        %v2281 = vmul.f32 %v2263, %v2275
        %v2282 = vmul.f32 %v2264, %v2276
        %v2283 = vmul.f32 %v2265, %v2277
        %v2284 = vmul.f32 %v2266, %v2278
        %v2285 = vmul.f32 %v2267, %v2279
        %v2287 = vlaneseq
        %v2288 = vshrl.u32 %v2287, 7
        %v2289 = vsub.s32 0, %v2288
        %v2290 = vrot.slane %v2206, %v2289
        %v2292 = vmul.f32 %v2280, %v2290
        %v2293 = vmul.f32 %v2281, %v2290
        %v2294 = vmul.f32 %v2282, %v2290
        %v2295 = vmul.f32 %v2283, %v2290
        %v2296 = vmul.f32 %v2284, %v2290
        %v2297 = vmul.f32 %v2285, %v2290
        %v2299 = vlaneseq
        %v2300 = vshrl.u32 %v2299, 7
        %v2301 = vsub.s32 0, %v2300
        %v2302 = vrot.slane %v2207, %v2301
        %v2304 = vadd.f32 %v2292, %v2302
        %v2305 = vadd.f32 %v2293, %v2302
        %v2306 = vadd.f32 %v2294, %v2302
        %v2307 = vadd.f32 %v2295, %v2302
        %v2308 = vadd.f32 %v2296, %v2302
        %v2309 = vadd.f32 %v2297, %v2302
        %v2310 = vld [vmem:[%s994] sm:$0xff]
        %v2311 = vld [vmem:[%s994 + $0x8] sm:$0xff]
        %v2312 = vld [vmem:[%s994 + $0x10] sm:$0xff]
        %v2313 = vld [vmem:[%s994 + $0x18] sm:$0xff]
        %v2314 = vld [vmem:[%s994 + $0x20] sm:$0xff]
        %v2315 = vld [vmem:[%s994 + $0x28] sm:$0xff]
        %v2316 = vld [vmem:[%s994 + $0x30] sm:$0xff]
        %v2317 = vld [vmem:[%s994 + $0x38] sm:$0xff]
        %v2318 = vld [vmem:[%s994 + $0x40] sm:$0xff]
        %v2319 = vld [vmem:[%s994 + $0x48] sm:$0xff]
        %v2320 = vld [vmem:[%s994 + $0x50] sm:$0xff]
        %v2321 = vld [vmem:[%s994 + $0x58] sm:$0xff]
        %v2322 = vld [vmem:[%s994 + $0x60] sm:$0xff]
        %v2323 = vld [vmem:[%s994 + $0x68] sm:$0xff]
        %v2324 = vld [vmem:[%s994 + $0x70] sm:$0xff]
        %v2325 = vld [vmem:[%s994 + $0x78] sm:$0xff]
        %v2326 = vld [vmem:[%s994 + $0x80] sm:$0xff]
        %v2327 = vld [vmem:[%s994 + $0x88] sm:$0xff]
        %v2328 = vld [vmem:[%s994 + $0x90] sm:$0xff]
        %v2329 = vld [vmem:[%s994 + $0x98] sm:$0xff]
        %v2330 = vld [vmem:[%s994 + $0xa0] sm:$0xff]
        %v2331 = vld [vmem:[%s994 + $0xa8] sm:$0xff]
        %v2332 = vld [vmem:[%s994 + $0xb0] sm:$0xff]
        %v2333 = vld [vmem:[%s994 + $0xb8] sm:$0xff]
        %v2334 = vld [vmem:[%s994 + $0xc0] sm:$0xff]
        %v2335 = vld [vmem:[%s994 + $0xc8] sm:$0xff]
        %v2336 = vld [vmem:[%s994 + $0xd0] sm:$0xff]
        %v2337 = vld [vmem:[%s994 + $0xd8] sm:$0xff]
        %v2338 = vld [vmem:[%s994 + $0xe0] sm:$0xff]
        %v2339 = vld [vmem:[%s994 + $0xe8] sm:$0xff]
        %v2340 = vld [vmem:[%s994 + $0xf0] sm:$0xff]
        %v2341 = vld [vmem:[%s994 + $0xf8] sm:$0xff]
        %v2342 = vld [vmem:[%s1003] sm:$0x3]
        %v2344 = vlaneseq
        %v2345 = vshrl.u32 %v2344, 7
        %v2346 = vsub.s32 0, %v2345
        %v2347 = vrot.slane %v2342, %v2346
        %v2348 = vlaneseq
        %v2349 = vshrl.u32 %v2348, 7
        %v2350 = vsub.s32 1, %v2349
        %v2351 = vrot.slane %v2342, %v2350
        %2354 = vmatprep.subr.mxu0 %v2311
        %2355 = vmatpush1.msra.mxu0 %v2310
        %2356 = vmatprep.subr.mxu0 %v2313
        %2357 = vmatpush1.msra.mxu0 %v2312
        %2358 = vmatprep.subr.mxu0 %v2315
        %2359 = vmatpush1.msra.mxu0 %v2314
        %2360 = vmatprep.subr.mxu0 %v2317
        %2361 = vmatpush1.msra.mxu0 %v2316
        %2362 = vmatprep.subr.mxu0 %v2319
        %2363 = vmatpush1.msra.mxu0 %v2318
        %2364 = vmatprep.subr.mxu0 %v2321
        %2365 = vmatpush1.msra.mxu0 %v2320
        %2366 = vmatprep.subr.mxu0 %v2323
        %2367 = vmatpush1.msra.mxu0 %v2322
        %2368 = vmatprep.subr.mxu0 %v2325
        %2369 = vmatpush1.msra.mxu0 %v2324
        %2370 = vmatprep.subr.mxu0 %v2327
        %2371 = vmatpush1.msra.mxu0 %v2326
        %2372 = vmatprep.subr.mxu0 %v2329
        %2373 = vmatpush1.msra.mxu0 %v2328
        %2374 = vmatprep.subr.mxu0 %v2331
        %2375 = vmatpush1.msra.mxu0 %v2330
        %2376 = vmatprep.subr.mxu0 %v2333
        %2377 = vmatpush1.msra.mxu0 %v2332
        %2378 = vmatprep.subr.mxu0 %v2335
        %2379 = vmatpush1.msra.mxu0 %v2334
        %2380 = vmatprep.subr.mxu0 %v2337
        %2381 = vmatpush1.msra.mxu0 %v2336
        %2382 = vmatprep.subr.mxu0 %v2339
        %2383 = vmatpush1.msra.mxu0 %v2338
        %2384 = vmatprep.subr.mxu0 %v2341
        %2385 = vmatpush1.msra.mxu0 %v2340
        %2386 = vmatprep.subr.mxu0 0.0
        %2387 = vmatpush1.msra.mxu0 0.0
        %2388 = vmatprep.subr.mxu0 0.0
        %2389 = vmatpush1.msra.mxu0 0.0
        %2390 = vmatprep.subr.mxu0 0.0
        %2391 = vmatpush1.msra.mxu0 0.0
        %2392 = vmatprep.subr.mxu0 0.0
        %2393 = vmatpush1.msra.mxu0 0.0
        %2394 = vmatprep.subr.mxu0 0.0
        %2395 = vmatpush1.msra.mxu0 0.0
        %2396 = vmatprep.subr.mxu0 0.0
        %2397 = vmatpush1.msra.mxu0 0.0
        %2398 = vmatprep.subr.mxu0 0.0
        %2399 = vmatpush1.msra.mxu0 0.0
        %2400 = vmatprep.subr.mxu0 0.0
        %2401 = vmatpush1.msra.mxu0 0.0
        %2402 = vmatprep.subr.mxu0 0.0
        %2403 = vmatpush1.msra.mxu0 0.0
        %2404 = vmatprep.subr.mxu0 0.0
        %2405 = vmatpush1.msra.mxu0 0.0
        %2406 = vmatprep.subr.mxu0 0.0
        %2407 = vmatpush1.msra.mxu0 0.0
        %2408 = vmatprep.subr.mxu0 0.0
        %2409 = vmatpush1.msra.mxu0 0.0
        %2410 = vmatprep.subr.mxu0 0.0
        %2411 = vmatpush1.msra.mxu0 0.0
        %2412 = vmatprep.subr.mxu0 0.0
        %2413 = vmatpush1.msra.mxu0 0.0
        %2414 = vmatprep.subr.mxu0 0.0
        %2415 = vmatpush1.msra.mxu0 0.0
        %2416 = vmatprep.subr.mxu0 0.0
        %2417 = vmatpush1.msra.mxu0 0.0
        %2418 = vmatprep.mubr.f32.mxu0 0.0
        %2419 = vmatmul.mubr.f32.gmra.mrb[0].mxu0 %v2304
        %v2420 = vpop.f32.mrb[0].mxu0
        %v2421 = vadd.f32 %v2347, %v2420
        %v2422 = vpop.f32.mrb[0].mxu0
        %v2423 = vadd.f32 %v2351, %v2422
        %2424 = vmatprep.mubr.f32.mxu0 0.0
        %2425 = vmatmul.mubr.f32.gmra.mrb[0].mxu0 %v2305
        %v2426 = vpop.f32.mrb[0].mxu0
        %v2427 = vadd.f32 %v2347, %v2426
        %v2428 = vpop.f32.mrb[0].mxu0
        %v2429 = vadd.f32 %v2351, %v2428
        %2430 = vmatprep.mubr.f32.mxu0 0.0
        %2431 = vmatmul.mubr.f32.gmra.mrb[0].mxu0 %v2306
        %v2432 = vpop.f32.mrb[0].mxu0
        %v2433 = vadd.f32 %v2347, %v2432
        %v2434 = vpop.f32.mrb[0].mxu0
        %v2435 = vadd.f32 %v2351, %v2434
        %2436 = vmatprep.mubr.f32.mxu0 0.0
        %2437 = vmatmul.mubr.f32.gmra.mrb[0].mxu0 %v2307
        %v2438 = vpop.f32.mrb[0].mxu0
        %v2439 = vadd.f32 %v2347, %v2438
        %v2440 = vpop.f32.mrb[0].mxu0
        %v2441 = vadd.f32 %v2351, %v2440
        %2442 = vmatprep.mubr.f32.mxu0 0.0
        %2443 = vmatmul.mubr.f32.gmra.mrb[0].mxu0 %v2308
        %v2444 = vpop.f32.mrb[0].mxu0
        %v2445 = vadd.f32 %v2347, %v2444
        %v2446 = vpop.f32.mrb[0].mxu0
        %v2447 = vadd.f32 %v2351, %v2446
        %2448 = vmatprep.mubr.f32.mxu0 0.0
        %2449 = vmatmul.mubr.f32.gmra.mrb[0].mxu0 %v2309
        %v2450 = vpop.f32.mrb[0].mxu0
        %v2451 = vadd.f32 %v2347, %v2450
        %v2452 = vpop.f32.mrb[0].mxu0
        %v2453 = vadd.f32 %v2351, %v2452
        %2454 = vdwg.mxu0
        %v2455 = vmul.f32 %v2421, 0.5
        %v2456 = vmul.f32 %v2423, 0.5
        %v2457 = vmul.f32 %v2427, 0.5
        %v2458 = vmul.f32 %v2429, 0.5
        %v2459 = vmul.f32 %v2433, 0.5
        %v2460 = vmul.f32 %v2435, 0.5
        %v2461 = vmul.f32 %v2439, 0.5
        %v2462 = vmul.f32 %v2441, 0.5
        %v2463 = vmul.f32 %v2445, 0.5
        %v2464 = vmul.f32 %v2447, 0.5
        %v2465 = vmul.f32 %v2451, 0.5
        %v2466 = vmul.f32 %v2453, 0.5
        %v2467 = vmul.f32 %v2421, 0.70710677
        %v2468 = vmul.f32 %v2423, 0.70710677
        %v2469 = vmul.f32 %v2427, 0.70710677
        %v2470 = vmul.f32 %v2429, 0.70710677
        %v2471 = vmul.f32 %v2433, 0.70710677
        %v2472 = vmul.f32 %v2435, 0.70710677
        %v2473 = vmul.f32 %v2439, 0.70710677
        %v2474 = vmul.f32 %v2441, 0.70710677
        %v2475 = vmul.f32 %v2445, 0.70710677
        %v2476 = vmul.f32 %v2447, 0.70710677
        %v2477 = vmul.f32 %v2451, 0.70710677
        %v2478 = vmul.f32 %v2453, 0.70710677
        %v2479 = vand.u32 2147483647, %v2467
        %v2480 = vand.u32 2147483647, %v2468
        %v2481 = vand.u32 2147483647, %v2469
        %v2482 = vand.u32 2147483647, %v2470
        %v2483 = vand.u32 2147483647, %v2471
        %v2484 = vand.u32 2147483647, %v2472
        %v2485 = vand.u32 2147483647, %v2473
        %v2486 = vand.u32 2147483647, %v2474
        %v2487 = vand.u32 2147483647, %v2475
        %v2488 = vand.u32 2147483647, %v2476
        %v2489 = vand.u32 2147483647, %v2477
        %v2490 = vand.u32 2147483647, %v2478
        %v2491 = vmul.f32 %v2479, 0.3275911
        %v2492 = vmul.f32 %v2480, 0.3275911
        %v2493 = vmul.f32 %v2481, 0.3275911
        %v2494 = vmul.f32 %v2482, 0.3275911
        %v2495 = vmul.f32 %v2483, 0.3275911
        %v2496 = vmul.f32 %v2484, 0.3275911
        %v2497 = vmul.f32 %v2485, 0.3275911
        %v2498 = vmul.f32 %v2486, 0.3275911
        %v2499 = vmul.f32 %v2487, 0.3275911
        %v2500 = vmul.f32 %v2488, 0.3275911
        %v2501 = vmul.f32 %v2489, 0.3275911
        %v2502 = vmul.f32 %v2490, 0.3275911
        %v2503 = vadd.f32 %v2491, 1.0
        %v2504 = vadd.f32 %v2492, 1.0
        %v2505 = vadd.f32 %v2493, 1.0
        %v2506 = vadd.f32 %v2494, 1.0
        %v2507 = vadd.f32 %v2495, 1.0
        %v2508 = vadd.f32 %v2496, 1.0
        %v2509 = vadd.f32 %v2497, 1.0
        %v2510 = vadd.f32 %v2498, 1.0
        %v2511 = vadd.f32 %v2499, 1.0
        %v2512 = vadd.f32 %v2500, 1.0
        %v2513 = vadd.f32 %v2501, 1.0
        %v2514 = vadd.f32 %v2502, 1.0
        %v2515 = vrcp.pop %v2503
        %v2516 = vmul.f32 1.0, %v2515
        %v2517 = vrcp.pop %v2504
        %v2518 = vmul.f32 1.0, %v2517
        %v2519 = vrcp.pop %v2505
        %v2520 = vmul.f32 1.0, %v2519
        %v2521 = vrcp.pop %v2506
        %v2522 = vmul.f32 1.0, %v2521
        %v2523 = vrcp.pop %v2507
        %v2524 = vmul.f32 1.0, %v2523
        %v2525 = vrcp.pop %v2508
        %v2526 = vmul.f32 1.0, %v2525
        %v2527 = vrcp.pop %v2509
        %v2528 = vmul.f32 1.0, %v2527
        %v2529 = vrcp.pop %v2510
        %v2530 = vmul.f32 1.0, %v2529
        %v2531 = vrcp.pop %v2511
        %v2532 = vmul.f32 1.0, %v2531
        %v2533 = vrcp.pop %v2512
        %v2534 = vmul.f32 1.0, %v2533
        %v2535 = vrcp.pop %v2513
        %v2536 = vmul.f32 1.0, %v2535
        %v2537 = vrcp.pop %v2514
        %v2538 = vmul.f32 1.0, %v2537
        %v2539 = vmul.f32 %v2516, 1.0614054
        %v2540 = vmul.f32 %v2518, 1.0614054
        %v2541 = vmul.f32 %v2520, 1.0614054
        %v2542 = vmul.f32 %v2522, 1.0614054
        %v2543 = vmul.f32 %v2524, 1.0614054
        %v2544 = vmul.f32 %v2526, 1.0614054
        %v2545 = vmul.f32 %v2528, 1.0614054
        %v2546 = vmul.f32 %v2530, 1.0614054
        %v2547 = vmul.f32 %v2532, 1.0614054
        %v2548 = vmul.f32 %v2534, 1.0614054
        %v2549 = vmul.f32 %v2536, 1.0614054
        %v2550 = vmul.f32 %v2538, 1.0614054
        %v2551 = vadd.f32 %v2539, -1.4531521
        %v2552 = vadd.f32 %v2540, -1.4531521
        %v2553 = vadd.f32 %v2541, -1.4531521
        %v2554 = vadd.f32 %v2542, -1.4531521
        %v2555 = vadd.f32 %v2543, -1.4531521
        %v2556 = vadd.f32 %v2544, -1.4531521
        %v2557 = vadd.f32 %v2545, -1.4531521
        %v2558 = vadd.f32 %v2546, -1.4531521
        %v2559 = vadd.f32 %v2547, -1.4531521
        %v2560 = vadd.f32 %v2548, -1.4531521
        %v2561 = vadd.f32 %v2549, -1.4531521
        %v2562 = vadd.f32 %v2550, -1.4531521
        %v2563 = vmul.f32 %v2551, %v2516
        %v2564 = vmul.f32 %v2552, %v2518
        %v2565 = vmul.f32 %v2553, %v2520
        %v2566 = vmul.f32 %v2554, %v2522
        %v2567 = vmul.f32 %v2555, %v2524
        %v2568 = vmul.f32 %v2556, %v2526
        %v2569 = vmul.f32 %v2557, %v2528
        %v2570 = vmul.f32 %v2558, %v2530
        %v2571 = vmul.f32 %v2559, %v2532
        %v2572 = vmul.f32 %v2560, %v2534
        %v2573 = vmul.f32 %v2561, %v2536
        %v2574 = vmul.f32 %v2562, %v2538
        %v2575 = vadd.f32 %v2563, 1.4214138
        %v2576 = vadd.f32 %v2564, 1.4214138
        %v2577 = vadd.f32 %v2565, 1.4214138
        %v2578 = vadd.f32 %v2566, 1.4214138
        %v2579 = vadd.f32 %v2567, 1.4214138
        %v2580 = vadd.f32 %v2568, 1.4214138
        %v2581 = vadd.f32 %v2569, 1.4214138
        %v2582 = vadd.f32 %v2570, 1.4214138
        %v2583 = vadd.f32 %v2571, 1.4214138
        %v2584 = vadd.f32 %v2572, 1.4214138
        %v2585 = vadd.f32 %v2573, 1.4214138
        %v2586 = vadd.f32 %v2574, 1.4214138
        %v2587 = vmul.f32 %v2575, %v2516
        %v2588 = vmul.f32 %v2576, %v2518
        %v2589 = vmul.f32 %v2577, %v2520
        %v2590 = vmul.f32 %v2578, %v2522
        %v2591 = vmul.f32 %v2579, %v2524
        %v2592 = vmul.f32 %v2580, %v2526
        %v2593 = vmul.f32 %v2581, %v2528
        %v2594 = vmul.f32 %v2582, %v2530
        %v2595 = vmul.f32 %v2583, %v2532
        %v2596 = vmul.f32 %v2584, %v2534
        %v2597 = vmul.f32 %v2585, %v2536
        %v2598 = vmul.f32 %v2586, %v2538
        %v2599 = vadd.f32 %v2587, -0.28449672
        %v2600 = vadd.f32 %v2588, -0.28449672
        %v2601 = vadd.f32 %v2589, -0.28449672
        %v2602 = vadd.f32 %v2590, -0.28449672
        %v2603 = vadd.f32 %v2591, -0.28449672
        %v2604 = vadd.f32 %v2592, -0.28449672
        %v2605 = vadd.f32 %v2593, -0.28449672
        %v2606 = vadd.f32 %v2594, -0.28449672
        %v2607 = vadd.f32 %v2595, -0.28449672
        %v2608 = vadd.f32 %v2596, -0.28449672
        %v2609 = vadd.f32 %v2597, -0.28449672
        %v2610 = vadd.f32 %v2598, -0.28449672
        %v2611 = vmul.f32 %v2599, %v2516
        %v2612 = vmul.f32 %v2600, %v2518
        %v2613 = vmul.f32 %v2601, %v2520
        %v2614 = vmul.f32 %v2602, %v2522
        %v2615 = vmul.f32 %v2603, %v2524
        %v2616 = vmul.f32 %v2604, %v2526
        %v2617 = vmul.f32 %v2605, %v2528
        %v2618 = vmul.f32 %v2606, %v2530
        %v2619 = vmul.f32 %v2607, %v2532
        %v2620 = vmul.f32 %v2608, %v2534
        %v2621 = vmul.f32 %v2609, %v2536
        %v2622 = vmul.f32 %v2610, %v2538
        %v2623 = vadd.f32 %v2611, 0.2548296
        %v2624 = vadd.f32 %v2612, 0.2548296
        %v2625 = vadd.f32 %v2613, 0.2548296
        %v2626 = vadd.f32 %v2614, 0.2548296
        %v2627 = vadd.f32 %v2615, 0.2548296
        %v2628 = vadd.f32 %v2616, 0.2548296
        %v2629 = vadd.f32 %v2617, 0.2548296
        %v2630 = vadd.f32 %v2618, 0.2548296
        %v2631 = vadd.f32 %v2619, 0.2548296
        %v2632 = vadd.f32 %v2620, 0.2548296
        %v2633 = vadd.f32 %v2621, 0.2548296
        %v2634 = vadd.f32 %v2622, 0.2548296
        %v2635 = vmul.f32 %v2623, %v2516
        %v2636 = vmul.f32 %v2624, %v2518
        %v2637 = vmul.f32 %v2625, %v2520
        %v2638 = vmul.f32 %v2626, %v2522
        %v2639 = vmul.f32 %v2627, %v2524
        %v2640 = vmul.f32 %v2628, %v2526
        %v2641 = vmul.f32 %v2629, %v2528
        %v2642 = vmul.f32 %v2630, %v2530
        %v2643 = vmul.f32 %v2631, %v2532
        %v2644 = vmul.f32 %v2632, %v2534
        %v2645 = vmul.f32 %v2633, %v2536
        %v2646 = vmul.f32 %v2634, %v2538
        %v2647 = vsub.f32 0.0, %v2479
        %v2648 = vsub.f32 0.0, %v2480
        %v2649 = vsub.f32 0.0, %v2481
        %v2650 = vsub.f32 0.0, %v2482
        %v2651 = vsub.f32 0.0, %v2483
        %v2652 = vsub.f32 0.0, %v2484
        %v2653 = vsub.f32 0.0, %v2485
        %v2654 = vsub.f32 0.0, %v2486
        %v2655 = vsub.f32 0.0, %v2487
        %v2656 = vsub.f32 0.0, %v2488
        %v2657 = vsub.f32 0.0, %v2489
        %v2658 = vsub.f32 0.0, %v2490
        %v2659 = vmul.f32 %v2647, %v2479
        %v2660 = vmul.f32 %v2648, %v2480
        %v2661 = vmul.f32 %v2649, %v2481
        %v2662 = vmul.f32 %v2650, %v2482
        %v2663 = vmul.f32 %v2651, %v2483
        %v2664 = vmul.f32 %v2652, %v2484
        %v2665 = vmul.f32 %v2653, %v2485
        %v2666 = vmul.f32 %v2654, %v2486
        %v2667 = vmul.f32 %v2655, %v2487
        %v2668 = vmul.f32 %v2656, %v2488
        %v2669 = vmul.f32 %v2657, %v2489
        %v2670 = vmul.f32 %v2658, %v2490
        %v2671 = vmul.f32 %v2659, 1.442695
        %v2672 = vpow.pop %v2671
        %v2673 = vmul.f32 %v2660, 1.442695
        %v2674 = vpow.pop %v2673
        %v2675 = vmul.f32 %v2661, 1.442695
        %v2676 = vpow.pop %v2675
        %v2677 = vmul.f32 %v2662, 1.442695
        %v2678 = vpow.pop %v2677
        %v2679 = vmul.f32 %v2663, 1.442695
        %v2680 = vpow.pop %v2679
        %v2681 = vmul.f32 %v2664, 1.442695
        %v2682 = vpow.pop %v2681
        %v2683 = vmul.f32 %v2665, 1.442695
        %v2684 = vpow.pop %v2683
        %v2685 = vmul.f32 %v2666, 1.442695
        %v2686 = vpow.pop %v2685
        %v2687 = vmul.f32 %v2667, 1.442695
        %v2688 = vpow.pop %v2687
        %v2689 = vmul.f32 %v2668, 1.442695
        %v2690 = vpow.pop %v2689
        %v2691 = vmul.f32 %v2669, 1.442695
        %v2692 = vpow.pop %v2691
        %v2693 = vmul.f32 %v2670, 1.442695
        %v2694 = vpow.pop %v2693
        %v2695 = vmul.f32 %v2635, %v2672
        %v2696 = vmul.f32 %v2636, %v2674
        %v2697 = vmul.f32 %v2637, %v2676
        %v2698 = vmul.f32 %v2638, %v2678
        %v2699 = vmul.f32 %v2639, %v2680
        %v2700 = vmul.f32 %v2640, %v2682
        %v2701 = vmul.f32 %v2641, %v2684
        %v2702 = vmul.f32 %v2642, %v2686
        %v2703 = vmul.f32 %v2643, %v2688
        %v2704 = vmul.f32 %v2644, %v2690
        %v2705 = vmul.f32 %v2645, %v2692
        %v2706 = vmul.f32 %v2646, %v2694
        %v2707 = vsub.f32 1.0, %v2695
        %v2708 = vsub.f32 1.0, %v2696
        %v2709 = vsub.f32 1.0, %v2697
        %v2710 = vsub.f32 1.0, %v2698
        %v2711 = vsub.f32 1.0, %v2699
        %v2712 = vsub.f32 1.0, %v2700
        %v2713 = vsub.f32 1.0, %v2701
        %v2714 = vsub.f32 1.0, %v2702
        %v2715 = vsub.f32 1.0, %v2703
        %v2716 = vsub.f32 1.0, %v2704
        %v2717 = vsub.f32 1.0, %v2705
        %v2718 = vsub.f32 1.0, %v2706
        %vm2719 = vcmp.ge.f32.partialorder %v2467, 0.0
        %vm2720 = vcmp.ge.f32.partialorder %v2468, 0.0
        %vm2721 = vcmp.ge.f32.partialorder %v2469, 0.0
        %vm2722 = vcmp.ge.f32.partialorder %v2470, 0.0
        %vm2723 = vcmp.ge.f32.partialorder %v2471, 0.0
        %vm2724 = vcmp.ge.f32.partialorder %v2472, 0.0
        %vm2725 = vcmp.ge.f32.partialorder %v2473, 0.0
        %vm2726 = vcmp.ge.f32.partialorder %v2474, 0.0
        %vm2727 = vcmp.ge.f32.partialorder %v2475, 0.0
        %vm2728 = vcmp.ge.f32.partialorder %v2476, 0.0
        %vm2729 = vcmp.ge.f32.partialorder %v2477, 0.0
        %vm2730 = vcmp.ge.f32.partialorder %v2478, 0.0
        %v2731 = vsub.f32 0.0, %v2707
        %v2732 = vsub.f32 0.0, %v2708
        %v2733 = vsub.f32 0.0, %v2709
        %v2734 = vsub.f32 0.0, %v2710
        %v2735 = vsub.f32 0.0, %v2711
        %v2736 = vsub.f32 0.0, %v2712
        %v2737 = vsub.f32 0.0, %v2713
        %v2738 = vsub.f32 0.0, %v2714
        %v2739 = vsub.f32 0.0, %v2715
        %v2740 = vsub.f32 0.0, %v2716
        %v2741 = vsub.f32 0.0, %v2717
        %v2742 = vsub.f32 0.0, %v2718
        %v2743 = vsel %vm2719, %v2707, %v2731
        %v2744 = vsel %vm2720, %v2708, %v2732
        %v2745 = vsel %vm2721, %v2709, %v2733
        %v2746 = vsel %vm2722, %v2710, %v2734
        %v2747 = vsel %vm2723, %v2711, %v2735
        %v2748 = vsel %vm2724, %v2712, %v2736
        %v2749 = vsel %vm2725, %v2713, %v2737
        %v2750 = vsel %vm2726, %v2714, %v2738
        %v2751 = vsel %vm2727, %v2715, %v2739
        %v2752 = vsel %vm2728, %v2716, %v2740
        %v2753 = vsel %vm2729, %v2717, %v2741
        %v2754 = vsel %vm2730, %v2718, %v2742
        %v2755 = vadd.f32 %v2743, 1.0
        %v2756 = vadd.f32 %v2744, 1.0
        %v2757 = vadd.f32 %v2745, 1.0
        %v2758 = vadd.f32 %v2746, 1.0
        %v2759 = vadd.f32 %v2747, 1.0
        %v2760 = vadd.f32 %v2748, 1.0
        %v2761 = vadd.f32 %v2749, 1.0
        %v2762 = vadd.f32 %v2750, 1.0
        %v2763 = vadd.f32 %v2751, 1.0
        %v2764 = vadd.f32 %v2752, 1.0
        %v2765 = vadd.f32 %v2753, 1.0
        %v2766 = vadd.f32 %v2754, 1.0
        %v2767 = vmul.f32 %v2455, %v2755
        %v2768 = vmul.f32 %v2456, %v2756
        %v2769 = vmul.f32 %v2457, %v2757
        %v2770 = vmul.f32 %v2458, %v2758
        %v2771 = vmul.f32 %v2459, %v2759
        %v2772 = vmul.f32 %v2460, %v2760
        %v2773 = vmul.f32 %v2461, %v2761
        %v2774 = vmul.f32 %v2462, %v2762
        %v2775 = vmul.f32 %v2463, %v2763
        %v2776 = vmul.f32 %v2464, %v2764
        %v2777 = vmul.f32 %v2465, %v2765
        %v2778 = vmul.f32 %v2466, %v2766
        %v2779 = vld [vmem:[%s1012] sm:$0xff]
        %v2780 = vld [vmem:[%s1012 + $0x8] sm:$0xff]
        %v2781 = vld [vmem:[%s1012 + $0x10] sm:$0xff]
        %v2782 = vld [vmem:[%s1012 + $0x18] sm:$0xff]
        %v2783 = vld [vmem:[%s1012 + $0x20] sm:$0xff]
        %v2784 = vld [vmem:[%s1012 + $0x28] sm:$0xff]
        %v2785 = vld [vmem:[%s1012 + $0x30] sm:$0xff]
        %v2786 = vld [vmem:[%s1012 + $0x38] sm:$0xff]
        %v2787 = vld [vmem:[%s1012 + $0x40] sm:$0xff]
        %v2788 = vld [vmem:[%s1012 + $0x48] sm:$0xff]
        %v2789 = vld [vmem:[%s1012 + $0x50] sm:$0xff]
        %v2790 = vld [vmem:[%s1012 + $0x58] sm:$0xff]
        %v2791 = vld [vmem:[%s1012 + $0x60] sm:$0xff]
        %v2792 = vld [vmem:[%s1012 + $0x68] sm:$0xff]
        %v2793 = vld [vmem:[%s1012 + $0x70] sm:$0xff]
        %v2794 = vld [vmem:[%s1012 + $0x78] sm:$0xff]
        %v2795 = vld [vmem:[%s1012 + $0x80] sm:$0xff]
        %v2796 = vld [vmem:[%s1012 + $0x88] sm:$0xff]
        %v2797 = vld [vmem:[%s1012 + $0x90] sm:$0xff]
        %v2798 = vld [vmem:[%s1012 + $0x98] sm:$0xff]
        %v2799 = vld [vmem:[%s1012 + $0xa0] sm:$0xff]
        %v2800 = vld [vmem:[%s1012 + $0xa8] sm:$0xff]
        %v2801 = vld [vmem:[%s1012 + $0xb0] sm:$0xff]
        %v2802 = vld [vmem:[%s1012 + $0xb8] sm:$0xff]
        %v2803 = vld [vmem:[%s1012 + $0xc0] sm:$0xff]
        %v2804 = vld [vmem:[%s1012 + $0xc8] sm:$0xff]
        %v2805 = vld [vmem:[%s1012 + $0xd0] sm:$0xff]
        %v2806 = vld [vmem:[%s1012 + $0xd8] sm:$0xff]
        %v2807 = vld [vmem:[%s1012 + $0xe0] sm:$0xff]
        %v2808 = vld [vmem:[%s1012 + $0xe8] sm:$0xff]
        %v2809 = vld [vmem:[%s1012 + $0xf0] sm:$0xff]
        %v2810 = vld [vmem:[%s1012 + $0xf8] sm:$0xff]
        %v2811 = vld [vmem:[%s1020] sm:$0x1]
        %v2813 = vlaneseq
        %v2814 = vshrl.u32 %v2813, 7
        %v2815 = vsub.s32 0, %v2814
        %v2816 = vrot.slane %v2811, %v2815
        %2818 = vmatprep.subr.mxu0 0.0
        %2819 = vmatpush1.msra.mxu0 %v2779
        %2820 = vmatprep.subr.mxu0 0.0
        %2821 = vmatpush1.msra.mxu0 %v2780
        %2822 = vmatprep.subr.mxu0 0.0
        %2823 = vmatpush1.msra.mxu0 %v2781
        %2824 = vmatprep.subr.mxu0 0.0
        %2825 = vmatpush1.msra.mxu0 %v2782
        %2826 = vmatprep.subr.mxu0 0.0
        %2827 = vmatpush1.msra.mxu0 %v2783
        %2828 = vmatprep.subr.mxu0 0.0
        %2829 = vmatpush1.msra.mxu0 %v2784
        %2830 = vmatprep.subr.mxu0 0.0
        %2831 = vmatpush1.msra.mxu0 %v2785
        %2832 = vmatprep.subr.mxu0 0.0
        %2833 = vmatpush1.msra.mxu0 %v2786
        %2834 = vmatprep.subr.mxu0 0.0
        %2835 = vmatpush1.msra.mxu0 %v2787
        %2836 = vmatprep.subr.mxu0 0.0
        %2837 = vmatpush1.msra.mxu0 %v2788
        %2838 = vmatprep.subr.mxu0 0.0
        %2839 = vmatpush1.msra.mxu0 %v2789
        %2840 = vmatprep.subr.mxu0 0.0
        %2841 = vmatpush1.msra.mxu0 %v2790
        %2842 = vmatprep.subr.mxu0 0.0
        %2843 = vmatpush1.msra.mxu0 %v2791
        %2844 = vmatprep.subr.mxu0 0.0
        %2845 = vmatpush1.msra.mxu0 %v2792
        %2846 = vmatprep.subr.mxu0 0.0
        %2847 = vmatpush1.msra.mxu0 %v2793
        %2848 = vmatprep.subr.mxu0 0.0
        %2849 = vmatpush1.msra.mxu0 %v2794
        %2850 = vmatprep.subr.mxu0 0.0
        %2851 = vmatpush1.msra.mxu0 %v2795
        %2852 = vmatprep.subr.mxu0 0.0
        %2853 = vmatpush1.msra.mxu0 %v2796
        %2854 = vmatprep.subr.mxu0 0.0
        %2855 = vmatpush1.msra.mxu0 %v2797
        %2856 = vmatprep.subr.mxu0 0.0
        %2857 = vmatpush1.msra.mxu0 %v2798
        %2858 = vmatprep.subr.mxu0 0.0
        %2859 = vmatpush1.msra.mxu0 %v2799
        %2860 = vmatprep.subr.mxu0 0.0
        %2861 = vmatpush1.msra.mxu0 %v2800
        %2862 = vmatprep.subr.mxu0 0.0
        %2863 = vmatpush1.msra.mxu0 %v2801
        %2864 = vmatprep.subr.mxu0 0.0
        %2865 = vmatpush1.msra.mxu0 %v2802
        %2866 = vmatprep.subr.mxu0 0.0
        %2867 = vmatpush1.msra.mxu0 %v2803
        %2868 = vmatprep.subr.mxu0 0.0
        %2869 = vmatpush1.msra.mxu0 %v2804
        %2870 = vmatprep.subr.mxu0 0.0
        %2871 = vmatpush1.msra.mxu0 %v2805
        %2872 = vmatprep.subr.mxu0 0.0
        %2873 = vmatpush1.msra.mxu0 %v2806
        %2874 = vmatprep.subr.mxu0 0.0
        %2875 = vmatpush1.msra.mxu0 %v2807
        %2876 = vmatprep.subr.mxu0 0.0
        %2877 = vmatpush1.msra.mxu0 %v2808
        %2878 = vmatprep.subr.mxu0 0.0
        %2879 = vmatpush1.msra.mxu0 %v2809
        %2880 = vmatprep.subr.mxu0 0.0
        %2881 = vmatpush1.msra.mxu0 %v2810
        %2882 = vmatprep.mubr.f32.mxu0 %v2768
        %2883 = vmatmul.mubr.f32.gmra.mrb[0].mxu0 %v2767
        %v2884 = vpop.f32.mrb[0].mxu0
        %v2885 = vadd.f32 %v2816, %v2884
        %v2886 = vpop.f32.mrb[0].mxu0
        %2887 = vmatprep.mubr.f32.mxu0 %v2770
        %2888 = vmatmul.mubr.f32.gmra.mrb[0].mxu0 %v2769
        %v2889 = vpop.f32.mrb[0].mxu0
        %v2890 = vadd.f32 %v2816, %v2889
        %v2891 = vpop.f32.mrb[0].mxu0
        %2892 = vmatprep.mubr.f32.mxu0 %v2772
        %2893 = vmatmul.mubr.f32.gmra.mrb[0].mxu0 %v2771
        %v2894 = vpop.f32.mrb[0].mxu0
        %v2895 = vadd.f32 %v2816, %v2894
        %v2896 = vpop.f32.mrb[0].mxu0
        %2897 = vmatprep.mubr.f32.mxu0 %v2774
        %2898 = vmatmul.mubr.f32.gmra.mrb[0].mxu0 %v2773
        %v2899 = vpop.f32.mrb[0].mxu0
        %v2900 = vadd.f32 %v2816, %v2899
        %v2901 = vpop.f32.mrb[0].mxu0
        %2902 = vmatprep.mubr.f32.mxu0 %v2776
        %2903 = vmatmul.mubr.f32.gmra.mrb[0].mxu0 %v2775
        %v2904 = vpop.f32.mrb[0].mxu0
        %v2905 = vadd.f32 %v2816, %v2904
        %v2906 = vpop.f32.mrb[0].mxu0
        %2907 = vmatprep.mubr.f32.mxu0 %v2778
        %2908 = vmatmul.mubr.f32.gmra.mrb[0].mxu0 %v2777
        %v2909 = vpop.f32.mrb[0].mxu0
        %v2910 = vadd.f32 %v2816, %v2909
        %v2911 = vpop.f32.mrb[0].mxu0
        %2912 = vdwg.mxu0
        %v2913 = vadd.f32 %v2885, %v2200
        %v2914 = vadd.f32 %v2890, %v2201
        %v2915 = vadd.f32 %v2895, %v2202
        %v2916 = vadd.f32 %v2900, %v2203
        %v2917 = vadd.f32 %v2905, %v2204
        %v2918 = vadd.f32 %v2910, %v2205
        %2919 = vst [vmem:[#allocation2] sm:$0xff] %v2913
        %2920 = vst [vmem:[#allocation2 + $0x8] sm:$0xff] %v2914
        %2921 = vst [vmem:[#allocation2 + $0x10] sm:$0xff] %v2915
        %2922 = vst [vmem:[#allocation2 + $0x18] sm:$0xff] %v2916
        %2923 = vst [vmem:[#allocation2 + $0x20] sm:$0xff] %v2917
        %2924 = vst [vmem:[#allocation2 + $0x28] sm:$0xff] %v2918
        %p2925 = scmp.eq.s32.totalorder %s55, 5
        // Predicated region
        $region185: #{vit_forward.1} parent=103 // pred_check
          %p2926 = pneg %p2925
        $region186: #{vit_forward.1} parent=103 // pred_check_branch
          %2928 = sbr.rel (%p2926) target = $region188
        $region187: #{vit_forward.1} parent=103 // pred_region
          %v2929 = vld [vmem:[#allocation27] sm:$0x1]
          %v2930 = vld [vmem:[#allocation29] sm:$0x1]
          %v2933 = vrot.slane %v2916, 7
          %vm2934 = vcmask 1041409
          %v2935 = vsel %vm2934, %v2933, %v2913
          %vm2937 = vcmask 1041408
          %v2938 = vsel %vm2937, %v2935, 0.0
          %2939 = vadd.xlane.f32.xlu0 %v2938
          %v2940 = vpop.xlane.xlu0 %2939
          %v2941 = vmul.f32 %v2940, 0.020408163
          %v2942 = vmul.f32 %v2913, %v2913
          %v2943 = vmul.f32 %v2916, %v2916
          %v2946 = vrot.slane %v2943, 7
          %v2947 = vsel %vm2934, %v2946, %v2942
          %v2949 = vsel %vm2937, %v2947, 0.0
          %2950 = vadd.xlane.f32.xlu0 %v2949
          %v2951 = vpop.xlane.xlu0 %2950
          %v2952 = vmul.f32 %v2951, 0.020408163
          %v2953 = vmul.f32 %v2941, %v2941
          %v2954 = vsub.f32 %v2952, %v2953
          %v2956 = vrot.slane %v2941, 1
          %v2959 = vsub.f32 %v2913, %v2941
          %v2960 = vsub.f32 %v2916, %v2956
          %v2961 = vadd.f32 %v2954, 1e-05
          %v2962 = vrsqrt.pop %v2961
          %v2964 = vrot.slane %v2962, 1
          %v2967 = vmul.f32 %v2959, %v2962
          %v2968 = vmul.f32 %v2960, %v2964
          %v2970 = vlaneseq
          %v2971 = vshrl.u32 %v2970, 7
          %v2972 = vsub.s32 0, %v2971
          %v2973 = vrot.slane %v2929, %v2972
          %v2975 = vmul.f32 %v2967, %v2973
          %v2976 = vmul.f32 %v2968, %v2973
          %v2978 = vlaneseq
          %v2979 = vshrl.u32 %v2978, 7
          %v2980 = vsub.s32 0, %v2979
          %v2981 = vrot.slane %v2930, %v2980
          %v2983 = vadd.f32 %v2975, %v2981
          %v2984 = vadd.f32 %v2976, %v2981
          %v2985 = vld [vmem:[#allocation30] sm:$0xff]
          %v2986 = vld [vmem:[#allocation30 + $0x8] sm:$0xff]
          %v2987 = vld [vmem:[#allocation30 + $0x10] sm:$0xff]
          %v2988 = vld [vmem:[#allocation30 + $0x18] sm:$0xff]
          %v2989 = vld [vmem:[#allocation30 + $0x20] sm:$0xff]
          %v2990 = vld [vmem:[#allocation30 + $0x28] sm:$0xff]
          %v2991 = vld [vmem:[#allocation30 + $0x30] sm:$0xff]
          %v2992 = vld [vmem:[#allocation30 + $0x38] sm:$0xff]
          %v2993 = vld [vmem:[#allocation30 + $0x40] sm:$0xff]
          %v2994 = vld [vmem:[#allocation30 + $0x48] sm:$0xff]
          %v2995 = vld [vmem:[#allocation30 + $0x50] sm:$0xff]
          %v2996 = vld [vmem:[#allocation30 + $0x58] sm:$0xff]
          %v2997 = vld [vmem:[#allocation30 + $0x60] sm:$0xff]
          %v2998 = vld [vmem:[#allocation30 + $0x68] sm:$0xff]
          %v2999 = vld [vmem:[#allocation30 + $0x70] sm:$0xff]
          %v3000 = vld [vmem:[#allocation30 + $0x78] sm:$0xff]
          %v3001 = vld [vmem:[#allocation32] sm:$0x1]
          %v3003 = vlaneseq
          %v3004 = vshrl.u32 %v3003, 7
          %v3005 = vsub.s32 0, %v3004
          %v3006 = vrot.slane %v3001, %v3005
          %v3010 = vrot.slane %v2984, 7
          %v3011 = vsel %vm2934, %v3010, %v2983
          %3013 = vmatprep.subr.mxu0 0.0
          %3014 = vmatpush1.msra.mxu0 %v2985
          %3015 = vmatprep.subr.mxu0 0.0
          %3016 = vmatpush1.msra.mxu0 %v2986
          %3017 = vmatprep.subr.mxu0 0.0
          %3018 = vmatpush1.msra.mxu0 %v2987
          %3019 = vmatprep.subr.mxu0 0.0
          %3020 = vmatpush1.msra.mxu0 %v2988
          %3021 = vmatprep.subr.mxu0 0.0
          %3022 = vmatpush1.msra.mxu0 %v2989
          %3023 = vmatprep.subr.mxu0 0.0
          %3024 = vmatpush1.msra.mxu0 %v2990
          %3025 = vmatprep.subr.mxu0 0.0
          %3026 = vmatpush1.msra.mxu0 %v2991
          %3027 = vmatprep.subr.mxu0 0.0
          %3028 = vmatpush1.msra.mxu0 %v2992
          %3029 = vmatprep.subr.mxu0 0.0
          %3030 = vmatpush1.msra.mxu0 %v2993
          %3031 = vmatprep.subr.mxu0 0.0
          %3032 = vmatpush1.msra.mxu0 %v2994
          %3033 = vmatprep.subr.mxu0 0.0
          %3034 = vmatpush1.msra.mxu0 %v2995
          %3035 = vmatprep.subr.mxu0 0.0
          %3036 = vmatpush1.msra.mxu0 %v2996
          %3037 = vmatprep.subr.mxu0 0.0
          %3038 = vmatpush1.msra.mxu0 %v2997
          %3039 = vmatprep.subr.mxu0 0.0
          %3040 = vmatpush1.msra.mxu0 %v2998
          %3041 = vmatprep.subr.mxu0 0.0
          %3042 = vmatpush1.msra.mxu0 %v2999
          %3043 = vmatprep.subr.mxu0 0.0
          %3044 = vmatpush1.msra.mxu0 %v3000
          %3045 = vmatprep.subr.mxu0 0.0
          %3046 = vmatpush1.msra.mxu0 0.0
          %3047 = vmatprep.subr.mxu0 0.0
          %3048 = vmatpush1.msra.mxu0 0.0
          %3049 = vmatprep.subr.mxu0 0.0
          %3050 = vmatpush1.msra.mxu0 0.0
          %3051 = vmatprep.subr.mxu0 0.0
          %3052 = vmatpush1.msra.mxu0 0.0
          %3053 = vmatprep.subr.mxu0 0.0
          %3054 = vmatpush1.msra.mxu0 0.0
          %3055 = vmatprep.subr.mxu0 0.0
          %3056 = vmatpush1.msra.mxu0 0.0
          %3057 = vmatprep.subr.mxu0 0.0
          %3058 = vmatpush1.msra.mxu0 0.0
          %3059 = vmatprep.subr.mxu0 0.0
          %3060 = vmatpush1.msra.mxu0 0.0
          %3061 = vmatprep.subr.mxu0 0.0
          %3062 = vmatpush1.msra.mxu0 0.0
          %3063 = vmatprep.subr.mxu0 0.0
          %3064 = vmatpush1.msra.mxu0 0.0
          %3065 = vmatprep.subr.mxu0 0.0
          %3066 = vmatpush1.msra.mxu0 0.0
          %3067 = vmatprep.subr.mxu0 0.0
          %3068 = vmatpush1.msra.mxu0 0.0
          %3069 = vmatprep.subr.mxu0 0.0
          %3070 = vmatpush1.msra.mxu0 0.0
          %3071 = vmatprep.subr.mxu0 0.0
          %3072 = vmatpush1.msra.mxu0 0.0
          %3073 = vmatprep.subr.mxu0 0.0
          %3074 = vmatpush1.msra.mxu0 0.0
          %3075 = vmatprep.subr.mxu0 0.0
          %3076 = vmatpush1.msra.mxu0 0.0
          %3077 = vmatprep.mubr.f32.mxu0 0.0
          %3078 = vmatmul.mubr.f32.gmra.mrb[0].mxu0 %v3011
          %v3079 = vpop.f32.mrb[0].mxu0
          %v3080 = vadd.f32 %v3006, %v3079
          %v3081 = vpop.f32.mrb[0].mxu0
          %3082 = vdwg.mxu0
          %3083 = vst [vmem:[#allocation33] sm:$0x3] %v3080
        $region188: #{vit_forward.1} parent=103 // pred_fallthru
          _
        // Predicated region
        $region189: #{vit_forward.1} parent=103 // pred_check
          %p3084 = pneg %p569
        $region190: #{vit_forward.1} parent=103 // pred_check_branch
          %3086 = sbr.rel (%p3084) target = $region192
        $region191: #{vit_forward.1} parent=103 // pred_region
          %s3088 = ssub.s32 32, 32
          %3089 = vsyncadd [#allocation5], %s3088
          %s3091 = sshll.u32 [#allocation33], 4
          %s3092 = int_to_ptr.vmem [resolvable:$true] %s3091
          %3094 = dma.vmem_to_hbm [thread:$0]  %s3092, 32, %s21, [#allocation5]
        $region192: #{vit_forward.1} parent=103 // pred_fallthru
          _
        // Predicated region
        $region193: #{vit_forward.1} parent=103 // pred_check
          %p3095 = pneg %p569
        $region194: #{vit_forward.1} parent=103 // pred_check_branch
          %3097 = sbr.rel (%p3095) target = $region196
        $region195: #{vit_forward.1} parent=103 // pred_region
          %3098 = dma.done [#allocation5], 32
        $region196: #{vit_forward.1} parent=103 // pred_fallthru
          _
      $region104: #{vit_forward.1} parent=5 // pred_fallthru
        _
      %p3099 = scmp.le.s32.totalorder 2, %s50
      // Predicated region
      $region197: #{vit_forward.1} parent=5 // pred_check
        %p3100 = pneg %p3099
      $region198: #{vit_forward.1} parent=5 // pred_check_branch
        %3102 = sbr.rel (%p3100) target = $region200
      $region199: #{vit_forward.1} parent=5 // pred_region
        %s3103 = ssub.s32 %s50, 2
      $region200: #{vit_forward.1} parent=5 // pred_fallthru
        _
    $region6: #{vit_forward.1} parent=1 // loop_footer
      %s54 = sadd.s32 1, %s50
    $region7: #{vit_forward.1} parent=1 // loop_footer_branch
      %49 = sbr.rel target = $region3
    $region8: #{vit_forward.1} parent=1 // loop_exit
      _
    %3104 = vsyncpa [#allocation4], 1
    %s3105 = scalar_lea.sflag [#allocation4], 1
    %3106 = vsyncpa %s3105, 1
    %3107 = vsyncpa [#allocation7], 1
    %3108 = vsyncpa [#allocation10], 1
    %s3109 = scalar_lea.sflag [#allocation10], 1
    %3110 = vsyncpa %s3109, 1
    %3111 = vsyncpa [#allocation13], 1
    %s3112 = scalar_lea.sflag [#allocation13], 1
    %3113 = vsyncpa %s3112, 1
    %3114 = vsyncpa [#allocation16], 1
    %s3115 = scalar_lea.sflag [#allocation16], 1
    %3116 = vsyncpa %s3115, 1
    %3117 = vsyncpa [#allocation19], 1
    %s3118 = scalar_lea.sflag [#allocation19], 1
    %3119 = vsyncpa %s3118, 1
    %3120 = vsyncpa [#allocation22], 1
    %s3121 = scalar_lea.sflag [#allocation22], 1
    %3122 = vsyncpa %s3121, 1
    %3123 = vsyncpa [#allocation25], 1
    %s3124 = scalar_lea.sflag [#allocation25], 1
    %3125 = vsyncpa %s3124, 1
    %3126 = vsyncpa [#allocation28], 1
    %3127 = vsyncpa [#allocation31], 1
    %3128 = vsyncpa [#allocation5], 1
    %s3129 = scalar_lea.sflag [#allocation5], 1
    %3130 = vsyncpa %s3129, 1

</llo_original>
